<compile_context>
chip_gen: v6e
topology: v6e:2x2x1
jax: 0.10.0
libtpu: 0.0.40
codegen_flags: <defaults>
</compile_context>

<pallas_src>
import jax
import jax.numpy as jnp
from jax.experimental import pallas as pl
from jax.experimental.pallas import tpu as pltpu


def _fold_bn(gamma, beta, mean, var, eps=1e-5):
    scale = gamma / jnp.sqrt(var + eps)
    bias = beta - mean * scale
    return scale, bias


def _vmem_limit_bytes():
    """v5e/v6e have 128 MiB VMEM/TC -> allow big working sets; v7x only 64."""
    try:
        kind = jax.devices()[0].device_kind.lower()
    except Exception:
        return 64 * 1024 * 1024
    if "v5" in kind or "v6" in kind:
        return 96 * 1024 * 1024
    return 56 * 1024 * 1024


def _make_basic_block_kernel(H, W, Cin, Cmid, Cout):
    """Fused conv1+bn1+relu -> conv2+bn2+residual+relu, one image per step."""
    taps = [(t // 3, t % 3) for t in range(9)]

    def conv3x3(pad_ref, w_ref, c_in):
        # 9 shifted accumulating matmuls; no materialized im2col buffer.
        acc = None
        for t, (dy, dx) in enumerate(taps):
            win = pad_ref[:, dy:dy + H, dx:dx + W].reshape(c_in, H * W)  # bf16
            contrib = jnp.dot(w_ref[t], win,
                              preferred_element_type=jnp.float32)
            acc = contrib if acc is None else acc + contrib
        return acc                                            # (Cout, H*W) f32

    def kernel(x_ref, w1_ref, b1_ref, w2_ref, b2_ref, o_ref, pad_ref):
        # x_ref:   (1, Cin, H*W)    f32   (NCHW with HW flattened)
        # w1_ref:  (9, Cmid, Cin)   bf16  (tap-major, BN1 scale folded in)
        # b1_ref:  (Cmid, 1)        f32
        # w2_ref:  (9, Cout, Cmid)  bf16  (BN2 scale folded in)
        # b2_ref:  (Cout, 1)        f32
        # o_ref:   (1, Cout, H*W)   f32   (lane-dense; free reshape to NCHW)
        # pad_ref: (C, H+2, W+2)    bf16  shared padded scratch (Cin==Cmid)

        # Zero only the 1-pixel border (interior is always fully overwritten).
        zrow = jnp.zeros((Cin, 1, W + 2), jnp.bfloat16)
        zcol = jnp.zeros((Cin, H + 2, 1), jnp.bfloat16)
        pad_ref[:, 0:1, :] = zrow
        pad_ref[:, H + 1:H + 2, :] = zrow
        pad_ref[:, :, 0:1] = zcol
        pad_ref[:, :, W + 1:W + 2] = zcol

        # ---- stage 1: conv1 + bn1(bias) + relu ------------------------------
        pad_ref[:, 1:H + 1, 1:W + 1] = (
            x_ref[0].astype(jnp.bfloat16).reshape(Cin, H, W))
        acc1 = conv3x3(pad_ref, w1_ref, Cin)                  # (Cmid, H*W)
        mid = jnp.maximum(acc1 + b1_ref[...], 0.0)

        # ---- stage 2: conv2 + bn2(bias) + residual + relu -------------------
        # Reuse the same padded buffer for the intermediate (Cin == Cmid).
        pad_ref[:, 1:H + 1, 1:W + 1] = (
            mid.astype(jnp.bfloat16).reshape(Cmid, H, W))
        acc2 = conv3x3(pad_ref, w2_ref, Cmid)                 # (Cout, H*W)

        out = acc2 + b2_ref[...] + x_ref[0]                   # residual in f32
        out = jnp.maximum(out, 0.0)
        o_ref[...] = out.reshape(1, Cout, H * W).astype(o_ref.dtype)

    return kernel


@jax.jit
def basic_block_forward(x_nchw, params):
    """Forward pass of BasicBlock (stride=1, downsample=None, selayer=None).

    x_nchw: (N, C, H, W) float32, as in PyTorch.
    """
    N, Cin, H, W = x_nchw.shape
    w1 = params["w1"]                     # (3, 3, Cin, Cmid), HWIO
    w2 = params["w2"]                     # (3, 3, Cmid, Cout), HWIO
    Cmid = w1.shape[-1]
    Cout = w2.shape[-1]
    assert Cin == Cmid == Cout, (
        "stride=1 / no-downsample BasicBlock needs inplanes == planes "
        "(also required for the shared padded scratch)")

    s1, b1 = _fold_bn(params["bn1_gamma"], params["bn1_beta"],
                      params["bn1_mean"], params["bn1_var"])
    s2, b2 = _fold_bn(params["bn2_gamma"], params["bn2_beta"],
                      params["bn2_mean"], params["bn2_var"])

    # Fold BN scale into conv weights; reorder to tap-major (9, Cout, Cin) so
    # each tap is a ready-to-use (Cout, Cin) MXU operand; cast to bf16
    # (accumulation stays f32 inside the kernel).
    w1f = jnp.transpose(w1 * s1, (0, 1, 3, 2)).reshape(9, Cmid, Cin)
    w1f = w1f.astype(jnp.bfloat16)
    w2f = jnp.transpose(w2 * s2, (0, 1, 3, 2)).reshape(9, Cout, Cmid)
    w2f = w2f.astype(jnp.bfloat16)
    b1c = b1.reshape(Cmid, 1).astype(jnp.float32)
    b2c = b2.reshape(Cout, 1).astype(jnp.float32)

    # NCHW with HW flattened: a pure metadata reshape (no HBM transpose), and
    # the kernel blocks become lane-dense on H*W.
    x_flat = x_nchw.reshape(N, Cin, H * W).astype(jnp.float32)

    kernel = _make_basic_block_kernel(H, W, Cin, Cmid, Cout)

    y = pl.pallas_call(
        kernel,
        out_shape=jax.ShapeDtypeStruct((N, Cout, H * W), jnp.float32),
        grid=(N,),
        in_specs=[
            pl.BlockSpec((1, Cin, H * W), lambda n: (n, 0, 0)),
            pl.BlockSpec((9, Cmid, Cin), lambda n: (0, 0, 0)),
            pl.BlockSpec((Cmid, 1), lambda n: (0, 0)),
            pl.BlockSpec((9, Cout, Cmid), lambda n: (0, 0, 0)),
            pl.BlockSpec((Cout, 1), lambda n: (0, 0)),
        ],
        out_specs=pl.BlockSpec((1, Cout, H * W), lambda n: (n, 0, 0)),
        scratch_shapes=[
            pltpu.VMEM((Cin, H + 2, W + 2), jnp.bfloat16),   # shared padded buf
        ],
        compiler_params=pltpu.CompilerParams(
            dimension_semantics=("parallel",),               # images independent
            vmem_limit_bytes=_vmem_limit_bytes(),
        ),
    )(x_flat, w1f, b1c, w2f, b2c)

    # (N, Cout, H*W) -> (N, Cout, H, W): pure reshape, no transpose.
    return y.reshape(N, Cout, H, W)


def _reference_forward(x_nchw, params):
    """Pure-JAX reference (lax.conv), with operands rounded to bf16 to match
    the kernel's MXU precision (accumulation stays f32)."""
    x = jnp.transpose(x_nchw, (0, 2, 3, 1))
    dn = ("NHWC", "HWIO", "NHWC")

    s1, b1 = _fold_bn(params["bn1_gamma"], params["bn1_beta"],
                      params["bn1_mean"], params["bn1_var"])
    s2, b2 = _fold_bn(params["bn2_gamma"], params["bn2_beta"],
                      params["bn2_mean"], params["bn2_var"])

    def q(a):  # bf16 operand rounding, back to f32
        return a.astype(jnp.bfloat16).astype(jnp.float32)

    def conv(z, w):
        return jax.lax.conv_general_dilated(z, w, (1, 1), "SAME",
                                            dimension_numbers=dn)

    mid = jax.nn.relu(conv(q(x), q(params["w1"] * s1)) + b1)
    out = jax.nn.relu(conv(q(mid), q(params["w2"] * s2)) + b2 + x)
    return jnp.transpose(out, (0, 3, 1, 2))


def _init_params(key, inplanes, planes):
    ks = jax.random.split(key, 8)
    # PyTorch Conv2d weights are (Cout, Cin, 3, 3); stored HWIO here.
    w1 = 0.1 * jax.random.normal(ks[0], (3, 3, inplanes, planes), jnp.float32)
    w2 = 0.1 * jax.random.normal(ks[1], (3, 3, planes, planes), jnp.float32)
    return {
        "w1": w1,
        "w2": w2,
        "bn1_gamma": 1.0 + 0.1 * jax.random.normal(ks[2], (planes,), jnp.float32),
        "bn1_beta": 0.1 * jax.random.normal(ks[3], (planes,), jnp.float32),
        "bn1_mean": 0.05 * jax.random.normal(ks[4], (planes,), jnp.float32),
        "bn1_var": jnp.abs(1.0 + 0.1 * jax.random.normal(ks[5], (planes,), jnp.float32)),
        "bn2_gamma": 1.0 + 0.1 * jax.random.normal(ks[6], (planes,), jnp.float32),
        "bn2_beta": 0.1 * jax.random.normal(ks[7], (planes,), jnp.float32),
        "bn2_mean": jnp.zeros((planes,), jnp.float32),
        "bn2_var": jnp.ones((planes,), jnp.float32),
    }


if __name__ == "__main__":
    key = jax.random.PRNGKey(0)
    k_x, k_p = jax.random.split(key)

    N, C, H, W = 2, 4, 16, 16          # inplanes == planes (stride=1, no downsample)
    x = jax.random.normal(k_x, (N, C, H, W), jnp.float32)
    params = _init_params(k_p, inplanes=C, planes=C)

    out = jax.block_until_ready(basic_block_forward(x, params))
    ref = jax.block_until_ready(_reference_forward(x, params))

    assert out.shape == (N, C, H, W)
    assert jnp.allclose(out, ref, rtol=5e-3, atol=5e-3), "mismatch vs reference"

    print("KERNEL_OK")
</pallas_src>

<mosaic_0001>
module attributes {stable_mosaic.version = 11 : i64} {
  func.func @kernel(%arg0: i32, %arg1: memref<1x4x256xf32, #tpu.memory_space<vmem>>, %arg2: memref<9x4x4xbf16, #tpu.memory_space<vmem>>, %arg3: memref<4x1xf32, #tpu.memory_space<vmem>>, %arg4: memref<9x4x4xbf16, #tpu.memory_space<vmem>>, %arg5: memref<4x1xf32, #tpu.memory_space<vmem>>, %arg6: memref<1x4x256xf32, #tpu.memory_space<vmem>>, %arg7: memref<4x18x18xbf16, #tpu.memory_space<vmem>>) attributes {dimension_semantics = [#tpu.dimension_semantics<parallel>], iteration_bounds = array<i64: 2>, scalar_prefetch = 0 : i64, scratch_operands = 1 : i64, tpu.core_type = #tpu.core_type<tc>, window_params = [{transform_indices = @transform_0, window_bounds = array<i64: 1, 4, 256>}, {pipeline_mode = #tpu.pipeline_mode<synchronous>, transform_indices = @transform_1, window_bounds = array<i64: 9, 4, 4>}, {pipeline_mode = #tpu.pipeline_mode<synchronous>, transform_indices = @transform_2, window_bounds = array<i64: 4, 1>}, {pipeline_mode = #tpu.pipeline_mode<synchronous>, transform_indices = @transform_3, window_bounds = array<i64: 9, 4, 4>}, {pipeline_mode = #tpu.pipeline_mode<synchronous>, transform_indices = @transform_4, window_bounds = array<i64: 4, 1>}, {transform_indices = @transform_5, window_bounds = array<i64: 1, 4, 256>}]} {
    %cst = arith.constant 0.000000e+00 : bf16
    %0 = vector.broadcast %cst : bf16 to vector<4x1x18xbf16>
    %cst_0 = arith.constant 0.000000e+00 : bf16
    %1 = vector.broadcast %cst_0 : bf16 to vector<4x18x1xbf16>
    %c0 = arith.constant 0 : index
    %c0_1 = arith.constant 0 : index
    %c0_2 = arith.constant 0 : index
    %2 = vector.load %arg7[%c0, %c0_1, %c0_2] : memref<4x18x18xbf16, #tpu.memory_space<vmem>>, vector<4x1x18xbf16>
    tpu.vector_store %arg7[%c0, %c0_1, %c0_2], %0 {strides = array<i32>} : memref<4x18x18xbf16, #tpu.memory_space<vmem>>, vector<4x1x18xbf16>,
    %c0_3 = arith.constant 0 : index
    %c17 = arith.constant 17 : index
    %c0_4 = arith.constant 0 : index
    %3 = vector.load %arg7[%c0_3, %c17, %c0_4] : memref<4x18x18xbf16, #tpu.memory_space<vmem>>, vector<4x1x18xbf16>
    tpu.vector_store %arg7[%c0_3, %c17, %c0_4], %0 {strides = array<i32>} : memref<4x18x18xbf16, #tpu.memory_space<vmem>>, vector<4x1x18xbf16>,
    %c0_5 = arith.constant 0 : index
    %c0_6 = arith.constant 0 : index
    %c0_7 = arith.constant 0 : index
    %4 = vector.load %arg7[%c0_5, %c0_6, %c0_7] : memref<4x18x18xbf16, #tpu.memory_space<vmem>>, vector<4x18x1xbf16>
    tpu.vector_store %arg7[%c0_5, %c0_6, %c0_7], %1 {strides = array<i32>} : memref<4x18x18xbf16, #tpu.memory_space<vmem>>, vector<4x18x1xbf16>,
    %c0_8 = arith.constant 0 : index
    %c0_9 = arith.constant 0 : index
    %c17_10 = arith.constant 17 : index
    %5 = vector.load %arg7[%c0_8, %c0_9, %c17_10] : memref<4x18x18xbf16, #tpu.memory_space<vmem>>, vector<4x18x1xbf16>
    tpu.vector_store %arg7[%c0_8, %c0_9, %c17_10], %1 {strides = array<i32>} : memref<4x18x18xbf16, #tpu.memory_space<vmem>>, vector<4x18x1xbf16>,
    %c0_11 = arith.constant 0 : index
    %c0_12 = arith.constant 0 : index
    %c0_13 = arith.constant 0 : index
    %6 = vector.load %arg1[%c0_11, %c0_12, %c0_13] : memref<1x4x256xf32, #tpu.memory_space<vmem>>, vector<1x4x256xf32>
    %7 = vector.shape_cast %6 : vector<1x4x256xf32> to vector<4x256xf32>
    %8 = arith.truncf %7 : vector<4x256xf32> to vector<4x256xbf16>
    %9 = vector.shape_cast %8 : vector<4x256xbf16> to vector<4x16x16xbf16>
    %c0_14 = arith.constant 0 : index
    %c1 = arith.constant 1 : index
    %c1_15 = arith.constant 1 : index
    %10 = vector.load %arg7[%c0_14, %c1, %c1_15] : memref<4x18x18xbf16, #tpu.memory_space<vmem>>, vector<4x16x16xbf16>
    tpu.vector_store %arg7[%c0_14, %c1, %c1_15], %9 {strides = array<i32>} : memref<4x18x18xbf16, #tpu.memory_space<vmem>>, vector<4x16x16xbf16>,
    %c0_16 = arith.constant 0 : index
    %c0_17 = arith.constant 0 : index
    %c0_18 = arith.constant 0 : index
    %11 = vector.load %arg7[%c0_16, %c0_17, %c0_18] : memref<4x18x18xbf16, #tpu.memory_space<vmem>>, vector<4x16x16xbf16>
    %12 = vector.shape_cast %11 : vector<4x16x16xbf16> to vector<4x256xbf16>
    %c0_19 = arith.constant 0 : index
    %c0_20 = arith.constant 0 : index
    %c0_21 = arith.constant 0 : index
    %13 = vector.load %arg2[%c0_19, %c0_20, %c0_21] : memref<9x4x4xbf16, #tpu.memory_space<vmem>>, vector<1x4x4xbf16>
    %14 = vector.shape_cast %13 : vector<1x4x4xbf16> to vector<4x4xbf16>
    %cst_22 = arith.constant dense<0.000000e+00> : vector<4x256xf32>
    %15 = tpu.matmul %14, %12, %cst_22 {dimension_numbers = #tpu.dot_dimension_numbers<[1], [0], [0], [1], [0, 0, 1, 1], [], []>} : vector<4x4xbf16>, vector<4x256xbf16>, vector<4x256xf32> -> vector<4x256xf32>
    %c0_23 = arith.constant 0 : index
    %c0_24 = arith.constant 0 : index
    %c1_25 = arith.constant 1 : index
    %16 = vector.load %arg7[%c0_23, %c0_24, %c1_25] : memref<4x18x18xbf16, #tpu.memory_space<vmem>>, vector<4x16x16xbf16>
    %17 = vector.shape_cast %16 : vector<4x16x16xbf16> to vector<4x256xbf16>
    %c1_26 = arith.constant 1 : index
    %c0_27 = arith.constant 0 : index
    %c0_28 = arith.constant 0 : index
    %18 = vector.load %arg2[%c1_26, %c0_27, %c0_28] : memref<9x4x4xbf16, #tpu.memory_space<vmem>>, vector<1x4x4xbf16>
    %19 = vector.shape_cast %18 : vector<1x4x4xbf16> to vector<4x4xbf16>
    %cst_29 = arith.constant dense<0.000000e+00> : vector<4x256xf32>
    %20 = tpu.matmul %19, %17, %cst_29 {dimension_numbers = #tpu.dot_dimension_numbers<[1], [0], [0], [1], [0, 0, 1, 1], [], []>} : vector<4x4xbf16>, vector<4x256xbf16>, vector<4x256xf32> -> vector<4x256xf32>
    %21 = arith.addf %15, %20 : vector<4x256xf32>
    %c0_30 = arith.constant 0 : index
    %c0_31 = arith.constant 0 : index
    %c2 = arith.constant 2 : index
    %22 = vector.load %arg7[%c0_30, %c0_31, %c2] : memref<4x18x18xbf16, #tpu.memory_space<vmem>>, vector<4x16x16xbf16>
    %23 = vector.shape_cast %22 : vector<4x16x16xbf16> to vector<4x256xbf16>
    %c2_32 = arith.constant 2 : index
    %c0_33 = arith.constant 0 : index
    %c0_34 = arith.constant 0 : index
    %24 = vector.load %arg2[%c2_32, %c0_33, %c0_34] : memref<9x4x4xbf16, #tpu.memory_space<vmem>>, vector<1x4x4xbf16>
    %25 = vector.shape_cast %24 : vector<1x4x4xbf16> to vector<4x4xbf16>
    %cst_35 = arith.constant dense<0.000000e+00> : vector<4x256xf32>
    %26 = tpu.matmul %25, %23, %cst_35 {dimension_numbers = #tpu.dot_dimension_numbers<[1], [0], [0], [1], [0, 0, 1, 1], [], []>} : vector<4x4xbf16>, vector<4x256xbf16>, vector<4x256xf32> -> vector<4x256xf32>
    %27 = arith.addf %21, %26 : vector<4x256xf32>
    %c0_36 = arith.constant 0 : index
    %c1_37 = arith.constant 1 : index
    %c0_38 = arith.constant 0 : index
    %28 = vector.load %arg7[%c0_36, %c1_37, %c0_38] : memref<4x18x18xbf16, #tpu.memory_space<vmem>>, vector<4x16x16xbf16>
    %29 = vector.shape_cast %28 : vector<4x16x16xbf16> to vector<4x256xbf16>
    %c3 = arith.constant 3 : index
    %c0_39 = arith.constant 0 : index
    %c0_40 = arith.constant 0 : index
    %30 = vector.load %arg2[%c3, %c0_39, %c0_40] : memref<9x4x4xbf16, #tpu.memory_space<vmem>>, vector<1x4x4xbf16>
    %31 = vector.shape_cast %30 : vector<1x4x4xbf16> to vector<4x4xbf16>
    %cst_41 = arith.constant dense<0.000000e+00> : vector<4x256xf32>
    %32 = tpu.matmul %31, %29, %cst_41 {dimension_numbers = #tpu.dot_dimension_numbers<[1], [0], [0], [1], [0, 0, 1, 1], [], []>} : vector<4x4xbf16>, vector<4x256xbf16>, vector<4x256xf32> -> vector<4x256xf32>
    %33 = arith.addf %27, %32 : vector<4x256xf32>
    %c0_42 = arith.constant 0 : index
    %c1_43 = arith.constant 1 : index
    %c1_44 = arith.constant 1 : index
    %34 = vector.load %arg7[%c0_42, %c1_43, %c1_44] : memref<4x18x18xbf16, #tpu.memory_space<vmem>>, vector<4x16x16xbf16>
    %35 = vector.shape_cast %34 : vector<4x16x16xbf16> to vector<4x256xbf16>
    %c4 = arith.constant 4 : index
    %c0_45 = arith.constant 0 : index
    %c0_46 = arith.constant 0 : index
    %36 = vector.load %arg2[%c4, %c0_45, %c0_46] : memref<9x4x4xbf16, #tpu.memory_space<vmem>>, vector<1x4x4xbf16>
    %37 = vector.shape_cast %36 : vector<1x4x4xbf16> to vector<4x4xbf16>
    %cst_47 = arith.constant dense<0.000000e+00> : vector<4x256xf32>
    %38 = tpu.matmul %37, %35, %cst_47 {dimension_numbers = #tpu.dot_dimension_numbers<[1], [0], [0], [1], [0, 0, 1, 1], [], []>} : vector<4x4xbf16>, vector<4x256xbf16>, vector<4x256xf32> -> vector<4x256xf32>
    %39 = arith.addf %33, %38 : vector<4x256xf32>
    %c0_48 = arith.constant 0 : index
    %c1_49 = arith.constant 1 : index
    %c2_50 = arith.constant 2 : index
    %40 = vector.load %arg7[%c0_48, %c1_49, %c2_50] : memref<4x18x18xbf16, #tpu.memory_space<vmem>>, vector<4x16x16xbf16>
    %41 = vector.shape_cast %40 : vector<4x16x16xbf16> to vector<4x256xbf16>
    %c5 = arith.constant 5 : index
    %c0_51 = arith.constant 0 : index
    %c0_52 = arith.constant 0 : index
    %42 = vector.load %arg2[%c5, %c0_51, %c0_52] : memref<9x4x4xbf16, #tpu.memory_space<vmem>>, vector<1x4x4xbf16>
    %43 = vector.shape_cast %42 : vector<1x4x4xbf16> to vector<4x4xbf16>
    %cst_53 = arith.constant dense<0.000000e+00> : vector<4x256xf32>
    %44 = tpu.matmul %43, %41, %cst_53 {dimension_numbers = #tpu.dot_dimension_numbers<[1], [0], [0], [1], [0, 0, 1, 1], [], []>} : vector<4x4xbf16>, vector<4x256xbf16>, vector<4x256xf32> -> vector<4x256xf32>
    %45 = arith.addf %39, %44 : vector<4x256xf32>
    %c0_54 = arith.constant 0 : index
    %c2_55 = arith.constant 2 : index
    %c0_56 = arith.constant 0 : index
    %46 = vector.load %arg7[%c0_54, %c2_55, %c0_56] : memref<4x18x18xbf16, #tpu.memory_space<vmem>>, vector<4x16x16xbf16>
    %47 = vector.shape_cast %46 : vector<4x16x16xbf16> to vector<4x256xbf16>
    %c6 = arith.constant 6 : index
    %c0_57 = arith.constant 0 : index
    %c0_58 = arith.constant 0 : index
    %48 = vector.load %arg2[%c6, %c0_57, %c0_58] : memref<9x4x4xbf16, #tpu.memory_space<vmem>>, vector<1x4x4xbf16>
    %49 = vector.shape_cast %48 : vector<1x4x4xbf16> to vector<4x4xbf16>
    %cst_59 = arith.constant dense<0.000000e+00> : vector<4x256xf32>
    %50 = tpu.matmul %49, %47, %cst_59 {dimension_numbers = #tpu.dot_dimension_numbers<[1], [0], [0], [1], [0, 0, 1, 1], [], []>} : vector<4x4xbf16>, vector<4x256xbf16>, vector<4x256xf32> -> vector<4x256xf32>
    %51 = arith.addf %45, %50 : vector<4x256xf32>
    %c0_60 = arith.constant 0 : index
    %c2_61 = arith.constant 2 : index
    %c1_62 = arith.constant 1 : index
    %52 = vector.load %arg7[%c0_60, %c2_61, %c1_62] : memref<4x18x18xbf16, #tpu.memory_space<vmem>>, vector<4x16x16xbf16>
    %53 = vector.shape_cast %52 : vector<4x16x16xbf16> to vector<4x256xbf16>
    %c7 = arith.constant 7 : index
    %c0_63 = arith.constant 0 : index
    %c0_64 = arith.constant 0 : index
    %54 = vector.load %arg2[%c7, %c0_63, %c0_64] : memref<9x4x4xbf16, #tpu.memory_space<vmem>>, vector<1x4x4xbf16>
    %55 = vector.shape_cast %54 : vector<1x4x4xbf16> to vector<4x4xbf16>
    %cst_65 = arith.constant dense<0.000000e+00> : vector<4x256xf32>
    %56 = tpu.matmul %55, %53, %cst_65 {dimension_numbers = #tpu.dot_dimension_numbers<[1], [0], [0], [1], [0, 0, 1, 1], [], []>} : vector<4x4xbf16>, vector<4x256xbf16>, vector<4x256xf32> -> vector<4x256xf32>
    %57 = arith.addf %51, %56 : vector<4x256xf32>
    %c0_66 = arith.constant 0 : index
    %c2_67 = arith.constant 2 : index
    %c2_68 = arith.constant 2 : index
    %58 = vector.load %arg7[%c0_66, %c2_67, %c2_68] : memref<4x18x18xbf16, #tpu.memory_space<vmem>>, vector<4x16x16xbf16>
    %59 = vector.shape_cast %58 : vector<4x16x16xbf16> to vector<4x256xbf16>
    %c8 = arith.constant 8 : index
    %c0_69 = arith.constant 0 : index
    %c0_70 = arith.constant 0 : index
    %60 = vector.load %arg2[%c8, %c0_69, %c0_70] : memref<9x4x4xbf16, #tpu.memory_space<vmem>>, vector<1x4x4xbf16>
    %61 = vector.shape_cast %60 : vector<1x4x4xbf16> to vector<4x4xbf16>
    %cst_71 = arith.constant dense<0.000000e+00> : vector<4x256xf32>
    %62 = tpu.matmul %61, %59, %cst_71 {dimension_numbers = #tpu.dot_dimension_numbers<[1], [0], [0], [1], [0, 0, 1, 1], [], []>} : vector<4x4xbf16>, vector<4x256xbf16>, vector<4x256xf32> -> vector<4x256xf32>
    %63 = arith.addf %57, %62 : vector<4x256xf32>
    %c0_72 = arith.constant 0 : index
    %c0_73 = arith.constant 0 : index
    %64 = vector.load %arg3[%c0_72, %c0_73] : memref<4x1xf32, #tpu.memory_space<vmem>>, vector<4x1xf32>
    %65 = vector.broadcast %64 : vector<4x1xf32> to vector<4x256xf32>
    %66 = arith.addf %63, %65 : vector<4x256xf32>
    %cst_74 = arith.constant 0.000000e+00 : f32
    %67 = vector.broadcast %cst_74 : f32 to vector<4x256xf32>
    %68 = arith.maximumf %66, %67 : vector<4x256xf32>
    %69 = arith.truncf %68 : vector<4x256xf32> to vector<4x256xbf16>
    %70 = vector.shape_cast %69 : vector<4x256xbf16> to vector<4x16x16xbf16>
    %c0_75 = arith.constant 0 : index
    %c1_76 = arith.constant 1 : index
    %c1_77 = arith.constant 1 : index
    %71 = vector.load %arg7[%c0_75, %c1_76, %c1_77] : memref<4x18x18xbf16, #tpu.memory_space<vmem>>, vector<4x16x16xbf16>
    tpu.vector_store %arg7[%c0_75, %c1_76, %c1_77], %70 {strides = array<i32>} : memref<4x18x18xbf16, #tpu.memory_space<vmem>>, vector<4x16x16xbf16>,
    %c0_78 = arith.constant 0 : index
    %c0_79 = arith.constant 0 : index
    %c0_80 = arith.constant 0 : index
    %72 = vector.load %arg7[%c0_78, %c0_79, %c0_80] : memref<4x18x18xbf16, #tpu.memory_space<vmem>>, vector<4x16x16xbf16>
    %73 = vector.shape_cast %72 : vector<4x16x16xbf16> to vector<4x256xbf16>
    %c0_81 = arith.constant 0 : index
    %c0_82 = arith.constant 0 : index
    %c0_83 = arith.constant 0 : index
    %74 = vector.load %arg4[%c0_81, %c0_82, %c0_83] : memref<9x4x4xbf16, #tpu.memory_space<vmem>>, vector<1x4x4xbf16>
    %75 = vector.shape_cast %74 : vector<1x4x4xbf16> to vector<4x4xbf16>
    %cst_84 = arith.constant dense<0.000000e+00> : vector<4x256xf32>
    %76 = tpu.matmul %75, %73, %cst_84 {dimension_numbers = #tpu.dot_dimension_numbers<[1], [0], [0], [1], [0, 0, 1, 1], [], []>} : vector<4x4xbf16>, vector<4x256xbf16>, vector<4x256xf32> -> vector<4x256xf32>
    %c0_85 = arith.constant 0 : index
    %c0_86 = arith.constant 0 : index
    %c1_87 = arith.constant 1 : index
    %77 = vector.load %arg7[%c0_85, %c0_86, %c1_87] : memref<4x18x18xbf16, #tpu.memory_space<vmem>>, vector<4x16x16xbf16>
    %78 = vector.shape_cast %77 : vector<4x16x16xbf16> to vector<4x256xbf16>
    %c1_88 = arith.constant 1 : index
    %c0_89 = arith.constant 0 : index
    %c0_90 = arith.constant 0 : index
    %79 = vector.load %arg4[%c1_88, %c0_89, %c0_90] : memref<9x4x4xbf16, #tpu.memory_space<vmem>>, vector<1x4x4xbf16>
    %80 = vector.shape_cast %79 : vector<1x4x4xbf16> to vector<4x4xbf16>
    %cst_91 = arith.constant dense<0.000000e+00> : vector<4x256xf32>
    %81 = tpu.matmul %80, %78, %cst_91 {dimension_numbers = #tpu.dot_dimension_numbers<[1], [0], [0], [1], [0, 0, 1, 1], [], []>} : vector<4x4xbf16>, vector<4x256xbf16>, vector<4x256xf32> -> vector<4x256xf32>
    %82 = arith.addf %76, %81 : vector<4x256xf32>
    %c0_92 = arith.constant 0 : index
    %c0_93 = arith.constant 0 : index
    %c2_94 = arith.constant 2 : index
    %83 = vector.load %arg7[%c0_92, %c0_93, %c2_94] : memref<4x18x18xbf16, #tpu.memory_space<vmem>>, vector<4x16x16xbf16>
    %84 = vector.shape_cast %83 : vector<4x16x16xbf16> to vector<4x256xbf16>
    %c2_95 = arith.constant 2 : index
    %c0_96 = arith.constant 0 : index
    %c0_97 = arith.constant 0 : index
    %85 = vector.load %arg4[%c2_95, %c0_96, %c0_97] : memref<9x4x4xbf16, #tpu.memory_space<vmem>>, vector<1x4x4xbf16>
    %86 = vector.shape_cast %85 : vector<1x4x4xbf16> to vector<4x4xbf16>
    %cst_98 = arith.constant dense<0.000000e+00> : vector<4x256xf32>
    %87 = tpu.matmul %86, %84, %cst_98 {dimension_numbers = #tpu.dot_dimension_numbers<[1], [0], [0], [1], [0, 0, 1, 1], [], []>} : vector<4x4xbf16>, vector<4x256xbf16>, vector<4x256xf32> -> vector<4x256xf32>
    %88 = arith.addf %82, %87 : vector<4x256xf32>
    %c0_99 = arith.constant 0 : index
    %c1_100 = arith.constant 1 : index
    %c0_101 = arith.constant 0 : index
    %89 = vector.load %arg7[%c0_99, %c1_100, %c0_101] : memref<4x18x18xbf16, #tpu.memory_space<vmem>>, vector<4x16x16xbf16>
    %90 = vector.shape_cast %89 : vector<4x16x16xbf16> to vector<4x256xbf16>
    %c3_102 = arith.constant 3 : index
    %c0_103 = arith.constant 0 : index
    %c0_104 = arith.constant 0 : index
    %91 = vector.load %arg4[%c3_102, %c0_103, %c0_104] : memref<9x4x4xbf16, #tpu.memory_space<vmem>>, vector<1x4x4xbf16>
    %92 = vector.shape_cast %91 : vector<1x4x4xbf16> to vector<4x4xbf16>
    %cst_105 = arith.constant dense<0.000000e+00> : vector<4x256xf32>
    %93 = tpu.matmul %92, %90, %cst_105 {dimension_numbers = #tpu.dot_dimension_numbers<[1], [0], [0], [1], [0, 0, 1, 1], [], []>} : vector<4x4xbf16>, vector<4x256xbf16>, vector<4x256xf32> -> vector<4x256xf32>
    %94 = arith.addf %88, %93 : vector<4x256xf32>
    %c0_106 = arith.constant 0 : index
    %c1_107 = arith.constant 1 : index
    %c1_108 = arith.constant 1 : index
    %95 = vector.load %arg7[%c0_106, %c1_107, %c1_108] : memref<4x18x18xbf16, #tpu.memory_space<vmem>>, vector<4x16x16xbf16>
    %96 = vector.shape_cast %95 : vector<4x16x16xbf16> to vector<4x256xbf16>
    %c4_109 = arith.constant 4 : index
    %c0_110 = arith.constant 0 : index
    %c0_111 = arith.constant 0 : index
    %97 = vector.load %arg4[%c4_109, %c0_110, %c0_111] : memref<9x4x4xbf16, #tpu.memory_space<vmem>>, vector<1x4x4xbf16>
    %98 = vector.shape_cast %97 : vector<1x4x4xbf16> to vector<4x4xbf16>
    %cst_112 = arith.constant dense<0.000000e+00> : vector<4x256xf32>
    %99 = tpu.matmul %98, %96, %cst_112 {dimension_numbers = #tpu.dot_dimension_numbers<[1], [0], [0], [1], [0, 0, 1, 1], [], []>} : vector<4x4xbf16>, vector<4x256xbf16>, vector<4x256xf32> -> vector<4x256xf32>
    %100 = arith.addf %94, %99 : vector<4x256xf32>
    %c0_113 = arith.constant 0 : index
    %c1_114 = arith.constant 1 : index
    %c2_115 = arith.constant 2 : index
    %101 = vector.load %arg7[%c0_113, %c1_114, %c2_115] : memref<4x18x18xbf16, #tpu.memory_space<vmem>>, vector<4x16x16xbf16>
    %102 = vector.shape_cast %101 : vector<4x16x16xbf16> to vector<4x256xbf16>
    %c5_116 = arith.constant 5 : index
    %c0_117 = arith.constant 0 : index
    %c0_118 = arith.constant 0 : index
    %103 = vector.load %arg4[%c5_116, %c0_117, %c0_118] : memref<9x4x4xbf16, #tpu.memory_space<vmem>>, vector<1x4x4xbf16>
    %104 = vector.shape_cast %103 : vector<1x4x4xbf16> to vector<4x4xbf16>
    %cst_119 = arith.constant dense<0.000000e+00> : vector<4x256xf32>
    %105 = tpu.matmul %104, %102, %cst_119 {dimension_numbers = #tpu.dot_dimension_numbers<[1], [0], [0], [1], [0, 0, 1, 1], [], []>} : vector<4x4xbf16>, vector<4x256xbf16>, vector<4x256xf32> -> vector<4x256xf32>
    %106 = arith.addf %100, %105 : vector<4x256xf32>
    %c0_120 = arith.constant 0 : index
    %c2_121 = arith.constant 2 : index
    %c0_122 = arith.constant 0 : index
    %107 = vector.load %arg7[%c0_120, %c2_121, %c0_122] : memref<4x18x18xbf16, #tpu.memory_space<vmem>>, vector<4x16x16xbf16>
    %108 = vector.shape_cast %107 : vector<4x16x16xbf16> to vector<4x256xbf16>
    %c6_123 = arith.constant 6 : index
    %c0_124 = arith.constant 0 : index
    %c0_125 = arith.constant 0 : index
    %109 = vector.load %arg4[%c6_123, %c0_124, %c0_125] : memref<9x4x4xbf16, #tpu.memory_space<vmem>>, vector<1x4x4xbf16>
    %110 = vector.shape_cast %109 : vector<1x4x4xbf16> to vector<4x4xbf16>
    %cst_126 = arith.constant dense<0.000000e+00> : vector<4x256xf32>
    %111 = tpu.matmul %110, %108, %cst_126 {dimension_numbers = #tpu.dot_dimension_numbers<[1], [0], [0], [1], [0, 0, 1, 1], [], []>} : vector<4x4xbf16>, vector<4x256xbf16>, vector<4x256xf32> -> vector<4x256xf32>
    %112 = arith.addf %106, %111 : vector<4x256xf32>
    %c0_127 = arith.constant 0 : index
    %c2_128 = arith.constant 2 : index
    %c1_129 = arith.constant 1 : index
    %113 = vector.load %arg7[%c0_127, %c2_128, %c1_129] : memref<4x18x18xbf16, #tpu.memory_space<vmem>>, vector<4x16x16xbf16>
    %114 = vector.shape_cast %113 : vector<4x16x16xbf16> to vector<4x256xbf16>
    %c7_130 = arith.constant 7 : index
    %c0_131 = arith.constant 0 : index
    %c0_132 = arith.constant 0 : index
    %115 = vector.load %arg4[%c7_130, %c0_131, %c0_132] : memref<9x4x4xbf16, #tpu.memory_space<vmem>>, vector<1x4x4xbf16>
    %116 = vector.shape_cast %115 : vector<1x4x4xbf16> to vector<4x4xbf16>
    %cst_133 = arith.constant dense<0.000000e+00> : vector<4x256xf32>
    %117 = tpu.matmul %116, %114, %cst_133 {dimension_numbers = #tpu.dot_dimension_numbers<[1], [0], [0], [1], [0, 0, 1, 1], [], []>} : vector<4x4xbf16>, vector<4x256xbf16>, vector<4x256xf32> -> vector<4x256xf32>
    %118 = arith.addf %112, %117 : vector<4x256xf32>
    %c0_134 = arith.constant 0 : index
    %c2_135 = arith.constant 2 : index
    %c2_136 = arith.constant 2 : index
    %119 = vector.load %arg7[%c0_134, %c2_135, %c2_136] : memref<4x18x18xbf16, #tpu.memory_space<vmem>>, vector<4x16x16xbf16>
    %120 = vector.shape_cast %119 : vector<4x16x16xbf16> to vector<4x256xbf16>
    %c8_137 = arith.constant 8 : index
    %c0_138 = arith.constant 0 : index
    %c0_139 = arith.constant 0 : index
    %121 = vector.load %arg4[%c8_137, %c0_138, %c0_139] : memref<9x4x4xbf16, #tpu.memory_space<vmem>>, vector<1x4x4xbf16>
    %122 = vector.shape_cast %121 : vector<1x4x4xbf16> to vector<4x4xbf16>
    %cst_140 = arith.constant dense<0.000000e+00> : vector<4x256xf32>
    %123 = tpu.matmul %122, %120, %cst_140 {dimension_numbers = #tpu.dot_dimension_numbers<[1], [0], [0], [1], [0, 0, 1, 1], [], []>} : vector<4x4xbf16>, vector<4x256xbf16>, vector<4x256xf32> -> vector<4x256xf32>
    %124 = arith.addf %118, %123 : vector<4x256xf32>
    %c0_141 = arith.constant 0 : index
    %c0_142 = arith.constant 0 : index
    %125 = vector.load %arg5[%c0_141, %c0_142] : memref<4x1xf32, #tpu.memory_space<vmem>>, vector<4x1xf32>
    %126 = vector.broadcast %125 : vector<4x1xf32> to vector<4x256xf32>
    %127 = arith.addf %124, %126 : vector<4x256xf32>
    %c0_143 = arith.constant 0 : index
    %c0_144 = arith.constant 0 : index
    %c0_145 = arith.constant 0 : index
    %128 = vector.load %arg1[%c0_143, %c0_144, %c0_145] : memref<1x4x256xf32, #tpu.memory_space<vmem>>, vector<1x4x256xf32>
    %129 = vector.shape_cast %128 : vector<1x4x256xf32> to vector<4x256xf32>
    %130 = arith.addf %127, %129 : vector<4x256xf32>
    %cst_146 = arith.constant 0.000000e+00 : f32
    %131 = vector.broadcast %cst_146 : f32 to vector<4x256xf32>
    %132 = arith.maximumf %130, %131 : vector<4x256xf32>
    %133 = vector.shape_cast %132 : vector<4x256xf32> to vector<1x4x256xf32>
    %c0_147 = arith.constant 0 : index
    %c0_148 = arith.constant 0 : index
    %c0_149 = arith.constant 0 : index
    %134 = vector.load %arg6[%c0_147, %c0_148, %c0_149] : memref<1x4x256xf32, #tpu.memory_space<vmem>>, vector<1x4x256xf32>
    tpu.vector_store %arg6[%c0_147, %c0_148, %c0_149], %133 {strides = array<i32>} : memref<1x4x256xf32, #tpu.memory_space<vmem>>, vector<1x4x256xf32>,
    return
  }
  func.func @transform_0(%arg0: i32) -> (i32, i32, i32) {
    %c0_i32 = arith.constant 0 : i32
    %c0_i32_0 = arith.constant 0 : i32
    %c0_i32_1 = arith.constant 0 : i32
    return %arg0, %c0_i32, %c0_i32_0 : i32, i32, i32
  }
  func.func @transform_1(%arg0: i32) -> (i32, i32, i32) {
    %c0_i32 = arith.constant 0 : i32
    %c0_i32_0 = arith.constant 0 : i32
    %c0_i32_1 = arith.constant 0 : i32
    %c0_i32_2 = arith.constant 0 : i32
    return %c0_i32, %c0_i32_0, %c0_i32_1 : i32, i32, i32
  }
  func.func @transform_2(%arg0: i32) -> (i32, i32) {
    %c0_i32 = arith.constant 0 : i32
    %c0_i32_0 = arith.constant 0 : i32
    %c0_i32_1 = arith.constant 0 : i32
    return %c0_i32, %c0_i32_0 : i32, i32
  }
  func.func @transform_3(%arg0: i32) -> (i32, i32, i32) {
    %c0_i32 = arith.constant 0 : i32
    %c0_i32_0 = arith.constant 0 : i32
    %c0_i32_1 = arith.constant 0 : i32
    %c0_i32_2 = arith.constant 0 : i32
    return %c0_i32, %c0_i32_0, %c0_i32_1 : i32, i32, i32
  }
  func.func @transform_4(%arg0: i32) -> (i32, i32) {
    %c0_i32 = arith.constant 0 : i32
    %c0_i32_0 = arith.constant 0 : i32
    %c0_i32_1 = arith.constant 0 : i32
    return %c0_i32, %c0_i32_0 : i32, i32
  }
  func.func @transform_5(%arg0: i32) -> (i32, i32, i32) {
    %c0_i32 = arith.constant 0 : i32
    %c0_i32_0 = arith.constant 0 : i32
    %c0_i32_1 = arith.constant 0 : i32
    return %arg0, %c0_i32, %c0_i32_0 : i32, i32, i32
  }
}

</mosaic_0001>

<llo_original>
// kernel: basic_block_forward.1
$region0: #{basic_block_forward.1}
  #allocation0 [shape = 'u32[]', space=smem, size = 0x4, offset = 0x4, fixed_abs, tag = 'smem constant byte address 0x4 - core index']
  #allocation1 [shape = 'u32[144,128]{1,0:T(1,128)}', space=vmem, size = 0x12000, scoped, tag = 'internal scratch']
  #allocation2 [shape = 'bf16[4,18,18]{2,1,0:T(8,128)(2,1)}', space=vmem, size = 0x6000, scoped, tag = 'scratch operand']
  %s0 = inlined_call_operand.vmem [shape: f32[2,4,256], index: 0, kind: input, shape index: {}]
  %s1 = inlined_call_operand.vmem [shape: bf16[9,4,4], index: 1, kind: input, shape index: {}]
  %s2 = inlined_call_operand.vmem [shape: f32[4,1], index: 2, kind: input, shape index: {}]
  %s3 = inlined_call_operand.vmem [shape: bf16[9,4,4], index: 3, kind: input, shape index: {}]
  %s4 = inlined_call_operand.vmem [shape: f32[4,1], index: 4, kind: input, shape index: {}]
  %s5 = inlined_call_operand.vmem [shape: f32[2,4,256], index: 5, kind: output, shape index: {}]
  %s6 = sld [smem:[#allocation0]]
  $region53: #{basic_block_forward.1} parent=0
    _
  %s8 = ssub.s32 1, %s6
  %s9 = scalar_select 0, %s8, %s6
  loop: start=0, step=1, limit=4
  $region2: #{basic_block_forward.1} parent=0 // loop_pre_header
    _
  $region3: #{basic_block_forward.1} parent=0 // loop_header
    %s11 = sphi 0, %s15
    %p12 = scmp.ge.s32.totalorder %s11, 4
    %s21 = sphi 0, %s23
    %s24 = sphi 0, %s21
    %s25 = sphi 0, %s24
    %s41 = sphi 0, %s25
    %s45 = sphi 0, %s45
    %s47 = sphi 0, %s45
    %s48 = sphi 0, %s47
    %s62 = sphi 0, %s48
    %s66 = sphi 0, %s66
    %s68 = sphi 0, %s66
    %s69 = sphi 0, %s68
    %s83 = sphi 0, %s69
    %s87 = sphi 0, %s87
    %s89 = sphi 0, %s87
    %s90 = sphi 0, %s89
    %s104 = sphi 0, %s90
    %s108 = sphi 0, %s108
    %s110 = sphi 0, %s108
    %s111 = sphi 0, %s110
    %s125 = sphi 0, %s111
    %s131 = sphi 0, %s133
    %s134 = sphi 0, %s131
    %s135 = sphi 0, %s134
    %s151 = sphi 0, %s135
  $region4: #{basic_block_forward.1} parent=0 // loop_header_branch
    %14 = sbr.rel (%p12) target = $region8
  $region5: #{basic_block_forward.1} parent=0 // loop_body
    %s16 = ssub.s32 %s11, 1
    %s17 = ssub.s32 %s11, 2
    %s18 = sadd.s32 %s11, 1
    %s19 = ssub.s32 %s11, %s18
    %p20 = scmp.eq.s32.totalorder %s19, 0
    %s22 = sadd.s32 %s21, 1
    %s23 = scalar_select %p20, %s21, %s22
    %p26 = pneg %p20
    %p27 = scmp.eq.s32.totalorder %s11, 1
    %p28 = por %p26, %p27
    %p29 = scmp.ne.s32.totalorder %s21, %s24
    %p30 = scmp.eq.s32.totalorder %s11, 0
    %p31 = por %p29, %p30
    %p32 = scmp.ne.s32.totalorder %s21, %s24
    %p33 = scmp.eq.s32.totalorder %s16, 1
    %p34 = por %p32, %p33
    %p35 = scmp.ne.s32.totalorder %s24, %s25
    %p36 = scmp.eq.s32.totalorder %s16, 0
    %p37 = por %p35, %p36
    %p38 = scmp.ne.s32.totalorder %s24, %s25
    %p39 = scmp.eq.s32.totalorder %s17, 1
    %p40 = por %p38, %p39
    %p42 = scmp.ne.s32.totalorder %s25, %s41
    %p43 = scmp.eq.s32.totalorder %s17, 0
    %p44 = por %p42, %p43
    %s46 = sadd.s32 %s45, 1
    %p49 = scmp.eq.s32.totalorder %s11, 1
    %p50 = scmp.ne.s32.totalorder %s45, %s47
    %p51 = scmp.eq.s32.totalorder %s11, 0
    %p52 = por %p50, %p51
    %p53 = scmp.ne.s32.totalorder %s45, %s47
    %p54 = scmp.eq.s32.totalorder %s16, 1
    %p55 = por %p53, %p54
    %p56 = scmp.ne.s32.totalorder %s47, %s48
    %p57 = scmp.eq.s32.totalorder %s16, 0
    %p58 = por %p56, %p57
    %p59 = scmp.ne.s32.totalorder %s47, %s48
    %p60 = scmp.eq.s32.totalorder %s17, 1
    %p61 = por %p59, %p60
    %p63 = scmp.ne.s32.totalorder %s48, %s62
    %p64 = scmp.eq.s32.totalorder %s17, 0
    %p65 = por %p63, %p64
    %s67 = sadd.s32 %s66, 1
    %p70 = scmp.eq.s32.totalorder %s11, 1
    %p71 = scmp.ne.s32.totalorder %s66, %s68
    %p72 = scmp.eq.s32.totalorder %s11, 0
    %p73 = por %p71, %p72
    %p74 = scmp.ne.s32.totalorder %s66, %s68
    %p75 = scmp.eq.s32.totalorder %s16, 1
    %p76 = por %p74, %p75
    %p77 = scmp.ne.s32.totalorder %s68, %s69
    %p78 = scmp.eq.s32.totalorder %s16, 0
    %p79 = por %p77, %p78
    %p80 = scmp.ne.s32.totalorder %s68, %s69
    %p81 = scmp.eq.s32.totalorder %s17, 1
    %p82 = por %p80, %p81
    %p84 = scmp.ne.s32.totalorder %s69, %s83
    %p85 = scmp.eq.s32.totalorder %s17, 0
    %p86 = por %p84, %p85
    %s88 = sadd.s32 %s87, 1
    %p91 = scmp.eq.s32.totalorder %s11, 1
    %p92 = scmp.ne.s32.totalorder %s87, %s89
    %p93 = scmp.eq.s32.totalorder %s11, 0
    %p94 = por %p92, %p93
    %p95 = scmp.ne.s32.totalorder %s87, %s89
    %p96 = scmp.eq.s32.totalorder %s16, 1
    %p97 = por %p95, %p96
    %p98 = scmp.ne.s32.totalorder %s89, %s90
    %p99 = scmp.eq.s32.totalorder %s16, 0
    %p100 = por %p98, %p99
    %p101 = scmp.ne.s32.totalorder %s89, %s90
    %p102 = scmp.eq.s32.totalorder %s17, 1
    %p103 = por %p101, %p102
    %p105 = scmp.ne.s32.totalorder %s90, %s104
    %p106 = scmp.eq.s32.totalorder %s17, 0
    %p107 = por %p105, %p106
    %s109 = sadd.s32 %s108, 1
    %p112 = scmp.eq.s32.totalorder %s11, 1
    %p113 = scmp.ne.s32.totalorder %s108, %s110
    %p114 = scmp.eq.s32.totalorder %s11, 0
    %p115 = por %p113, %p114
    %p116 = scmp.ne.s32.totalorder %s108, %s110
    %p117 = scmp.eq.s32.totalorder %s16, 1
    %p118 = por %p116, %p117
    %p119 = scmp.ne.s32.totalorder %s110, %s111
    %p120 = scmp.eq.s32.totalorder %s16, 0
    %p121 = por %p119, %p120
    %p122 = scmp.ne.s32.totalorder %s110, %s111
    %p123 = scmp.eq.s32.totalorder %s17, 1
    %p124 = por %p122, %p123
    %p126 = scmp.ne.s32.totalorder %s111, %s125
    %p127 = scmp.eq.s32.totalorder %s17, 0
    %p128 = por %p126, %p127
    %s129 = ssub.s32 %s11, %s18
    %p130 = scmp.eq.s32.totalorder %s129, 0
    %s132 = sadd.s32 %s131, 1
    %s133 = scalar_select %p130, %s131, %s132
    %p136 = pneg %p130
    %p137 = scmp.eq.s32.totalorder %s11, 1
    %p138 = por %p136, %p137
    %p139 = scmp.ne.s32.totalorder %s131, %s134
    %p140 = scmp.eq.s32.totalorder %s11, 0
    %p141 = por %p139, %p140
    %p142 = scmp.ne.s32.totalorder %s131, %s134
    %p143 = scmp.eq.s32.totalorder %s16, 1
    %p144 = por %p142, %p143
    %p145 = scmp.ne.s32.totalorder %s134, %s135
    %p146 = scmp.eq.s32.totalorder %s16, 0
    %p147 = por %p145, %p146
    %p148 = scmp.ne.s32.totalorder %s134, %s135
    %p149 = scmp.eq.s32.totalorder %s17, 1
    %p150 = por %p148, %p149
    %p152 = scmp.ne.s32.totalorder %s135, %s151
    %p153 = scmp.eq.s32.totalorder %s17, 0
    %p154 = por %p152, %p153
    %p155 = scmp.le.s32.totalorder 1, %s11
    %p156 = scmp.lt.s32.totalorder %s11, 3
    %p157 = pnand %p155, %p156
    %p158 = pneg %p157
    // Predicated region
    $region9: #{basic_block_forward.1} parent=5 // pred_check
      _
    $region10: #{basic_block_forward.1} parent=5 // pred_check_branch
      %160 = sbr.rel (%p157) target = $region12
    $region11: #{basic_block_forward.1} parent=5 // pred_region
      %s161 = ssub.s32 %s11, 1
      // Predicated region
      $region13: #{basic_block_forward.1} parent=11 // pred_check
        %p162 = pneg %p58
      $region14: #{basic_block_forward.1} parent=11 // pred_check_branch
        %164 = sbr.rel (%p162) target = $region16
      $region15: #{basic_block_forward.1} parent=11 // pred_region
        _
      $region16: #{basic_block_forward.1} parent=11 // pred_fallthru
        _
      // Predicated region
      $region17: #{basic_block_forward.1} parent=11 // pred_check
        %p165 = pneg %p79
      $region18: #{basic_block_forward.1} parent=11 // pred_check_branch
        %167 = sbr.rel (%p165) target = $region20
      $region19: #{basic_block_forward.1} parent=11 // pred_region
        _
      $region20: #{basic_block_forward.1} parent=11 // pred_fallthru
        _
      // Predicated region
      $region21: #{basic_block_forward.1} parent=11 // pred_check
        %p168 = pneg %p100
      $region22: #{basic_block_forward.1} parent=11 // pred_check_branch
        %170 = sbr.rel (%p168) target = $region24
      $region23: #{basic_block_forward.1} parent=11 // pred_region
        _
      $region24: #{basic_block_forward.1} parent=11 // pred_fallthru
        _
      // Predicated region
      $region25: #{basic_block_forward.1} parent=11 // pred_check
        %p171 = pneg %p121
      $region26: #{basic_block_forward.1} parent=11 // pred_check_branch
        %173 = sbr.rel (%p171) target = $region28
      $region27: #{basic_block_forward.1} parent=11 // pred_region
        _
      $region28: #{basic_block_forward.1} parent=11 // pred_fallthru
        _
    $region12: #{basic_block_forward.1} parent=5 // pred_fallthru
      _
    %p174 = scmp.lt.s32.totalorder %s11, 2
    // Predicated region
    $region29: #{basic_block_forward.1} parent=5 // pred_check
      %p175 = pneg %p174
    $region30: #{basic_block_forward.1} parent=5 // pred_check_branch
      %177 = sbr.rel (%p175) target = $region32
    $region31: #{basic_block_forward.1} parent=5 // pred_region
      // Predicated region
      $region33: #{basic_block_forward.1} parent=31 // pred_check
        %p178 = pneg %p31
      $region34: #{basic_block_forward.1} parent=31 // pred_check_branch
        %180 = sbr.rel (%p178) target = $region36
      $region35: #{basic_block_forward.1} parent=31 // pred_region
        %p181 = scmp.lt.s32.totalorder %s11, 1
        %s182 = scalar_select %p181, %s11, 1
        %s183 = smul.addr %s182, 2
        %s184 = smul.addr %s183, 4
        %s185 = scalar_lea.vmem %s0, %s184
      $region36: #{basic_block_forward.1} parent=31 // pred_fallthru
        _
    $region32: #{basic_block_forward.1} parent=5 // pred_fallthru
      _
    %p186 = scmp.le.s32.totalorder 1, %s11
    %p187 = scmp.lt.s32.totalorder %s11, 3
    %p188 = pnand %p186, %p187
    %p189 = pneg %p188
    // Predicated region
    $region37: #{basic_block_forward.1} parent=5 // pred_check
      _
    $region38: #{basic_block_forward.1} parent=5 // pred_check_branch
      %191 = sbr.rel (%p188) target = $region40
    $region39: #{basic_block_forward.1} parent=5 // pred_region
      %s192 = ssub.s32 %s11, 1
      %p193 = scmp.lt.s32.totalorder %s16, 1
      %s194 = scalar_select %p193, %s16, 1
      %s195 = smul.addr %s194, 2
      %s196 = smul.addr %s195, 4
      %s197 = scalar_lea.vmem %s0, %s196
      %p198 = pneg %p37
      %p199 = pneg %p34
      %p200 = pneg %p58
      %p201 = pneg %p55
      %p202 = pneg %p79
      %p203 = pneg %p76
      %p204 = pneg %p100
      %p205 = pneg %p97
      %p206 = pneg %p121
      %p207 = pneg %p118
      %p208 = pneg %p147
      %p209 = pneg %p144
      %p210 = scmp.lt.s32.totalorder %s16, 1
      %s211 = scalar_select %p210, %s16, 1
      %s212 = smul.addr %s211, 2
      %s213 = smul.addr %s212, 4
      %s214 = scalar_lea.vmem %s5, %s213
      %p215 = scmp.lt.s32.totalorder %s16, 1
      %s216 = scalar_select %p215, %s16, 1
      %s217 = smul.addr %s216, 2
      %s218 = smul.addr %s217, 4
      %s219 = scalar_lea.vmem %s0, %s218
      %p220 = scmp.lt.s32.totalorder %s16, 1
      %s221 = scalar_select %p220, %s16, 1
      %s222 = smul.addr %s221, 2
      %s223 = smul.addr %s222, 4
      %s224 = scalar_lea.vmem %s5, %s223
      %vm226 = vcmask 139264
      %vm227 = vsmask.f32 256
      %vm228 = vmand %vm226, %vm227
      %v229 = vld [vmem:[#allocation2] sm:$0x1]
      %v230 = vsel %vm228, 0, %v229
      %231 = vst [vmem:[#allocation2] sm:$0x1] %v230
      %v232 = vld [vmem:[#allocation2 + $0xc] sm:$0x1]
      %v233 = vsel %vm228, 0, %v232
      %234 = vst [vmem:[#allocation2 + $0xc] sm:$0x1] %v233
      %v235 = vld [vmem:[#allocation2 + $0x18] sm:$0x1]
      %v236 = vsel %vm228, 0, %v235
      %237 = vst [vmem:[#allocation2 + $0x18] sm:$0x1] %v236
      %v238 = vld [vmem:[#allocation2 + $0x24] sm:$0x1]
      %v239 = vsel %vm228, 0, %v238
      %240 = vst [vmem:[#allocation2 + $0x24] sm:$0x1] %v239
      %vm241 = vsmask.f32 7938
      %vm242 = vmand %vm226, %vm241
      %v243 = vld [vmem:[#allocation2 + $0x8] sm:$0x1]
      %v244 = vsel %vm242, 0, %v243
      %245 = vst [vmem:[#allocation2 + $0x8] sm:$0x1] %v244
      %v246 = vld [vmem:[#allocation2 + $0x14] sm:$0x1]
      %v247 = vsel %vm242, 0, %v246
      %248 = vst [vmem:[#allocation2 + $0x14] sm:$0x1] %v247
      %v249 = vld [vmem:[#allocation2 + $0x20] sm:$0x1]
      %v250 = vsel %vm242, 0, %v249
      %251 = vst [vmem:[#allocation2 + $0x20] sm:$0x1] %v250
      %v252 = vld [vmem:[#allocation2 + $0x2c] sm:$0x1]
      %v253 = vsel %vm242, 0, %v252
      %254 = vst [vmem:[#allocation2 + $0x2c] sm:$0x1] %v253
      %vm255 = vcmask 3072
      %256 = vst.msk [vmem:[#allocation2] sm:$0xf] %vm255, 0
      %257 = vst.msk [vmem:[#allocation2 + $0x4] sm:$0xf] %vm255, 0
      %vm258 = vcmask 0
      %259 = vst.msk [vmem:[#allocation2 + $0x8] sm:$0x1] %vm258, 0
      %260 = vst.msk [vmem:[#allocation2 + $0xc] sm:$0xf] %vm255, 0
      %261 = vst.msk [vmem:[#allocation2 + $0x10] sm:$0xf] %vm255, 0
      %262 = vst.msk [vmem:[#allocation2 + $0x14] sm:$0x1] %vm258, 0
      %263 = vst.msk [vmem:[#allocation2 + $0x18] sm:$0xf] %vm255, 0
      %264 = vst.msk [vmem:[#allocation2 + $0x1c] sm:$0xf] %vm255, 0
      %265 = vst.msk [vmem:[#allocation2 + $0x20] sm:$0x1] %vm258, 0
      %266 = vst.msk [vmem:[#allocation2 + $0x24] sm:$0xf] %vm255, 0
      %267 = vst.msk [vmem:[#allocation2 + $0x28] sm:$0xf] %vm255, 0
      %268 = vst.msk [vmem:[#allocation2 + $0x2c] sm:$0x1] %vm258, 0
      %vm269 = vcmask 142472
      %270 = vst.msk [vmem:[#allocation2] sm:$0xf] %vm269, 0
      %271 = vst.msk [vmem:[#allocation2 + $0x4] sm:$0xf] %vm269, 0
      %vm272 = vcmask 139400
      %273 = vst.msk [vmem:[#allocation2 + $0x8] sm:$0x1] %vm272, 0
      %274 = vst.msk [vmem:[#allocation2 + $0xc] sm:$0xf] %vm269, 0
      %275 = vst.msk [vmem:[#allocation2 + $0x10] sm:$0xf] %vm269, 0
      %276 = vst.msk [vmem:[#allocation2 + $0x14] sm:$0x1] %vm272, 0
      %277 = vst.msk [vmem:[#allocation2 + $0x18] sm:$0xf] %vm269, 0
      %278 = vst.msk [vmem:[#allocation2 + $0x1c] sm:$0xf] %vm269, 0
      %279 = vst.msk [vmem:[#allocation2 + $0x20] sm:$0x1] %vm272, 0
      %280 = vst.msk [vmem:[#allocation2 + $0x24] sm:$0xf] %vm269, 0
      %281 = vst.msk [vmem:[#allocation2 + $0x28] sm:$0xf] %vm269, 0
      %282 = vst.msk [vmem:[#allocation2 + $0x2c] sm:$0x1] %vm272, 0
      %v283 = vld [vmem:[%s219] sm:$0xff]
      %v285 = vcombine.high %v283, %v283
      %v287 = vpack.c.bf16 %v283, %v283
      %v288 = vpack.c.bf16 %v285, %v285
      %290 = vrot.lane.b32.xlu0 %v287, 112
      %v291 = vpop.permute.xlu0 %290
      %293 = vrot.lane.b32.xlu0 %v287, 96
      %v294 = vpop.permute.xlu0 %293
      %296 = vrot.lane.b32.xlu0 %v287, 80
      %v297 = vpop.permute.xlu0 %296
      %299 = vrot.lane.b32.xlu0 %v287, 64
      %v300 = vpop.permute.xlu0 %299
      %302 = vrot.lane.b32.xlu0 %v287, 48
      %v303 = vpop.permute.xlu0 %302
      %305 = vrot.lane.b32.xlu0 %v287, 32
      %v306 = vpop.permute.xlu0 %305
      %308 = vrot.lane.b32.xlu0 %v287, 16
      %v309 = vpop.permute.xlu0 %308
      %312 = vrot.lane.b32.xlu0 %v288, 112
      %v313 = vpop.permute.xlu0 %312
      %315 = vrot.lane.b32.xlu0 %v288, 96
      %v316 = vpop.permute.xlu0 %315
      %318 = vrot.lane.b32.xlu0 %v288, 80
      %v319 = vpop.permute.xlu0 %318
      %321 = vrot.lane.b32.xlu0 %v288, 64
      %v322 = vpop.permute.xlu0 %321
      %324 = vrot.lane.b32.xlu0 %v288, 48
      %v325 = vpop.permute.xlu0 %324
      %327 = vrot.lane.b32.xlu0 %v288, 32
      %v328 = vpop.permute.xlu0 %327
      %330 = vrot.lane.b32.xlu0 %v288, 16
      %v331 = vpop.permute.xlu0 %330
      %v333 = vcombine.low %v287, %v300
      %v335 = vunpack.c.l.s4 1983009808
      %v336 = vunpack.c.0.s8 %v335
      %v337 = vlaneseq
      %v338 = vshrl.u32 %v337, 7
      %v339 = vsub.s32 %v336, %v338
      %v340 = vrot.slane %v333, %v339
      %v341 = vcombine.low %v294, %v306
      %v343 = vunpack.c.l.s4 1983009808
      %v344 = vunpack.c.0.s8 %v343
      %v345 = vlaneseq
      %v346 = vshrl.u32 %v345, 7
      %v347 = vsub.s32 %v344, %v346
      %v348 = vrot.slane %v341, %v347
      %v349 = vcombine.low %v288, %v322
      %v351 = vunpack.c.l.s4 1983009808
      %v352 = vunpack.c.0.s8 %v351
      %v353 = vlaneseq
      %v354 = vshrl.u32 %v353, 7
      %v355 = vsub.s32 %v352, %v354
      %v356 = vrot.slane %v349, %v355
      %v357 = vcombine.low %v316, %v328
      %v359 = vunpack.c.l.s4 1983009808
      %v360 = vunpack.c.0.s8 %v359
      %v361 = vlaneseq
      %v362 = vshrl.u32 %v361, 7
      %v363 = vsub.s32 %v360, %v362
      %v364 = vrot.slane %v357, %v363
      %v365 = vcombine.low %v340, %v348
      %v367 = vunpack.c.l.s4 1934713408
      %v368 = vunpack.c.0.s8 %v367
      %v369 = vlaneseq
      %v370 = vshrl.u32 %v369, 7
      %v371 = vsub.s32 %v368, %v370
      %v372 = vrot.slane %v365, %v371
      %v373 = vcombine.low %v356, %v364
      %v375 = vunpack.c.l.s4 1934713408
      %v376 = vunpack.c.0.s8 %v375
      %v377 = vlaneseq
      %v378 = vshrl.u32 %v377, 7
      %v379 = vsub.s32 %v376, %v378
      %v380 = vrot.slane %v373, %v379
      %v381 = vcombine.low %v372, %v380
      %v382 = vcombine.high %v372, %v380
      %v383 = vcombine.low %v291, %v303
      %v385 = vunpack.c.l.s4 1983009808
      %v386 = vunpack.c.0.s8 %v385
      %v387 = vlaneseq
      %v388 = vshrl.u32 %v387, 7
      %v389 = vsub.s32 %v386, %v388
      %v390 = vrot.slane %v383, %v389
      %v391 = vcombine.low %v297, %v309
      %v393 = vunpack.c.l.s4 1983009808
      %v394 = vunpack.c.0.s8 %v393
      %v395 = vlaneseq
      %v396 = vshrl.u32 %v395, 7
      %v397 = vsub.s32 %v394, %v396
      %v398 = vrot.slane %v391, %v397
      %v399 = vcombine.low %v313, %v325
      %v401 = vunpack.c.l.s4 1983009808
      %v402 = vunpack.c.0.s8 %v401
      %v403 = vlaneseq
      %v404 = vshrl.u32 %v403, 7
      %v405 = vsub.s32 %v402, %v404
      %v406 = vrot.slane %v399, %v405
      %v407 = vcombine.low %v319, %v331
      %v409 = vunpack.c.l.s4 1983009808
      %v410 = vunpack.c.0.s8 %v409
      %v411 = vlaneseq
      %v412 = vshrl.u32 %v411, 7
      %v413 = vsub.s32 %v410, %v412
      %v414 = vrot.slane %v407, %v413
      %v415 = vcombine.low %v390, %v398
      %v417 = vunpack.c.l.s4 1934713408
      %v418 = vunpack.c.0.s8 %v417
      %v419 = vlaneseq
      %v420 = vshrl.u32 %v419, 7
      %v421 = vsub.s32 %v418, %v420
      %v422 = vrot.slane %v415, %v421
      %v423 = vcombine.low %v406, %v414
      %v425 = vunpack.c.l.s4 1934713408
      %v426 = vunpack.c.0.s8 %v425
      %v427 = vlaneseq
      %v428 = vshrl.u32 %v427, 7
      %v429 = vsub.s32 %v426, %v428
      %v430 = vrot.slane %v423, %v429
      %v431 = vcombine.low %v422, %v430
      %v432 = vcombine.high %v422, %v430
      %v435 = vpack.i.b16 %v431, %v381
      %v436 = vshrl.u32 %v381, 16
      %v437 = vshrl.u32 %v431, 16
      %v438 = vpack.i.b16 %v437, %v436
      %v441 = vpack.i.b16 %v432, %v382
      %v442 = vshrl.u32 %v382, 16
      %v443 = vshrl.u32 %v432, 16
      %v444 = vpack.i.b16 %v443, %v442
      %v445 = vunpack.c.l.b16 %v435
      %v446 = vunpack.c.h.b16 %v435
      %v447 = vunpack.c.l.b16 %v438
      %v448 = vunpack.c.h.b16 %v438
      %v449 = vunpack.c.l.b16 %v441
      %v450 = vunpack.c.h.b16 %v441
      %v451 = vunpack.c.l.b16 %v444
      %v452 = vunpack.c.h.b16 %v444
      %v453 = vpack.c.b16 %v445, %v445
      %v454 = vpack.c.b16 %v446, %v446
      %v455 = vpack.c.b16 %v447, %v447
      %v456 = vpack.c.b16 %v448, %v448
      %v457 = vpack.c.b16 %v449, %v449
      %v458 = vpack.c.b16 %v450, %v450
      %v459 = vpack.c.b16 %v451, %v451
      %v460 = vpack.c.b16 %v452, %v452
      %vm461 = vsmask.f32 4368
      %vm462 = vmor %vm227, %vm461
      %v464 = vshrl.u32 %v453, 16
      %v466 = vrot.slane %v464, 7
      %v467 = vshll.u32 %v453, 16
      %v469 = vor.u32 %v466, %v467
      %v470 = vrot.slane %v466, 4
      %v472 = vshrl.u32 %v454, 16
      %v474 = vrot.slane %v472, 7
      %v475 = vshll.u32 %v454, 16
      %v477 = vor.u32 %v474, %v475
      %v478 = vsel %vm462, %v470, %v477
      %v479 = vrot.slane %v474, 4
      %v481 = vshrl.u32 %v455, 16
      %v483 = vrot.slane %v481, 7
      %v484 = vshll.u32 %v455, 16
      %v486 = vor.u32 %v483, %v484
      %v487 = vrot.slane %v483, 4
      %v489 = vshrl.u32 %v456, 16
      %v491 = vrot.slane %v489, 7
      %v492 = vshll.u32 %v456, 16
      %v494 = vor.u32 %v491, %v492
      %v495 = vsel %vm462, %v487, %v494
      %v496 = vrot.slane %v491, 4
      %v498 = vshrl.u32 %v457, 16
      %v500 = vrot.slane %v498, 7
      %v501 = vshll.u32 %v457, 16
      %v503 = vor.u32 %v500, %v501
      %v504 = vrot.slane %v500, 4
      %v506 = vshrl.u32 %v458, 16
      %v508 = vrot.slane %v506, 7
      %v509 = vshll.u32 %v458, 16
      %v511 = vor.u32 %v508, %v509
      %v512 = vsel %vm462, %v504, %v511
      %v513 = vrot.slane %v508, 4
      %v515 = vshrl.u32 %v459, 16
      %v517 = vrot.slane %v515, 7
      %v518 = vshll.u32 %v459, 16
      %v520 = vor.u32 %v517, %v518
      %v521 = vrot.slane %v517, 4
      %v523 = vshrl.u32 %v460, 16
      %v525 = vrot.slane %v523, 7
      %v526 = vshll.u32 %v460, 16
      %v528 = vor.u32 %v525, %v526
      %v529 = vsel %vm462, %v521, %v528
      %v530 = vrot.slane %v525, 4
      %531 = vrot.lane.b32.xlu0 %v469, 1
      %v532 = vpop.permute.xlu0 %531
      %533 = vrot.lane.b32.xlu0 %v478, 1
      %v534 = vpop.permute.xlu0 %533
      %535 = vrot.lane.b32.xlu0 %v479, 1
      %v536 = vpop.permute.xlu0 %535
      %537 = vrot.lane.b32.xlu0 %v486, 1
      %v538 = vpop.permute.xlu0 %537
      %539 = vrot.lane.b32.xlu0 %v495, 1
      %v540 = vpop.permute.xlu0 %539
      %541 = vrot.lane.b32.xlu0 %v496, 1
      %v542 = vpop.permute.xlu0 %541
      %543 = vrot.lane.b32.xlu0 %v503, 1
      %v544 = vpop.permute.xlu0 %543
      %545 = vrot.lane.b32.xlu0 %v512, 1
      %v546 = vpop.permute.xlu0 %545
      %547 = vrot.lane.b32.xlu0 %v513, 1
      %v548 = vpop.permute.xlu0 %547
      %549 = vrot.lane.b32.xlu0 %v520, 1
      %v550 = vpop.permute.xlu0 %549
      %551 = vrot.lane.b32.xlu0 %v529, 1
      %v552 = vpop.permute.xlu0 %551
      %553 = vrot.lane.b32.xlu0 %v530, 1
      %v554 = vpop.permute.xlu0 %553
      %vm567 = vcmask 134152
      %vm568 = vmand %vm567, %vm241
      %v569 = vld [vmem:[#allocation2] sm:$0xf]
      %v570 = vsel %vm568, %v532, %v569
      %571 = vst [vmem:[#allocation2] sm:$0xf] %v570
      %vm572 = vcmask 134152
      %573 = vst.msk [vmem:[#allocation2 + $0x4] sm:$0xf] %vm572, %v534
      %vm574 = vcmask 131080
      %vm575 = vmand %vm574, %vm227
      %v576 = vld [vmem:[#allocation2 + $0x8] sm:$0x1]
      %v577 = vsel %vm575, %v536, %v576
      %578 = vst [vmem:[#allocation2 + $0x8] sm:$0x1] %v577
      %v579 = vld [vmem:[#allocation2 + $0xc] sm:$0xf]
      %v580 = vsel %vm568, %v538, %v579
      %581 = vst [vmem:[#allocation2 + $0xc] sm:$0xf] %v580
      %582 = vst.msk [vmem:[#allocation2 + $0x10] sm:$0xf] %vm572, %v540
      %v583 = vld [vmem:[#allocation2 + $0x14] sm:$0x1]
      %v584 = vsel %vm575, %v542, %v583
      %585 = vst [vmem:[#allocation2 + $0x14] sm:$0x1] %v584
      %v586 = vld [vmem:[#allocation2 + $0x18] sm:$0xf]
      %v587 = vsel %vm568, %v544, %v586
      %588 = vst [vmem:[#allocation2 + $0x18] sm:$0xf] %v587
      %589 = vst.msk [vmem:[#allocation2 + $0x1c] sm:$0xf] %vm572, %v546
      %v590 = vld [vmem:[#allocation2 + $0x20] sm:$0x1]
      %v591 = vsel %vm575, %v548, %v590
      %592 = vst [vmem:[#allocation2 + $0x20] sm:$0x1] %v591
      %v593 = vld [vmem:[#allocation2 + $0x24] sm:$0xf]
      %v594 = vsel %vm568, %v550, %v593
      %595 = vst [vmem:[#allocation2 + $0x24] sm:$0xf] %v594
      %596 = vst.msk [vmem:[#allocation2 + $0x28] sm:$0xf] %vm572, %v552
      %v597 = vld [vmem:[#allocation2 + $0x2c] sm:$0x1]
      %v598 = vsel %vm575, %v554, %v597
      %599 = vst [vmem:[#allocation2 + $0x2c] sm:$0x1] %v598
      %v600 = vld [vmem:[#allocation2] sm:$0xf]
      %v601 = vld [vmem:[#allocation2 + $0x4] sm:$0xf]
      %v602 = vld [vmem:[#allocation2 + $0xc] sm:$0xf]
      %v603 = vld [vmem:[#allocation2 + $0x10] sm:$0xf]
      %v604 = vld [vmem:[#allocation2 + $0x18] sm:$0xf]
      %v605 = vld [vmem:[#allocation2 + $0x1c] sm:$0xf]
      %v606 = vld [vmem:[#allocation2 + $0x24] sm:$0xf]
      %v607 = vld [vmem:[#allocation2 + $0x28] sm:$0xf]
      %v610 = vpack.i.b16 %v602, %v600
      %v611 = vshrl.u32 %v600, 16
      %v612 = vshrl.u32 %v602, 16
      %v613 = vpack.i.b16 %v612, %v611
      %v616 = vpack.i.b16 %v606, %v604
      %v617 = vshrl.u32 %v604, 16
      %v618 = vshrl.u32 %v606, 16
      %v619 = vpack.i.b16 %v618, %v617
      %v622 = vpack.i.b16 %v603, %v601
      %v623 = vshrl.u32 %v601, 16
      %v624 = vshrl.u32 %v603, 16
      %v625 = vpack.i.b16 %v624, %v623
      %v628 = vpack.i.b16 %v607, %v605
      %v629 = vshrl.u32 %v605, 16
      %v630 = vshrl.u32 %v607, 16
      %v631 = vpack.i.b16 %v630, %v629
      %v634 = vunpack.c.l.s4 1983009808
      %v635 = vunpack.c.0.s8 %v634
      %v636 = vlaneseq
      %v637 = vshrl.u32 %v636, 7
      %v638 = vsub.s32 %v635, %v637
      %v639 = vrot.slane %v610, %v638
      %v642 = vunpack.c.l.s4 1983009808
      %v643 = vunpack.c.0.s8 %v642
      %v644 = vlaneseq
      %v645 = vshrl.u32 %v644, 7
      %v646 = vsub.s32 %v643, %v645
      %v647 = vrot.slane %v616, %v646
      %v648 = vcombine.low %v639, %v647
      %v649 = vcombine.high %v639, %v647
      %v651 = vunpack.c.l.s4 1934713408
      %v652 = vunpack.c.0.s8 %v651
      %v653 = vlaneseq
      %v654 = vshrl.u32 %v653, 7
      %v655 = vsub.s32 %v652, %v654
      %v656 = vrot.slane %v648, %v655
      %v658 = vunpack.c.l.s4 1934713408
      %v659 = vunpack.c.0.s8 %v658
      %v660 = vlaneseq
      %v661 = vshrl.u32 %v660, 7
      %v662 = vsub.s32 %v659, %v661
      %v663 = vrot.slane %v649, %v662
      %v664 = vcombine.high %v656, 0
      %v665 = vcombine.high %v663, 0
      %v668 = vunpack.c.l.s4 1983009808
      %v669 = vunpack.c.0.s8 %v668
      %v670 = vlaneseq
      %v671 = vshrl.u32 %v670, 7
      %v672 = vsub.s32 %v669, %v671
      %v673 = vrot.slane %v613, %v672
      %v676 = vunpack.c.l.s4 1983009808
      %v677 = vunpack.c.0.s8 %v676
      %v678 = vlaneseq
      %v679 = vshrl.u32 %v678, 7
      %v680 = vsub.s32 %v677, %v679
      %v681 = vrot.slane %v619, %v680
      %v682 = vcombine.low %v673, %v681
      %v683 = vcombine.high %v673, %v681
      %v685 = vunpack.c.l.s4 1934713408
      %v686 = vunpack.c.0.s8 %v685
      %v687 = vlaneseq
      %v688 = vshrl.u32 %v687, 7
      %v689 = vsub.s32 %v686, %v688
      %v690 = vrot.slane %v682, %v689
      %v692 = vunpack.c.l.s4 1934713408
      %v693 = vunpack.c.0.s8 %v692
      %v694 = vlaneseq
      %v695 = vshrl.u32 %v694, 7
      %v696 = vsub.s32 %v693, %v695
      %v697 = vrot.slane %v683, %v696
      %v698 = vcombine.high %v690, 0
      %v699 = vcombine.high %v697, 0
      %v702 = vunpack.c.l.s4 1983009808
      %v703 = vunpack.c.0.s8 %v702
      %v704 = vlaneseq
      %v705 = vshrl.u32 %v704, 7
      %v706 = vsub.s32 %v703, %v705
      %v707 = vrot.slane %v622, %v706
      %v710 = vunpack.c.l.s4 1983009808
      %v711 = vunpack.c.0.s8 %v710
      %v712 = vlaneseq
      %v713 = vshrl.u32 %v712, 7
      %v714 = vsub.s32 %v711, %v713
      %v715 = vrot.slane %v628, %v714
      %v716 = vcombine.low %v707, %v715
      %v717 = vcombine.high %v707, %v715
      %v719 = vunpack.c.l.s4 1934713408
      %v720 = vunpack.c.0.s8 %v719
      %v721 = vlaneseq
      %v722 = vshrl.u32 %v721, 7
      %v723 = vsub.s32 %v720, %v722
      %v724 = vrot.slane %v716, %v723
      %v726 = vunpack.c.l.s4 1934713408
      %v727 = vunpack.c.0.s8 %v726
      %v728 = vlaneseq
      %v729 = vshrl.u32 %v728, 7
      %v730 = vsub.s32 %v727, %v729
      %v731 = vrot.slane %v717, %v730
      %v732 = vcombine.high %v724, 0
      %v733 = vcombine.high %v731, 0
      %v736 = vunpack.c.l.s4 1983009808
      %v737 = vunpack.c.0.s8 %v736
      %v738 = vlaneseq
      %v739 = vshrl.u32 %v738, 7
      %v740 = vsub.s32 %v737, %v739
      %v741 = vrot.slane %v625, %v740
      %v744 = vunpack.c.l.s4 1983009808
      %v745 = vunpack.c.0.s8 %v744
      %v746 = vlaneseq
      %v747 = vshrl.u32 %v746, 7
      %v748 = vsub.s32 %v745, %v747
      %v749 = vrot.slane %v631, %v748
      %v750 = vcombine.low %v741, %v749
      %v751 = vcombine.high %v741, %v749
      %v753 = vunpack.c.l.s4 1934713408
      %v754 = vunpack.c.0.s8 %v753
      %v755 = vlaneseq
      %v756 = vshrl.u32 %v755, 7
      %v757 = vsub.s32 %v754, %v756
      %v758 = vrot.slane %v750, %v757
      %v760 = vunpack.c.l.s4 1934713408
      %v761 = vunpack.c.0.s8 %v760
      %v762 = vlaneseq
      %v763 = vshrl.u32 %v762, 7
      %v764 = vsub.s32 %v761, %v763
      %v765 = vrot.slane %v751, %v764
      %v766 = vcombine.high %v758, 0
      %v767 = vcombine.high %v765, 0
      %v769 = vunpack.c.l.b16 %v690
      %v770 = vpack.c.b16 %v769, %v769
      %771 = vrot.lane.b32.xlu0 %v770, 16
      %v772 = vpop.permute.xlu0 %771
      %v774 = vunpack.c.l.b16 %v664
      %v775 = vpack.c.b16 %v774, %v774
      %776 = vrot.lane.b32.xlu0 %v775, 32
      %v777 = vpop.permute.xlu0 %776
      %v779 = vunpack.c.l.b16 %v698
      %v780 = vpack.c.b16 %v779, %v779
      %781 = vrot.lane.b32.xlu0 %v780, 48
      %v782 = vpop.permute.xlu0 %781
      %v784 = vunpack.c.l.b16 %v663
      %v785 = vpack.c.b16 %v784, %v784
      %786 = vrot.lane.b32.xlu0 %v785, 64
      %v787 = vpop.permute.xlu0 %786
      %v789 = vunpack.c.l.b16 %v697
      %v790 = vpack.c.b16 %v789, %v789
      %791 = vrot.lane.b32.xlu0 %v790, 80
      %v792 = vpop.permute.xlu0 %791
      %v794 = vunpack.c.l.b16 %v665
      %v795 = vpack.c.b16 %v794, %v794
      %796 = vrot.lane.b32.xlu0 %v795, 96
      %v797 = vpop.permute.xlu0 %796
      %v799 = vunpack.c.l.b16 %v699
      %v800 = vpack.c.b16 %v799, %v799
      %801 = vrot.lane.b32.xlu0 %v800, 112
      %v802 = vpop.permute.xlu0 %801
      %v804 = vunpack.c.l.b16 %v758
      %v805 = vpack.c.b16 %v804, %v804
      %806 = vrot.lane.b32.xlu0 %v805, 16
      %v807 = vpop.permute.xlu0 %806
      %v809 = vunpack.c.l.b16 %v732
      %v810 = vpack.c.b16 %v809, %v809
      %811 = vrot.lane.b32.xlu0 %v810, 32
      %v812 = vpop.permute.xlu0 %811
      %v814 = vunpack.c.l.b16 %v766
      %v815 = vpack.c.b16 %v814, %v814
      %816 = vrot.lane.b32.xlu0 %v815, 48
      %v817 = vpop.permute.xlu0 %816
      %v819 = vunpack.c.l.b16 %v731
      %v820 = vpack.c.b16 %v819, %v819
      %821 = vrot.lane.b32.xlu0 %v820, 64
      %v822 = vpop.permute.xlu0 %821
      %v824 = vunpack.c.l.b16 %v765
      %v825 = vpack.c.b16 %v824, %v824
      %826 = vrot.lane.b32.xlu0 %v825, 80
      %v827 = vpop.permute.xlu0 %826
      %v829 = vunpack.c.l.b16 %v733
      %v830 = vpack.c.b16 %v829, %v829
      %831 = vrot.lane.b32.xlu0 %v830, 96
      %v832 = vpop.permute.xlu0 %831
      %v834 = vunpack.c.l.b16 %v767
      %v835 = vpack.c.b16 %v834, %v834
      %836 = vrot.lane.b32.xlu0 %v835, 112
      %v837 = vpop.permute.xlu0 %836
      %vm838 = vcmask 130048
      %v841 = vsel %vm838, %v656, %v772
      %vm842 = vcmask 261120
      %v844 = vsel %vm842, %v841, %v777
      %vm845 = vcmask 392192
      %v847 = vsel %vm845, %v844, %v782
      %vm848 = vcmask 523264
      %v850 = vsel %vm848, %v847, %v787
      %vm851 = vcmask 654336
      %v853 = vsel %vm851, %v850, %v792
      %vm854 = vcmask 785408
      %v856 = vsel %vm854, %v853, %v797
      %vm857 = vcmask 916480
      %v859 = vsel %vm857, %v856, %v802
      %v862 = vsel %vm838, %v724, %v807
      %v864 = vsel %vm842, %v862, %v812
      %v866 = vsel %vm845, %v864, %v817
      %v868 = vsel %vm848, %v866, %v822
      %v870 = vsel %vm851, %v868, %v827
      %v872 = vsel %vm854, %v870, %v832
      %v874 = vsel %vm857, %v872, %v837
      %v875 = vld [vmem:[%s1] sm:$0x3]
      %884 = vrot.lane.b32.xlu0 %v600, 127
      %v885 = vpop.permute.xlu0 %884
      %886 = vrot.lane.b32.xlu0 %v601, 127
      %v887 = vpop.permute.xlu0 %886
      %888 = vrot.lane.b32.xlu0 %v602, 127
      %v889 = vpop.permute.xlu0 %888
      %890 = vrot.lane.b32.xlu0 %v603, 127
      %v891 = vpop.permute.xlu0 %890
      %892 = vrot.lane.b32.xlu0 %v604, 127
      %v893 = vpop.permute.xlu0 %892
      %894 = vrot.lane.b32.xlu0 %v605, 127
      %v895 = vpop.permute.xlu0 %894
      %896 = vrot.lane.b32.xlu0 %v606, 127
      %v897 = vpop.permute.xlu0 %896
      %898 = vrot.lane.b32.xlu0 %v607, 127
      %v899 = vpop.permute.xlu0 %898
      %v902 = vpack.i.b16 %v889, %v885
      %v903 = vshrl.u32 %v885, 16
      %v904 = vshrl.u32 %v889, 16
      %v905 = vpack.i.b16 %v904, %v903
      %v908 = vpack.i.b16 %v897, %v893
      %v909 = vshrl.u32 %v893, 16
      %v910 = vshrl.u32 %v897, 16
      %v911 = vpack.i.b16 %v910, %v909
      %v914 = vpack.i.b16 %v891, %v887
      %v915 = vshrl.u32 %v887, 16
      %v916 = vshrl.u32 %v891, 16
      %v917 = vpack.i.b16 %v916, %v915
      %v920 = vpack.i.b16 %v899, %v895
      %v921 = vshrl.u32 %v895, 16
      %v922 = vshrl.u32 %v899, 16
      %v923 = vpack.i.b16 %v922, %v921
      %v926 = vunpack.c.l.s4 1983009808
      %v927 = vunpack.c.0.s8 %v926
      %v928 = vlaneseq
      %v929 = vshrl.u32 %v928, 7
      %v930 = vsub.s32 %v927, %v929
      %v931 = vrot.slane %v902, %v930
      %v934 = vunpack.c.l.s4 1983009808
      %v935 = vunpack.c.0.s8 %v934
      %v936 = vlaneseq
      %v937 = vshrl.u32 %v936, 7
      %v938 = vsub.s32 %v935, %v937
      %v939 = vrot.slane %v908, %v938
      %v940 = vcombine.low %v931, %v939
      %v941 = vcombine.high %v931, %v939
      %v943 = vunpack.c.l.s4 1934713408
      %v944 = vunpack.c.0.s8 %v943
      %v945 = vlaneseq
      %v946 = vshrl.u32 %v945, 7
      %v947 = vsub.s32 %v944, %v946
      %v948 = vrot.slane %v940, %v947
      %v950 = vunpack.c.l.s4 1934713408
      %v951 = vunpack.c.0.s8 %v950
      %v952 = vlaneseq
      %v953 = vshrl.u32 %v952, 7
      %v954 = vsub.s32 %v951, %v953
      %v955 = vrot.slane %v941, %v954
      %v956 = vcombine.high %v948, 0
      %v957 = vcombine.high %v955, 0
      %v960 = vunpack.c.l.s4 1983009808
      %v961 = vunpack.c.0.s8 %v960
      %v962 = vlaneseq
      %v963 = vshrl.u32 %v962, 7
      %v964 = vsub.s32 %v961, %v963
      %v965 = vrot.slane %v905, %v964
      %v968 = vunpack.c.l.s4 1983009808
      %v969 = vunpack.c.0.s8 %v968
      %v970 = vlaneseq
      %v971 = vshrl.u32 %v970, 7
      %v972 = vsub.s32 %v969, %v971
      %v973 = vrot.slane %v911, %v972
      %v974 = vcombine.low %v965, %v973
      %v975 = vcombine.high %v965, %v973
      %v977 = vunpack.c.l.s4 1934713408
      %v978 = vunpack.c.0.s8 %v977
      %v979 = vlaneseq
      %v980 = vshrl.u32 %v979, 7
      %v981 = vsub.s32 %v978, %v980
      %v982 = vrot.slane %v974, %v981
      %v984 = vunpack.c.l.s4 1934713408
      %v985 = vunpack.c.0.s8 %v984
      %v986 = vlaneseq
      %v987 = vshrl.u32 %v986, 7
      %v988 = vsub.s32 %v985, %v987
      %v989 = vrot.slane %v975, %v988
      %v990 = vcombine.high %v982, 0
      %v991 = vcombine.high %v989, 0
      %v994 = vunpack.c.l.s4 1983009808
      %v995 = vunpack.c.0.s8 %v994
      %v996 = vlaneseq
      %v997 = vshrl.u32 %v996, 7
      %v998 = vsub.s32 %v995, %v997
      %v999 = vrot.slane %v914, %v998
      %v1002 = vunpack.c.l.s4 1983009808
      %v1003 = vunpack.c.0.s8 %v1002
      %v1004 = vlaneseq
      %v1005 = vshrl.u32 %v1004, 7
      %v1006 = vsub.s32 %v1003, %v1005
      %v1007 = vrot.slane %v920, %v1006
      %v1008 = vcombine.low %v999, %v1007
      %v1009 = vcombine.high %v999, %v1007
      %v1011 = vunpack.c.l.s4 1934713408
      %v1012 = vunpack.c.0.s8 %v1011
      %v1013 = vlaneseq
      %v1014 = vshrl.u32 %v1013, 7
      %v1015 = vsub.s32 %v1012, %v1014
      %v1016 = vrot.slane %v1008, %v1015
      %v1018 = vunpack.c.l.s4 1934713408
      %v1019 = vunpack.c.0.s8 %v1018
      %v1020 = vlaneseq
      %v1021 = vshrl.u32 %v1020, 7
      %v1022 = vsub.s32 %v1019, %v1021
      %v1023 = vrot.slane %v1009, %v1022
      %v1024 = vcombine.high %v1016, 0
      %v1025 = vcombine.high %v1023, 0
      %v1028 = vunpack.c.l.s4 1983009808
      %v1029 = vunpack.c.0.s8 %v1028
      %v1030 = vlaneseq
      %v1031 = vshrl.u32 %v1030, 7
      %v1032 = vsub.s32 %v1029, %v1031
      %v1033 = vrot.slane %v917, %v1032
      %v1036 = vunpack.c.l.s4 1983009808
      %v1037 = vunpack.c.0.s8 %v1036
      %v1038 = vlaneseq
      %v1039 = vshrl.u32 %v1038, 7
      %v1040 = vsub.s32 %v1037, %v1039
      %v1041 = vrot.slane %v923, %v1040
      %v1042 = vcombine.low %v1033, %v1041
      %v1043 = vcombine.high %v1033, %v1041
      %v1045 = vunpack.c.l.s4 1934713408
      %v1046 = vunpack.c.0.s8 %v1045
      %v1047 = vlaneseq
      %v1048 = vshrl.u32 %v1047, 7
      %v1049 = vsub.s32 %v1046, %v1048
      %v1050 = vrot.slane %v1042, %v1049
      %v1052 = vunpack.c.l.s4 1934713408
      %v1053 = vunpack.c.0.s8 %v1052
      %v1054 = vlaneseq
      %v1055 = vshrl.u32 %v1054, 7
      %v1056 = vsub.s32 %v1053, %v1055
      %v1057 = vrot.slane %v1043, %v1056
      %v1058 = vcombine.high %v1050, 0
      %v1059 = vcombine.high %v1057, 0
      %v1061 = vunpack.c.l.b16 %v982
      %v1062 = vpack.c.b16 %v1061, %v1061
      %1063 = vrot.lane.b32.xlu0 %v1062, 16
      %v1064 = vpop.permute.xlu0 %1063
      %v1066 = vunpack.c.l.b16 %v956
      %v1067 = vpack.c.b16 %v1066, %v1066
      %1068 = vrot.lane.b32.xlu0 %v1067, 32
      %v1069 = vpop.permute.xlu0 %1068
      %v1071 = vunpack.c.l.b16 %v990
      %v1072 = vpack.c.b16 %v1071, %v1071
      %1073 = vrot.lane.b32.xlu0 %v1072, 48
      %v1074 = vpop.permute.xlu0 %1073
      %v1076 = vunpack.c.l.b16 %v955
      %v1077 = vpack.c.b16 %v1076, %v1076
      %1078 = vrot.lane.b32.xlu0 %v1077, 64
      %v1079 = vpop.permute.xlu0 %1078
      %v1081 = vunpack.c.l.b16 %v989
      %v1082 = vpack.c.b16 %v1081, %v1081
      %1083 = vrot.lane.b32.xlu0 %v1082, 80
      %v1084 = vpop.permute.xlu0 %1083
      %v1086 = vunpack.c.l.b16 %v957
      %v1087 = vpack.c.b16 %v1086, %v1086
      %1088 = vrot.lane.b32.xlu0 %v1087, 96
      %v1089 = vpop.permute.xlu0 %1088
      %v1091 = vunpack.c.l.b16 %v991
      %v1092 = vpack.c.b16 %v1091, %v1091
      %1093 = vrot.lane.b32.xlu0 %v1092, 112
      %v1094 = vpop.permute.xlu0 %1093
      %v1096 = vunpack.c.l.b16 %v1050
      %v1097 = vpack.c.b16 %v1096, %v1096
      %1098 = vrot.lane.b32.xlu0 %v1097, 16
      %v1099 = vpop.permute.xlu0 %1098
      %v1101 = vunpack.c.l.b16 %v1024
      %v1102 = vpack.c.b16 %v1101, %v1101
      %1103 = vrot.lane.b32.xlu0 %v1102, 32
      %v1104 = vpop.permute.xlu0 %1103
      %v1106 = vunpack.c.l.b16 %v1058
      %v1107 = vpack.c.b16 %v1106, %v1106
      %1108 = vrot.lane.b32.xlu0 %v1107, 48
      %v1109 = vpop.permute.xlu0 %1108
      %v1111 = vunpack.c.l.b16 %v1023
      %v1112 = vpack.c.b16 %v1111, %v1111
      %1113 = vrot.lane.b32.xlu0 %v1112, 64
      %v1114 = vpop.permute.xlu0 %1113
      %v1116 = vunpack.c.l.b16 %v1057
      %v1117 = vpack.c.b16 %v1116, %v1116
      %1118 = vrot.lane.b32.xlu0 %v1117, 80
      %v1119 = vpop.permute.xlu0 %1118
      %v1121 = vunpack.c.l.b16 %v1025
      %v1122 = vpack.c.b16 %v1121, %v1121
      %1123 = vrot.lane.b32.xlu0 %v1122, 96
      %v1124 = vpop.permute.xlu0 %1123
      %v1126 = vunpack.c.l.b16 %v1059
      %v1127 = vpack.c.b16 %v1126, %v1126
      %1128 = vrot.lane.b32.xlu0 %v1127, 112
      %v1129 = vpop.permute.xlu0 %1128
      %v1132 = vsel %vm838, %v948, %v1064
      %v1134 = vsel %vm842, %v1132, %v1069
      %v1136 = vsel %vm845, %v1134, %v1074
      %v1138 = vsel %vm848, %v1136, %v1079
      %v1140 = vsel %vm851, %v1138, %v1084
      %v1142 = vsel %vm854, %v1140, %v1089
      %v1144 = vsel %vm857, %v1142, %v1094
      %v1147 = vsel %vm838, %v1016, %v1099
      %v1149 = vsel %vm842, %v1147, %v1104
      %v1151 = vsel %vm845, %v1149, %v1109
      %v1153 = vsel %vm848, %v1151, %v1114
      %v1155 = vsel %vm851, %v1153, %v1119
      %v1157 = vsel %vm854, %v1155, %v1124
      %v1159 = vsel %vm857, %v1157, %v1129
      %s1160 = scalar_lea.vmem %s1, 2
      %v1161 = vld [vmem:[%s1160] sm:$0x3]
      %vm1162 = vcmask 31744
      %v1164 = vsel %vm1162, %v1161, 0
      %vm1166 = vcmask 1041408
      %v1167 = vsel %vm1166, %v1144, 0
      %v1169 = vsel %vm1166, %v1159, 0
      %1171 = vmatprep.subr.bf16.mxu0 0
      %1172 = vmatpush1.bf16.msra.mxu0 0
      %1173 = vmatprep.subr.bf16.mxu0 0
      %1174 = vmatpush1.bf16.msra.mxu0 0
      %1175 = vmatprep.subr.bf16.mxu0 0
      %1176 = vmatpush1.bf16.msra.mxu0 0
      %1177 = vmatprep.subr.bf16.mxu0 0
      %1178 = vmatpush1.bf16.msra.mxu0 0
      %1179 = vmatprep.subr.bf16.mxu0 0
      %1180 = vmatpush1.bf16.msra.mxu0 0
      %1181 = vmatprep.subr.bf16.mxu0 0
      %1182 = vmatpush1.bf16.msra.mxu0 0
      %1183 = vmatprep.subr.bf16.mxu0 0
      %1184 = vmatpush1.bf16.msra.mxu0 0
      %1185 = vmatprep.subr.bf16.mxu0 %v1169
      %1186 = vmatpush1.bf16.msra.mxu0 %v1167
      %1187 = vmatprep.subr.bf16.mxu0 0
      %1188 = vmatpush2.bf16.msra.mxu0 0
      %1189 = vmatprep.subr.bf16.mxu0 0
      %1190 = vmatpush2.bf16.msra.mxu0 0
      %1191 = vmatprep.subr.bf16.mxu0 0
      %1192 = vmatpush2.bf16.msra.mxu0 0
      %1193 = vmatprep.subr.bf16.mxu0 0
      %1194 = vmatpush2.bf16.msra.mxu0 0
      %1195 = vmatprep.subr.bf16.mxu0 0
      %1196 = vmatpush2.bf16.msra.mxu0 0
      %1197 = vmatprep.subr.bf16.mxu0 0
      %1198 = vmatpush2.bf16.msra.mxu0 0
      %1199 = vmatprep.subr.bf16.mxu0 0
      %1200 = vmatpush2.bf16.msra.mxu0 0
      %1201 = vmatprep.subr.bf16.mxu0 0
      %1202 = vmatpush2.bf16.msra.mxu0 0
      %1203 = vmatprep.mubr.bf16.mxu0 0
      %1204 = vmatmul.mubr.bf16.gmra.mxu0 %v1164
      %v1205 = vpop.f32.mrf.mxu0
      %v1206 = vadd.f32 0.0, %v1205
      %v1207 = vpop.f32.mrf.mxu0
      %v1208 = vadd.f32 0.0, %v1207
      %v1209 = vpop.f32.mrf.mxu0
      %v1210 = vpop.f32.mrf.mxu0
      %1211 = vdwg.mxu0
      %v1213 = vsel %vm1162, %v875, 0
      %v1215 = vsel %vm1166, %v859, 0
      %v1217 = vsel %vm1166, %v874, 0
      %1219 = vmatprep.subr.bf16.mxu0 0
      %1220 = vmatpush1.bf16.msra.mxu0 0
      %1221 = vmatprep.subr.bf16.mxu0 0
      %1222 = vmatpush1.bf16.msra.mxu0 0
      %1223 = vmatprep.subr.bf16.mxu0 0
      %1224 = vmatpush1.bf16.msra.mxu0 0
      %1225 = vmatprep.subr.bf16.mxu0 0
      %1226 = vmatpush1.bf16.msra.mxu0 0
      %1227 = vmatprep.subr.bf16.mxu0 0
      %1228 = vmatpush1.bf16.msra.mxu0 0
      %1229 = vmatprep.subr.bf16.mxu0 0
      %1230 = vmatpush1.bf16.msra.mxu0 0
      %1231 = vmatprep.subr.bf16.mxu0 0
      %1232 = vmatpush1.bf16.msra.mxu0 0
      %1233 = vmatprep.subr.bf16.mxu0 %v1217
      %1234 = vmatpush1.bf16.msra.mxu0 %v1215
      %1235 = vmatprep.subr.bf16.mxu0 0
      %1236 = vmatpush2.bf16.msra.mxu0 0
      %1237 = vmatprep.subr.bf16.mxu0 0
      %1238 = vmatpush2.bf16.msra.mxu0 0
      %1239 = vmatprep.subr.bf16.mxu0 0
      %1240 = vmatpush2.bf16.msra.mxu0 0
      %1241 = vmatprep.subr.bf16.mxu0 0
      %1242 = vmatpush2.bf16.msra.mxu0 0
      %1243 = vmatprep.subr.bf16.mxu0 0
      %1244 = vmatpush2.bf16.msra.mxu0 0
      %1245 = vmatprep.subr.bf16.mxu0 0
      %1246 = vmatpush2.bf16.msra.mxu0 0
      %1247 = vmatprep.subr.bf16.mxu0 0
      %1248 = vmatpush2.bf16.msra.mxu0 0
      %1249 = vmatprep.subr.bf16.mxu0 0
      %1250 = vmatpush2.bf16.msra.mxu0 0
      %1251 = vmatprep.mubr.bf16.mxu0 0
      %1252 = vmatmul.mubr.bf16.gmra.mxu0 %v1213
      %v1253 = vpop.f32.mrf.mxu0
      %v1254 = vadd.f32 %v1206, %v1253
      %v1255 = vpop.f32.mrf.mxu0
      %v1256 = vadd.f32 %v1208, %v1255
      %v1257 = vpop.f32.mrf.mxu0
      %v1258 = vpop.f32.mrf.mxu0
      %1259 = vdwg.mxu0
      %v1260 = vld [vmem:[#allocation2] sm:$0xf]
      %v1261 = vld [vmem:[#allocation2 + $0x4] sm:$0xf]
      %v1262 = vld [vmem:[#allocation2 + $0xc] sm:$0xf]
      %v1263 = vld [vmem:[#allocation2 + $0x10] sm:$0xf]
      %v1264 = vld [vmem:[#allocation2 + $0x18] sm:$0xf]
      %v1265 = vld [vmem:[#allocation2 + $0x1c] sm:$0xf]
      %v1266 = vld [vmem:[#allocation2 + $0x24] sm:$0xf]
      %v1267 = vld [vmem:[#allocation2 + $0x28] sm:$0xf]
      %1276 = vrot.lane.b32.xlu0 %v1260, 126
      %v1277 = vpop.permute.xlu0 %1276
      %1278 = vrot.lane.b32.xlu0 %v1261, 126
      %v1279 = vpop.permute.xlu0 %1278
      %1280 = vrot.lane.b32.xlu0 %v1262, 126
      %v1281 = vpop.permute.xlu0 %1280
      %1282 = vrot.lane.b32.xlu0 %v1263, 126
      %v1283 = vpop.permute.xlu0 %1282
      %1284 = vrot.lane.b32.xlu0 %v1264, 126
      %v1285 = vpop.permute.xlu0 %1284
      %1286 = vrot.lane.b32.xlu0 %v1265, 126
      %v1287 = vpop.permute.xlu0 %1286
      %1288 = vrot.lane.b32.xlu0 %v1266, 126
      %v1289 = vpop.permute.xlu0 %1288
      %1290 = vrot.lane.b32.xlu0 %v1267, 126
      %v1291 = vpop.permute.xlu0 %1290
      %v1294 = vpack.i.b16 %v1281, %v1277
      %v1295 = vshrl.u32 %v1277, 16
      %v1296 = vshrl.u32 %v1281, 16
      %v1297 = vpack.i.b16 %v1296, %v1295
      %v1300 = vpack.i.b16 %v1289, %v1285
      %v1301 = vshrl.u32 %v1285, 16
      %v1302 = vshrl.u32 %v1289, 16
      %v1303 = vpack.i.b16 %v1302, %v1301
      %v1306 = vpack.i.b16 %v1283, %v1279
      %v1307 = vshrl.u32 %v1279, 16
      %v1308 = vshrl.u32 %v1283, 16
      %v1309 = vpack.i.b16 %v1308, %v1307
      %v1312 = vpack.i.b16 %v1291, %v1287
      %v1313 = vshrl.u32 %v1287, 16
      %v1314 = vshrl.u32 %v1291, 16
      %v1315 = vpack.i.b16 %v1314, %v1313
      %v1318 = vunpack.c.l.s4 1983009808
      %v1319 = vunpack.c.0.s8 %v1318
      %v1320 = vlaneseq
      %v1321 = vshrl.u32 %v1320, 7
      %v1322 = vsub.s32 %v1319, %v1321
      %v1323 = vrot.slane %v1294, %v1322
      %v1326 = vunpack.c.l.s4 1983009808
      %v1327 = vunpack.c.0.s8 %v1326
      %v1328 = vlaneseq
      %v1329 = vshrl.u32 %v1328, 7
      %v1330 = vsub.s32 %v1327, %v1329
      %v1331 = vrot.slane %v1300, %v1330
      %v1332 = vcombine.low %v1323, %v1331
      %v1333 = vcombine.high %v1323, %v1331
      %v1335 = vunpack.c.l.s4 1934713408
      %v1336 = vunpack.c.0.s8 %v1335
      %v1337 = vlaneseq
      %v1338 = vshrl.u32 %v1337, 7
      %v1339 = vsub.s32 %v1336, %v1338
      %v1340 = vrot.slane %v1332, %v1339
      %v1342 = vunpack.c.l.s4 1934713408
      %v1343 = vunpack.c.0.s8 %v1342
      %v1344 = vlaneseq
      %v1345 = vshrl.u32 %v1344, 7
      %v1346 = vsub.s32 %v1343, %v1345
      %v1347 = vrot.slane %v1333, %v1346
      %v1348 = vcombine.high %v1340, 0
      %v1349 = vcombine.high %v1347, 0
      %v1352 = vunpack.c.l.s4 1983009808
      %v1353 = vunpack.c.0.s8 %v1352
      %v1354 = vlaneseq
      %v1355 = vshrl.u32 %v1354, 7
      %v1356 = vsub.s32 %v1353, %v1355
      %v1357 = vrot.slane %v1297, %v1356
      %v1360 = vunpack.c.l.s4 1983009808
      %v1361 = vunpack.c.0.s8 %v1360
      %v1362 = vlaneseq
      %v1363 = vshrl.u32 %v1362, 7
      %v1364 = vsub.s32 %v1361, %v1363
      %v1365 = vrot.slane %v1303, %v1364
      %v1366 = vcombine.low %v1357, %v1365
      %v1367 = vcombine.high %v1357, %v1365
      %v1369 = vunpack.c.l.s4 1934713408
      %v1370 = vunpack.c.0.s8 %v1369
      %v1371 = vlaneseq
      %v1372 = vshrl.u32 %v1371, 7
      %v1373 = vsub.s32 %v1370, %v1372
      %v1374 = vrot.slane %v1366, %v1373
      %v1376 = vunpack.c.l.s4 1934713408
      %v1377 = vunpack.c.0.s8 %v1376
      %v1378 = vlaneseq
      %v1379 = vshrl.u32 %v1378, 7
      %v1380 = vsub.s32 %v1377, %v1379
      %v1381 = vrot.slane %v1367, %v1380
      %v1382 = vcombine.high %v1374, 0
      %v1383 = vcombine.high %v1381, 0
      %v1386 = vunpack.c.l.s4 1983009808
      %v1387 = vunpack.c.0.s8 %v1386
      %v1388 = vlaneseq
      %v1389 = vshrl.u32 %v1388, 7
      %v1390 = vsub.s32 %v1387, %v1389
      %v1391 = vrot.slane %v1306, %v1390
      %v1394 = vunpack.c.l.s4 1983009808
      %v1395 = vunpack.c.0.s8 %v1394
      %v1396 = vlaneseq
      %v1397 = vshrl.u32 %v1396, 7
      %v1398 = vsub.s32 %v1395, %v1397
      %v1399 = vrot.slane %v1312, %v1398
      %v1400 = vcombine.low %v1391, %v1399
      %v1401 = vcombine.high %v1391, %v1399
      %v1403 = vunpack.c.l.s4 1934713408
      %v1404 = vunpack.c.0.s8 %v1403
      %v1405 = vlaneseq
      %v1406 = vshrl.u32 %v1405, 7
      %v1407 = vsub.s32 %v1404, %v1406
      %v1408 = vrot.slane %v1400, %v1407
      %v1410 = vunpack.c.l.s4 1934713408
      %v1411 = vunpack.c.0.s8 %v1410
      %v1412 = vlaneseq
      %v1413 = vshrl.u32 %v1412, 7
      %v1414 = vsub.s32 %v1411, %v1413
      %v1415 = vrot.slane %v1401, %v1414
      %v1416 = vcombine.high %v1408, 0
      %v1417 = vcombine.high %v1415, 0
      %v1420 = vunpack.c.l.s4 1983009808
      %v1421 = vunpack.c.0.s8 %v1420
      %v1422 = vlaneseq
      %v1423 = vshrl.u32 %v1422, 7
      %v1424 = vsub.s32 %v1421, %v1423
      %v1425 = vrot.slane %v1309, %v1424
      %v1428 = vunpack.c.l.s4 1983009808
      %v1429 = vunpack.c.0.s8 %v1428
      %v1430 = vlaneseq
      %v1431 = vshrl.u32 %v1430, 7
      %v1432 = vsub.s32 %v1429, %v1431
      %v1433 = vrot.slane %v1315, %v1432
      %v1434 = vcombine.low %v1425, %v1433
      %v1435 = vcombine.high %v1425, %v1433
      %v1437 = vunpack.c.l.s4 1934713408
      %v1438 = vunpack.c.0.s8 %v1437
      %v1439 = vlaneseq
      %v1440 = vshrl.u32 %v1439, 7
      %v1441 = vsub.s32 %v1438, %v1440
      %v1442 = vrot.slane %v1434, %v1441
      %v1444 = vunpack.c.l.s4 1934713408
      %v1445 = vunpack.c.0.s8 %v1444
      %v1446 = vlaneseq
      %v1447 = vshrl.u32 %v1446, 7
      %v1448 = vsub.s32 %v1445, %v1447
      %v1449 = vrot.slane %v1435, %v1448
      %v1450 = vcombine.high %v1442, 0
      %v1451 = vcombine.high %v1449, 0
      %v1453 = vunpack.c.l.b16 %v1374
      %v1454 = vpack.c.b16 %v1453, %v1453
      %1455 = vrot.lane.b32.xlu0 %v1454, 16
      %v1456 = vpop.permute.xlu0 %1455
      %v1458 = vunpack.c.l.b16 %v1348
      %v1459 = vpack.c.b16 %v1458, %v1458
      %1460 = vrot.lane.b32.xlu0 %v1459, 32
      %v1461 = vpop.permute.xlu0 %1460
      %v1463 = vunpack.c.l.b16 %v1382
      %v1464 = vpack.c.b16 %v1463, %v1463
      %1465 = vrot.lane.b32.xlu0 %v1464, 48
      %v1466 = vpop.permute.xlu0 %1465
      %v1468 = vunpack.c.l.b16 %v1347
      %v1469 = vpack.c.b16 %v1468, %v1468
      %1470 = vrot.lane.b32.xlu0 %v1469, 64
      %v1471 = vpop.permute.xlu0 %1470
      %v1473 = vunpack.c.l.b16 %v1381
      %v1474 = vpack.c.b16 %v1473, %v1473
      %1475 = vrot.lane.b32.xlu0 %v1474, 80
      %v1476 = vpop.permute.xlu0 %1475
      %v1478 = vunpack.c.l.b16 %v1349
      %v1479 = vpack.c.b16 %v1478, %v1478
      %1480 = vrot.lane.b32.xlu0 %v1479, 96
      %v1481 = vpop.permute.xlu0 %1480
      %v1483 = vunpack.c.l.b16 %v1383
      %v1484 = vpack.c.b16 %v1483, %v1483
      %1485 = vrot.lane.b32.xlu0 %v1484, 112
      %v1486 = vpop.permute.xlu0 %1485
      %v1488 = vunpack.c.l.b16 %v1442
      %v1489 = vpack.c.b16 %v1488, %v1488
      %1490 = vrot.lane.b32.xlu0 %v1489, 16
      %v1491 = vpop.permute.xlu0 %1490
      %v1493 = vunpack.c.l.b16 %v1416
      %v1494 = vpack.c.b16 %v1493, %v1493
      %1495 = vrot.lane.b32.xlu0 %v1494, 32
      %v1496 = vpop.permute.xlu0 %1495
      %v1498 = vunpack.c.l.b16 %v1450
      %v1499 = vpack.c.b16 %v1498, %v1498
      %1500 = vrot.lane.b32.xlu0 %v1499, 48
      %v1501 = vpop.permute.xlu0 %1500
      %v1503 = vunpack.c.l.b16 %v1415
      %v1504 = vpack.c.b16 %v1503, %v1503
      %1505 = vrot.lane.b32.xlu0 %v1504, 64
      %v1506 = vpop.permute.xlu0 %1505
      %v1508 = vunpack.c.l.b16 %v1449
      %v1509 = vpack.c.b16 %v1508, %v1508
      %1510 = vrot.lane.b32.xlu0 %v1509, 80
      %v1511 = vpop.permute.xlu0 %1510
      %v1513 = vunpack.c.l.b16 %v1417
      %v1514 = vpack.c.b16 %v1513, %v1513
      %1515 = vrot.lane.b32.xlu0 %v1514, 96
      %v1516 = vpop.permute.xlu0 %1515
      %v1518 = vunpack.c.l.b16 %v1451
      %v1519 = vpack.c.b16 %v1518, %v1518
      %1520 = vrot.lane.b32.xlu0 %v1519, 112
      %v1521 = vpop.permute.xlu0 %1520
      %v1524 = vsel %vm838, %v1340, %v1456
      %v1526 = vsel %vm842, %v1524, %v1461
      %v1528 = vsel %vm845, %v1526, %v1466
      %v1530 = vsel %vm848, %v1528, %v1471
      %v1532 = vsel %vm851, %v1530, %v1476
      %v1534 = vsel %vm854, %v1532, %v1481
      %v1536 = vsel %vm857, %v1534, %v1486
      %v1539 = vsel %vm838, %v1408, %v1491
      %v1541 = vsel %vm842, %v1539, %v1496
      %v1543 = vsel %vm845, %v1541, %v1501
      %v1545 = vsel %vm848, %v1543, %v1506
      %v1547 = vsel %vm851, %v1545, %v1511
      %v1549 = vsel %vm854, %v1547, %v1516
      %v1551 = vsel %vm857, %v1549, %v1521
      %s1552 = scalar_lea.vmem %s1, 4
      %v1553 = vld [vmem:[%s1552] sm:$0x3]
      %v1555 = vsel %vm1162, %v1553, 0
      %v1557 = vsel %vm1166, %v1536, 0
      %v1559 = vsel %vm1166, %v1551, 0
      %1561 = vmatprep.subr.bf16.mxu0 0
      %1562 = vmatpush1.bf16.msra.mxu0 0
      %1563 = vmatprep.subr.bf16.mxu0 0
      %1564 = vmatpush1.bf16.msra.mxu0 0
      %1565 = vmatprep.subr.bf16.mxu0 0
      %1566 = vmatpush1.bf16.msra.mxu0 0
      %1567 = vmatprep.subr.bf16.mxu0 0
      %1568 = vmatpush1.bf16.msra.mxu0 0
      %1569 = vmatprep.subr.bf16.mxu0 0
      %1570 = vmatpush1.bf16.msra.mxu0 0
      %1571 = vmatprep.subr.bf16.mxu0 0
      %1572 = vmatpush1.bf16.msra.mxu0 0
      %1573 = vmatprep.subr.bf16.mxu0 0
      %1574 = vmatpush1.bf16.msra.mxu0 0
      %1575 = vmatprep.subr.bf16.mxu0 %v1559
      %1576 = vmatpush1.bf16.msra.mxu0 %v1557
      %1577 = vmatprep.subr.bf16.mxu0 0
      %1578 = vmatpush2.bf16.msra.mxu0 0
      %1579 = vmatprep.subr.bf16.mxu0 0
      %1580 = vmatpush2.bf16.msra.mxu0 0
      %1581 = vmatprep.subr.bf16.mxu0 0
      %1582 = vmatpush2.bf16.msra.mxu0 0
      %1583 = vmatprep.subr.bf16.mxu0 0
      %1584 = vmatpush2.bf16.msra.mxu0 0
      %1585 = vmatprep.subr.bf16.mxu0 0
      %1586 = vmatpush2.bf16.msra.mxu0 0
      %1587 = vmatprep.subr.bf16.mxu0 0
      %1588 = vmatpush2.bf16.msra.mxu0 0
      %1589 = vmatprep.subr.bf16.mxu0 0
      %1590 = vmatpush2.bf16.msra.mxu0 0
      %1591 = vmatprep.subr.bf16.mxu0 0
      %1592 = vmatpush2.bf16.msra.mxu0 0
      %1593 = vmatprep.mubr.bf16.mxu0 0
      %1594 = vmatmul.mubr.bf16.gmra.mxu0 %v1555
      %v1595 = vpop.f32.mrf.mxu0
      %v1596 = vadd.f32 0.0, %v1595
      %v1597 = vpop.f32.mrf.mxu0
      %v1598 = vadd.f32 0.0, %v1597
      %v1599 = vpop.f32.mrf.mxu0
      %v1600 = vpop.f32.mrf.mxu0
      %1601 = vdwg.mxu0
      %v1602 = vadd.f32 %v1254, %v1596
      %v1603 = vadd.f32 %v1256, %v1598
      %v1604 = vld [vmem:[#allocation2] sm:$0xf]
      %v1605 = vld [vmem:[#allocation2 + $0x4] sm:$0xf]
      %v1606 = vld [vmem:[#allocation2 + $0x8] sm:$0x1]
      %v1607 = vld [vmem:[#allocation2 + $0xc] sm:$0xf]
      %v1608 = vld [vmem:[#allocation2 + $0x10] sm:$0xf]
      %v1609 = vld [vmem:[#allocation2 + $0x14] sm:$0x1]
      %v1610 = vld [vmem:[#allocation2 + $0x18] sm:$0xf]
      %v1611 = vld [vmem:[#allocation2 + $0x1c] sm:$0xf]
      %v1612 = vld [vmem:[#allocation2 + $0x20] sm:$0x1]
      %v1613 = vld [vmem:[#allocation2 + $0x24] sm:$0xf]
      %v1614 = vld [vmem:[#allocation2 + $0x28] sm:$0xf]
      %v1615 = vld [vmem:[#allocation2 + $0x2c] sm:$0x1]
      %vm1616 = vsmask.f32 3328
      %vm1617 = vsmask.f32 7440
      %vm1618 = vmor %vm1616, %vm1617
      %v1620 = vshrl.u32 %v1604, 16
      %v1622 = vrot.slane %v1620, 4
      %v1623 = vshll.u32 %v1604, 16
      %v1625 = vrot.slane %v1623, 5
      %v1626 = vor.u32 %v1622, %v1625
      %v1627 = vrot.slane %v1626, 4
      %v1629 = vshll.u32 %v1605, 16
      %v1631 = vrot.slane %v1629, 5
      %v1632 = vsel %vm1618, %v1627, %v1631
      %v1633 = vshrl.u32 %v1605, 16
      %v1635 = vrot.slane %v1633, 4
      %v1636 = vor.u32 %v1635, %v1631
      %v1637 = vrot.slane %v1636, 4
      %v1639 = vshll.u32 %v1606, 16
      %v1641 = vrot.slane %v1639, 5
      %v1642 = vsel %vm1618, %v1637, %v1641
      %v1644 = vshrl.u32 %v1607, 16
      %v1646 = vrot.slane %v1644, 4
      %v1647 = vshll.u32 %v1607, 16
      %v1649 = vrot.slane %v1647, 5
      %v1650 = vor.u32 %v1646, %v1649
      %v1651 = vrot.slane %v1650, 4
      %v1653 = vshll.u32 %v1608, 16
      %v1655 = vrot.slane %v1653, 5
      %v1656 = vsel %vm1618, %v1651, %v1655
      %v1657 = vshrl.u32 %v1608, 16
      %v1659 = vrot.slane %v1657, 4
      %v1660 = vor.u32 %v1659, %v1655
      %v1661 = vrot.slane %v1660, 4
      %v1663 = vshll.u32 %v1609, 16
      %v1665 = vrot.slane %v1663, 5
      %v1666 = vsel %vm1618, %v1661, %v1665
      %v1668 = vshrl.u32 %v1610, 16
      %v1670 = vrot.slane %v1668, 4
      %v1671 = vshll.u32 %v1610, 16
      %v1673 = vrot.slane %v1671, 5
      %v1674 = vor.u32 %v1670, %v1673
      %v1675 = vrot.slane %v1674, 4
      %v1677 = vshll.u32 %v1611, 16
      %v1679 = vrot.slane %v1677, 5
      %v1680 = vsel %vm1618, %v1675, %v1679
      %v1681 = vshrl.u32 %v1611, 16
      %v1683 = vrot.slane %v1681, 4
      %v1684 = vor.u32 %v1683, %v1679
      %v1685 = vrot.slane %v1684, 4
      %v1687 = vshll.u32 %v1612, 16
      %v1689 = vrot.slane %v1687, 5
      %v1690 = vsel %vm1618, %v1685, %v1689
      %v1692 = vshrl.u32 %v1613, 16
      %v1694 = vrot.slane %v1692, 4
      %v1695 = vshll.u32 %v1613, 16
      %v1697 = vrot.slane %v1695, 5
      %v1698 = vor.u32 %v1694, %v1697
      %v1699 = vrot.slane %v1698, 4
      %v1701 = vshll.u32 %v1614, 16
      %v1703 = vrot.slane %v1701, 5
      %v1704 = vsel %vm1618, %v1699, %v1703
      %v1705 = vshrl.u32 %v1614, 16
      %v1707 = vrot.slane %v1705, 4
      %v1708 = vor.u32 %v1707, %v1703
      %v1709 = vrot.slane %v1708, 4
      %v1711 = vshll.u32 %v1615, 16
      %v1713 = vrot.slane %v1711, 5
      %v1714 = vsel %vm1618, %v1709, %v1713
      %v1717 = vpack.i.b16 %v1656, %v1632
      %v1718 = vshrl.u32 %v1632, 16
      %v1719 = vshrl.u32 %v1656, 16
      %v1720 = vpack.i.b16 %v1719, %v1718
      %v1723 = vpack.i.b16 %v1704, %v1680
      %v1724 = vshrl.u32 %v1680, 16
      %v1725 = vshrl.u32 %v1704, 16
      %v1726 = vpack.i.b16 %v1725, %v1724
      %v1729 = vpack.i.b16 %v1666, %v1642
      %v1730 = vshrl.u32 %v1642, 16
      %v1731 = vshrl.u32 %v1666, 16
      %v1732 = vpack.i.b16 %v1731, %v1730
      %v1735 = vpack.i.b16 %v1714, %v1690
      %v1736 = vshrl.u32 %v1690, 16
      %v1737 = vshrl.u32 %v1714, 16
      %v1738 = vpack.i.b16 %v1737, %v1736
      %v1741 = vunpack.c.l.s4 1983009808
      %v1742 = vunpack.c.0.s8 %v1741
      %v1743 = vlaneseq
      %v1744 = vshrl.u32 %v1743, 7
      %v1745 = vsub.s32 %v1742, %v1744
      %v1746 = vrot.slane %v1717, %v1745
      %v1749 = vunpack.c.l.s4 1983009808
      %v1750 = vunpack.c.0.s8 %v1749
      %v1751 = vlaneseq
      %v1752 = vshrl.u32 %v1751, 7
      %v1753 = vsub.s32 %v1750, %v1752
      %v1754 = vrot.slane %v1723, %v1753
      %v1755 = vcombine.low %v1746, %v1754
      %v1756 = vcombine.high %v1746, %v1754
      %v1758 = vunpack.c.l.s4 1934713408
      %v1759 = vunpack.c.0.s8 %v1758
      %v1760 = vlaneseq
      %v1761 = vshrl.u32 %v1760, 7
      %v1762 = vsub.s32 %v1759, %v1761
      %v1763 = vrot.slane %v1755, %v1762
      %v1765 = vunpack.c.l.s4 1934713408
      %v1766 = vunpack.c.0.s8 %v1765
      %v1767 = vlaneseq
      %v1768 = vshrl.u32 %v1767, 7
      %v1769 = vsub.s32 %v1766, %v1768
      %v1770 = vrot.slane %v1756, %v1769
      %v1771 = vcombine.high %v1763, 0
      %v1772 = vcombine.high %v1770, 0
      %v1775 = vunpack.c.l.s4 1983009808
      %v1776 = vunpack.c.0.s8 %v1775
      %v1777 = vlaneseq
      %v1778 = vshrl.u32 %v1777, 7
      %v1779 = vsub.s32 %v1776, %v1778
      %v1780 = vrot.slane %v1720, %v1779
      %v1783 = vunpack.c.l.s4 1983009808
      %v1784 = vunpack.c.0.s8 %v1783
      %v1785 = vlaneseq
      %v1786 = vshrl.u32 %v1785, 7
      %v1787 = vsub.s32 %v1784, %v1786
      %v1788 = vrot.slane %v1726, %v1787
      %v1789 = vcombine.low %v1780, %v1788
      %v1790 = vcombine.high %v1780, %v1788
      %v1792 = vunpack.c.l.s4 1934713408
      %v1793 = vunpack.c.0.s8 %v1792
      %v1794 = vlaneseq
      %v1795 = vshrl.u32 %v1794, 7
      %v1796 = vsub.s32 %v1793, %v1795
      %v1797 = vrot.slane %v1789, %v1796
      %v1799 = vunpack.c.l.s4 1934713408
      %v1800 = vunpack.c.0.s8 %v1799
      %v1801 = vlaneseq
      %v1802 = vshrl.u32 %v1801, 7
      %v1803 = vsub.s32 %v1800, %v1802
      %v1804 = vrot.slane %v1790, %v1803
      %v1805 = vcombine.high %v1797, 0
      %v1806 = vcombine.high %v1804, 0
      %v1809 = vunpack.c.l.s4 1983009808
      %v1810 = vunpack.c.0.s8 %v1809
      %v1811 = vlaneseq
      %v1812 = vshrl.u32 %v1811, 7
      %v1813 = vsub.s32 %v1810, %v1812
      %v1814 = vrot.slane %v1729, %v1813
      %v1817 = vunpack.c.l.s4 1983009808
      %v1818 = vunpack.c.0.s8 %v1817
      %v1819 = vlaneseq
      %v1820 = vshrl.u32 %v1819, 7
      %v1821 = vsub.s32 %v1818, %v1820
      %v1822 = vrot.slane %v1735, %v1821
      %v1823 = vcombine.low %v1814, %v1822
      %v1824 = vcombine.high %v1814, %v1822
      %v1826 = vunpack.c.l.s4 1934713408
      %v1827 = vunpack.c.0.s8 %v1826
      %v1828 = vlaneseq
      %v1829 = vshrl.u32 %v1828, 7
      %v1830 = vsub.s32 %v1827, %v1829
      %v1831 = vrot.slane %v1823, %v1830
      %v1833 = vunpack.c.l.s4 1934713408
      %v1834 = vunpack.c.0.s8 %v1833
      %v1835 = vlaneseq
      %v1836 = vshrl.u32 %v1835, 7
      %v1837 = vsub.s32 %v1834, %v1836
      %v1838 = vrot.slane %v1824, %v1837
      %v1839 = vcombine.high %v1831, 0
      %v1840 = vcombine.high %v1838, 0
      %v1843 = vunpack.c.l.s4 1983009808
      %v1844 = vunpack.c.0.s8 %v1843
      %v1845 = vlaneseq
      %v1846 = vshrl.u32 %v1845, 7
      %v1847 = vsub.s32 %v1844, %v1846
      %v1848 = vrot.slane %v1732, %v1847
      %v1851 = vunpack.c.l.s4 1983009808
      %v1852 = vunpack.c.0.s8 %v1851
      %v1853 = vlaneseq
      %v1854 = vshrl.u32 %v1853, 7
      %v1855 = vsub.s32 %v1852, %v1854
      %v1856 = vrot.slane %v1738, %v1855
      %v1857 = vcombine.low %v1848, %v1856
      %v1858 = vcombine.high %v1848, %v1856
      %v1860 = vunpack.c.l.s4 1934713408
      %v1861 = vunpack.c.0.s8 %v1860
      %v1862 = vlaneseq
      %v1863 = vshrl.u32 %v1862, 7
      %v1864 = vsub.s32 %v1861, %v1863
      %v1865 = vrot.slane %v1857, %v1864
      %v1867 = vunpack.c.l.s4 1934713408
      %v1868 = vunpack.c.0.s8 %v1867
      %v1869 = vlaneseq
      %v1870 = vshrl.u32 %v1869, 7
      %v1871 = vsub.s32 %v1868, %v1870
      %v1872 = vrot.slane %v1858, %v1871
      %v1873 = vcombine.high %v1865, 0
      %v1874 = vcombine.high %v1872, 0
      %v1876 = vunpack.c.l.b16 %v1797
      %v1877 = vpack.c.b16 %v1876, %v1876
      %1878 = vrot.lane.b32.xlu0 %v1877, 16
      %v1879 = vpop.permute.xlu0 %1878
      %v1881 = vunpack.c.l.b16 %v1771
      %v1882 = vpack.c.b16 %v1881, %v1881
      %1883 = vrot.lane.b32.xlu0 %v1882, 32
      %v1884 = vpop.permute.xlu0 %1883
      %v1886 = vunpack.c.l.b16 %v1805
      %v1887 = vpack.c.b16 %v1886, %v1886
      %1888 = vrot.lane.b32.xlu0 %v1887, 48
      %v1889 = vpop.permute.xlu0 %1888
      %v1891 = vunpack.c.l.b16 %v1770
      %v1892 = vpack.c.b16 %v1891, %v1891
      %1893 = vrot.lane.b32.xlu0 %v1892, 64
      %v1894 = vpop.permute.xlu0 %1893
      %v1896 = vunpack.c.l.b16 %v1804
      %v1897 = vpack.c.b16 %v1896, %v1896
      %1898 = vrot.lane.b32.xlu0 %v1897, 80
      %v1899 = vpop.permute.xlu0 %1898
      %v1901 = vunpack.c.l.b16 %v1772
      %v1902 = vpack.c.b16 %v1901, %v1901
      %1903 = vrot.lane.b32.xlu0 %v1902, 96
      %v1904 = vpop.permute.xlu0 %1903
      %v1906 = vunpack.c.l.b16 %v1806
      %v1907 = vpack.c.b16 %v1906, %v1906
      %1908 = vrot.lane.b32.xlu0 %v1907, 112
      %v1909 = vpop.permute.xlu0 %1908
      %v1911 = vunpack.c.l.b16 %v1865
      %v1912 = vpack.c.b16 %v1911, %v1911
      %1913 = vrot.lane.b32.xlu0 %v1912, 16
      %v1914 = vpop.permute.xlu0 %1913
      %v1916 = vunpack.c.l.b16 %v1839
      %v1917 = vpack.c.b16 %v1916, %v1916
      %1918 = vrot.lane.b32.xlu0 %v1917, 32
      %v1919 = vpop.permute.xlu0 %1918
      %v1921 = vunpack.c.l.b16 %v1873
      %v1922 = vpack.c.b16 %v1921, %v1921
      %1923 = vrot.lane.b32.xlu0 %v1922, 48
      %v1924 = vpop.permute.xlu0 %1923
      %v1926 = vunpack.c.l.b16 %v1838
      %v1927 = vpack.c.b16 %v1926, %v1926
      %1928 = vrot.lane.b32.xlu0 %v1927, 64
      %v1929 = vpop.permute.xlu0 %1928
      %v1931 = vunpack.c.l.b16 %v1872
      %v1932 = vpack.c.b16 %v1931, %v1931
      %1933 = vrot.lane.b32.xlu0 %v1932, 80
      %v1934 = vpop.permute.xlu0 %1933
      %v1936 = vunpack.c.l.b16 %v1840
      %v1937 = vpack.c.b16 %v1936, %v1936
      %1938 = vrot.lane.b32.xlu0 %v1937, 96
      %v1939 = vpop.permute.xlu0 %1938
      %v1941 = vunpack.c.l.b16 %v1874
      %v1942 = vpack.c.b16 %v1941, %v1941
      %1943 = vrot.lane.b32.xlu0 %v1942, 112
      %v1944 = vpop.permute.xlu0 %1943
      %v1947 = vsel %vm838, %v1763, %v1879
      %v1949 = vsel %vm842, %v1947, %v1884
      %v1951 = vsel %vm845, %v1949, %v1889
      %v1953 = vsel %vm848, %v1951, %v1894
      %v1955 = vsel %vm851, %v1953, %v1899
      %v1957 = vsel %vm854, %v1955, %v1904
      %v1959 = vsel %vm857, %v1957, %v1909
      %v1962 = vsel %vm838, %v1831, %v1914
      %v1964 = vsel %vm842, %v1962, %v1919
      %v1966 = vsel %vm845, %v1964, %v1924
      %v1968 = vsel %vm848, %v1966, %v1929
      %v1970 = vsel %vm851, %v1968, %v1934
      %v1972 = vsel %vm854, %v1970, %v1939
      %v1974 = vsel %vm857, %v1972, %v1944
      %s1975 = scalar_lea.vmem %s1, 6
      %v1976 = vld [vmem:[%s1975] sm:$0x3]
      %v1978 = vsel %vm1162, %v1976, 0
      %v1980 = vsel %vm1166, %v1959, 0
      %v1982 = vsel %vm1166, %v1974, 0
      %1984 = vmatprep.subr.bf16.mxu0 0
      %1985 = vmatpush1.bf16.msra.mxu0 0
      %1986 = vmatprep.subr.bf16.mxu0 0
      %1987 = vmatpush1.bf16.msra.mxu0 0
      %1988 = vmatprep.subr.bf16.mxu0 0
      %1989 = vmatpush1.bf16.msra.mxu0 0
      %1990 = vmatprep.subr.bf16.mxu0 0
      %1991 = vmatpush1.bf16.msra.mxu0 0
      %1992 = vmatprep.subr.bf16.mxu0 0
      %1993 = vmatpush1.bf16.msra.mxu0 0
      %1994 = vmatprep.subr.bf16.mxu0 0
      %1995 = vmatpush1.bf16.msra.mxu0 0
      %1996 = vmatprep.subr.bf16.mxu0 0
      %1997 = vmatpush1.bf16.msra.mxu0 0
      %1998 = vmatprep.subr.bf16.mxu0 %v1982
      %1999 = vmatpush1.bf16.msra.mxu0 %v1980
      %2000 = vmatprep.subr.bf16.mxu0 0
      %2001 = vmatpush2.bf16.msra.mxu0 0
      %2002 = vmatprep.subr.bf16.mxu0 0
      %2003 = vmatpush2.bf16.msra.mxu0 0
      %2004 = vmatprep.subr.bf16.mxu0 0
      %2005 = vmatpush2.bf16.msra.mxu0 0
      %2006 = vmatprep.subr.bf16.mxu0 0
      %2007 = vmatpush2.bf16.msra.mxu0 0
      %2008 = vmatprep.subr.bf16.mxu0 0
      %2009 = vmatpush2.bf16.msra.mxu0 0
      %2010 = vmatprep.subr.bf16.mxu0 0
      %2011 = vmatpush2.bf16.msra.mxu0 0
      %2012 = vmatprep.subr.bf16.mxu0 0
      %2013 = vmatpush2.bf16.msra.mxu0 0
      %2014 = vmatprep.subr.bf16.mxu0 0
      %2015 = vmatpush2.bf16.msra.mxu0 0
      %2016 = vmatprep.mubr.bf16.mxu0 0
      %2017 = vmatmul.mubr.bf16.gmra.mxu0 %v1978
      %v2018 = vpop.f32.mrf.mxu0
      %v2019 = vadd.f32 0.0, %v2018
      %v2020 = vpop.f32.mrf.mxu0
      %v2021 = vadd.f32 0.0, %v2020
      %v2022 = vpop.f32.mrf.mxu0
      %v2023 = vpop.f32.mrf.mxu0
      %2024 = vdwg.mxu0
      %v2025 = vadd.f32 %v1602, %v2019
      %v2026 = vadd.f32 %v1603, %v2021
      %v2027 = vld [vmem:[#allocation2] sm:$0xf]
      %v2028 = vld [vmem:[#allocation2 + $0x4] sm:$0xf]
      %v2029 = vld [vmem:[#allocation2 + $0x8] sm:$0x1]
      %v2030 = vld [vmem:[#allocation2 + $0xc] sm:$0xf]
      %v2031 = vld [vmem:[#allocation2 + $0x10] sm:$0xf]
      %v2032 = vld [vmem:[#allocation2 + $0x14] sm:$0x1]
      %v2033 = vld [vmem:[#allocation2 + $0x18] sm:$0xf]
      %v2034 = vld [vmem:[#allocation2 + $0x1c] sm:$0xf]
      %v2035 = vld [vmem:[#allocation2 + $0x20] sm:$0x1]
      %v2036 = vld [vmem:[#allocation2 + $0x24] sm:$0xf]
      %v2037 = vld [vmem:[#allocation2 + $0x28] sm:$0xf]
      %v2038 = vld [vmem:[#allocation2 + $0x2c] sm:$0x1]
      %v2040 = vshrl.u32 %v2027, 16
      %v2042 = vrot.slane %v2040, 4
      %v2043 = vshll.u32 %v2027, 16
      %v2045 = vrot.slane %v2043, 5
      %v2046 = vor.u32 %v2042, %v2045
      %v2047 = vrot.slane %v2046, 4
      %v2049 = vshll.u32 %v2028, 16
      %v2051 = vrot.slane %v2049, 5
      %v2052 = vsel %vm1618, %v2047, %v2051
      %v2053 = vshrl.u32 %v2028, 16
      %v2055 = vrot.slane %v2053, 4
      %v2056 = vor.u32 %v2055, %v2051
      %v2057 = vrot.slane %v2056, 4
      %v2059 = vshll.u32 %v2029, 16
      %v2061 = vrot.slane %v2059, 5
      %v2062 = vsel %vm1618, %v2057, %v2061
      %v2064 = vshrl.u32 %v2030, 16
      %v2066 = vrot.slane %v2064, 4
      %v2067 = vshll.u32 %v2030, 16
      %v2069 = vrot.slane %v2067, 5
      %v2070 = vor.u32 %v2066, %v2069
      %v2071 = vrot.slane %v2070, 4
      %v2073 = vshll.u32 %v2031, 16
      %v2075 = vrot.slane %v2073, 5
      %v2076 = vsel %vm1618, %v2071, %v2075
      %v2077 = vshrl.u32 %v2031, 16
      %v2079 = vrot.slane %v2077, 4
      %v2080 = vor.u32 %v2079, %v2075
      %v2081 = vrot.slane %v2080, 4
      %v2083 = vshll.u32 %v2032, 16
      %v2085 = vrot.slane %v2083, 5
      %v2086 = vsel %vm1618, %v2081, %v2085
      %v2088 = vshrl.u32 %v2033, 16
      %v2090 = vrot.slane %v2088, 4
      %v2091 = vshll.u32 %v2033, 16
      %v2093 = vrot.slane %v2091, 5
      %v2094 = vor.u32 %v2090, %v2093
      %v2095 = vrot.slane %v2094, 4
      %v2097 = vshll.u32 %v2034, 16
      %v2099 = vrot.slane %v2097, 5
      %v2100 = vsel %vm1618, %v2095, %v2099
      %v2101 = vshrl.u32 %v2034, 16
      %v2103 = vrot.slane %v2101, 4
      %v2104 = vor.u32 %v2103, %v2099
      %v2105 = vrot.slane %v2104, 4
      %v2107 = vshll.u32 %v2035, 16
      %v2109 = vrot.slane %v2107, 5
      %v2110 = vsel %vm1618, %v2105, %v2109
      %v2112 = vshrl.u32 %v2036, 16
      %v2114 = vrot.slane %v2112, 4
      %v2115 = vshll.u32 %v2036, 16
      %v2117 = vrot.slane %v2115, 5
      %v2118 = vor.u32 %v2114, %v2117
      %v2119 = vrot.slane %v2118, 4
      %v2121 = vshll.u32 %v2037, 16
      %v2123 = vrot.slane %v2121, 5
      %v2124 = vsel %vm1618, %v2119, %v2123
      %v2125 = vshrl.u32 %v2037, 16
      %v2127 = vrot.slane %v2125, 4
      %v2128 = vor.u32 %v2127, %v2123
      %v2129 = vrot.slane %v2128, 4
      %v2131 = vshll.u32 %v2038, 16
      %v2133 = vrot.slane %v2131, 5
      %v2134 = vsel %vm1618, %v2129, %v2133
      %2135 = vrot.lane.b32.xlu0 %v2052, 127
      %v2136 = vpop.permute.xlu0 %2135
      %2137 = vrot.lane.b32.xlu0 %v2062, 127
      %v2138 = vpop.permute.xlu0 %2137
      %2139 = vrot.lane.b32.xlu0 %v2076, 127
      %v2140 = vpop.permute.xlu0 %2139
      %2141 = vrot.lane.b32.xlu0 %v2086, 127
      %v2142 = vpop.permute.xlu0 %2141
      %2143 = vrot.lane.b32.xlu0 %v2100, 127
      %v2144 = vpop.permute.xlu0 %2143
      %2145 = vrot.lane.b32.xlu0 %v2110, 127
      %v2146 = vpop.permute.xlu0 %2145
      %2147 = vrot.lane.b32.xlu0 %v2124, 127
      %v2148 = vpop.permute.xlu0 %2147
      %2149 = vrot.lane.b32.xlu0 %v2134, 127
      %v2150 = vpop.permute.xlu0 %2149
      %v2153 = vpack.i.b16 %v2140, %v2136
      %v2154 = vshrl.u32 %v2136, 16
      %v2155 = vshrl.u32 %v2140, 16
      %v2156 = vpack.i.b16 %v2155, %v2154
      %v2159 = vpack.i.b16 %v2148, %v2144
      %v2160 = vshrl.u32 %v2144, 16
      %v2161 = vshrl.u32 %v2148, 16
      %v2162 = vpack.i.b16 %v2161, %v2160
      %v2165 = vpack.i.b16 %v2142, %v2138
      %v2166 = vshrl.u32 %v2138, 16
      %v2167 = vshrl.u32 %v2142, 16
      %v2168 = vpack.i.b16 %v2167, %v2166
      %v2171 = vpack.i.b16 %v2150, %v2146
      %v2172 = vshrl.u32 %v2146, 16
      %v2173 = vshrl.u32 %v2150, 16
      %v2174 = vpack.i.b16 %v2173, %v2172
      %v2177 = vunpack.c.l.s4 1983009808
      %v2178 = vunpack.c.0.s8 %v2177
      %v2179 = vlaneseq
      %v2180 = vshrl.u32 %v2179, 7
      %v2181 = vsub.s32 %v2178, %v2180
      %v2182 = vrot.slane %v2153, %v2181
      %v2185 = vunpack.c.l.s4 1983009808
      %v2186 = vunpack.c.0.s8 %v2185
      %v2187 = vlaneseq
      %v2188 = vshrl.u32 %v2187, 7
      %v2189 = vsub.s32 %v2186, %v2188
      %v2190 = vrot.slane %v2159, %v2189
      %v2191 = vcombine.low %v2182, %v2190
      %v2192 = vcombine.high %v2182, %v2190
      %v2194 = vunpack.c.l.s4 1934713408
      %v2195 = vunpack.c.0.s8 %v2194
      %v2196 = vlaneseq
      %v2197 = vshrl.u32 %v2196, 7
      %v2198 = vsub.s32 %v2195, %v2197
      %v2199 = vrot.slane %v2191, %v2198
      %v2201 = vunpack.c.l.s4 1934713408
      %v2202 = vunpack.c.0.s8 %v2201
      %v2203 = vlaneseq
      %v2204 = vshrl.u32 %v2203, 7
      %v2205 = vsub.s32 %v2202, %v2204
      %v2206 = vrot.slane %v2192, %v2205
      %v2207 = vcombine.high %v2199, 0
      %v2208 = vcombine.high %v2206, 0
      %v2211 = vunpack.c.l.s4 1983009808
      %v2212 = vunpack.c.0.s8 %v2211
      %v2213 = vlaneseq
      %v2214 = vshrl.u32 %v2213, 7
      %v2215 = vsub.s32 %v2212, %v2214
      %v2216 = vrot.slane %v2156, %v2215
      %v2219 = vunpack.c.l.s4 1983009808
      %v2220 = vunpack.c.0.s8 %v2219
      %v2221 = vlaneseq
      %v2222 = vshrl.u32 %v2221, 7
      %v2223 = vsub.s32 %v2220, %v2222
      %v2224 = vrot.slane %v2162, %v2223
      %v2225 = vcombine.low %v2216, %v2224
      %v2226 = vcombine.high %v2216, %v2224
      %v2228 = vunpack.c.l.s4 1934713408
      %v2229 = vunpack.c.0.s8 %v2228
      %v2230 = vlaneseq
      %v2231 = vshrl.u32 %v2230, 7
      %v2232 = vsub.s32 %v2229, %v2231
      %v2233 = vrot.slane %v2225, %v2232
      %v2235 = vunpack.c.l.s4 1934713408
      %v2236 = vunpack.c.0.s8 %v2235
      %v2237 = vlaneseq
      %v2238 = vshrl.u32 %v2237, 7
      %v2239 = vsub.s32 %v2236, %v2238
      %v2240 = vrot.slane %v2226, %v2239
      %v2241 = vcombine.high %v2233, 0
      %v2242 = vcombine.high %v2240, 0
      %v2245 = vunpack.c.l.s4 1983009808
      %v2246 = vunpack.c.0.s8 %v2245
      %v2247 = vlaneseq
      %v2248 = vshrl.u32 %v2247, 7
      %v2249 = vsub.s32 %v2246, %v2248
      %v2250 = vrot.slane %v2165, %v2249
      %v2253 = vunpack.c.l.s4 1983009808
      %v2254 = vunpack.c.0.s8 %v2253
      %v2255 = vlaneseq
      %v2256 = vshrl.u32 %v2255, 7
      %v2257 = vsub.s32 %v2254, %v2256
      %v2258 = vrot.slane %v2171, %v2257
      %v2259 = vcombine.low %v2250, %v2258
      %v2260 = vcombine.high %v2250, %v2258
      %v2262 = vunpack.c.l.s4 1934713408
      %v2263 = vunpack.c.0.s8 %v2262
      %v2264 = vlaneseq
      %v2265 = vshrl.u32 %v2264, 7
      %v2266 = vsub.s32 %v2263, %v2265
      %v2267 = vrot.slane %v2259, %v2266
      %v2269 = vunpack.c.l.s4 1934713408
      %v2270 = vunpack.c.0.s8 %v2269
      %v2271 = vlaneseq
      %v2272 = vshrl.u32 %v2271, 7
      %v2273 = vsub.s32 %v2270, %v2272
      %v2274 = vrot.slane %v2260, %v2273
      %v2275 = vcombine.high %v2267, 0
      %v2276 = vcombine.high %v2274, 0
      %v2279 = vunpack.c.l.s4 1983009808
      %v2280 = vunpack.c.0.s8 %v2279
      %v2281 = vlaneseq
      %v2282 = vshrl.u32 %v2281, 7
      %v2283 = vsub.s32 %v2280, %v2282
      %v2284 = vrot.slane %v2168, %v2283
      %v2287 = vunpack.c.l.s4 1983009808
      %v2288 = vunpack.c.0.s8 %v2287
      %v2289 = vlaneseq
      %v2290 = vshrl.u32 %v2289, 7
      %v2291 = vsub.s32 %v2288, %v2290
      %v2292 = vrot.slane %v2174, %v2291
      %v2293 = vcombine.low %v2284, %v2292
      %v2294 = vcombine.high %v2284, %v2292
      %v2296 = vunpack.c.l.s4 1934713408
      %v2297 = vunpack.c.0.s8 %v2296
      %v2298 = vlaneseq
      %v2299 = vshrl.u32 %v2298, 7
      %v2300 = vsub.s32 %v2297, %v2299
      %v2301 = vrot.slane %v2293, %v2300
      %v2303 = vunpack.c.l.s4 1934713408
      %v2304 = vunpack.c.0.s8 %v2303
      %v2305 = vlaneseq
      %v2306 = vshrl.u32 %v2305, 7
      %v2307 = vsub.s32 %v2304, %v2306
      %v2308 = vrot.slane %v2294, %v2307
      %v2309 = vcombine.high %v2301, 0
      %v2310 = vcombine.high %v2308, 0
      %v2312 = vunpack.c.l.b16 %v2233
      %v2313 = vpack.c.b16 %v2312, %v2312
      %2314 = vrot.lane.b32.xlu0 %v2313, 16
      %v2315 = vpop.permute.xlu0 %2314
      %v2317 = vunpack.c.l.b16 %v2207
      %v2318 = vpack.c.b16 %v2317, %v2317
      %2319 = vrot.lane.b32.xlu0 %v2318, 32
      %v2320 = vpop.permute.xlu0 %2319
      %v2322 = vunpack.c.l.b16 %v2241
      %v2323 = vpack.c.b16 %v2322, %v2322
      %2324 = vrot.lane.b32.xlu0 %v2323, 48
      %v2325 = vpop.permute.xlu0 %2324
      %v2327 = vunpack.c.l.b16 %v2206
      %v2328 = vpack.c.b16 %v2327, %v2327
      %2329 = vrot.lane.b32.xlu0 %v2328, 64
      %v2330 = vpop.permute.xlu0 %2329
      %v2332 = vunpack.c.l.b16 %v2240
      %v2333 = vpack.c.b16 %v2332, %v2332
      %2334 = vrot.lane.b32.xlu0 %v2333, 80
      %v2335 = vpop.permute.xlu0 %2334
      %v2337 = vunpack.c.l.b16 %v2208
      %v2338 = vpack.c.b16 %v2337, %v2337
      %2339 = vrot.lane.b32.xlu0 %v2338, 96
      %v2340 = vpop.permute.xlu0 %2339
      %v2342 = vunpack.c.l.b16 %v2242
      %v2343 = vpack.c.b16 %v2342, %v2342
      %2344 = vrot.lane.b32.xlu0 %v2343, 112
      %v2345 = vpop.permute.xlu0 %2344
      %v2347 = vunpack.c.l.b16 %v2301
      %v2348 = vpack.c.b16 %v2347, %v2347
      %2349 = vrot.lane.b32.xlu0 %v2348, 16
      %v2350 = vpop.permute.xlu0 %2349
      %v2352 = vunpack.c.l.b16 %v2275
      %v2353 = vpack.c.b16 %v2352, %v2352
      %2354 = vrot.lane.b32.xlu0 %v2353, 32
      %v2355 = vpop.permute.xlu0 %2354
      %v2357 = vunpack.c.l.b16 %v2309
      %v2358 = vpack.c.b16 %v2357, %v2357
      %2359 = vrot.lane.b32.xlu0 %v2358, 48
      %v2360 = vpop.permute.xlu0 %2359
      %v2362 = vunpack.c.l.b16 %v2274
      %v2363 = vpack.c.b16 %v2362, %v2362
      %2364 = vrot.lane.b32.xlu0 %v2363, 64
      %v2365 = vpop.permute.xlu0 %2364
      %v2367 = vunpack.c.l.b16 %v2308
      %v2368 = vpack.c.b16 %v2367, %v2367
      %2369 = vrot.lane.b32.xlu0 %v2368, 80
      %v2370 = vpop.permute.xlu0 %2369
      %v2372 = vunpack.c.l.b16 %v2276
      %v2373 = vpack.c.b16 %v2372, %v2372
      %2374 = vrot.lane.b32.xlu0 %v2373, 96
      %v2375 = vpop.permute.xlu0 %2374
      %v2377 = vunpack.c.l.b16 %v2310
      %v2378 = vpack.c.b16 %v2377, %v2377
      %2379 = vrot.lane.b32.xlu0 %v2378, 112
      %v2380 = vpop.permute.xlu0 %2379
      %v2383 = vsel %vm838, %v2199, %v2315
      %v2385 = vsel %vm842, %v2383, %v2320
      %v2387 = vsel %vm845, %v2385, %v2325
      %v2389 = vsel %vm848, %v2387, %v2330
      %v2391 = vsel %vm851, %v2389, %v2335
      %v2393 = vsel %vm854, %v2391, %v2340
      %v2395 = vsel %vm857, %v2393, %v2345
      %v2398 = vsel %vm838, %v2267, %v2350
      %v2400 = vsel %vm842, %v2398, %v2355
      %v2402 = vsel %vm845, %v2400, %v2360
      %v2404 = vsel %vm848, %v2402, %v2365
      %v2406 = vsel %vm851, %v2404, %v2370
      %v2408 = vsel %vm854, %v2406, %v2375
      %v2410 = vsel %vm857, %v2408, %v2380
      %s2411 = scalar_lea.vmem %s1, 8
      %v2412 = vld [vmem:[%s2411] sm:$0x3]
      %v2414 = vsel %vm1162, %v2412, 0
      %v2416 = vsel %vm1166, %v2395, 0
      %v2418 = vsel %vm1166, %v2410, 0
      %2420 = vmatprep.subr.bf16.mxu0 0
      %2421 = vmatpush1.bf16.msra.mxu0 0
      %2422 = vmatprep.subr.bf16.mxu0 0
      %2423 = vmatpush1.bf16.msra.mxu0 0
      %2424 = vmatprep.subr.bf16.mxu0 0
      %2425 = vmatpush1.bf16.msra.mxu0 0
      %2426 = vmatprep.subr.bf16.mxu0 0
      %2427 = vmatpush1.bf16.msra.mxu0 0
      %2428 = vmatprep.subr.bf16.mxu0 0
      %2429 = vmatpush1.bf16.msra.mxu0 0
      %2430 = vmatprep.subr.bf16.mxu0 0
      %2431 = vmatpush1.bf16.msra.mxu0 0
      %2432 = vmatprep.subr.bf16.mxu0 0
      %2433 = vmatpush1.bf16.msra.mxu0 0
      %2434 = vmatprep.subr.bf16.mxu0 %v2418
      %2435 = vmatpush1.bf16.msra.mxu0 %v2416
      %2436 = vmatprep.subr.bf16.mxu0 0
      %2437 = vmatpush2.bf16.msra.mxu0 0
      %2438 = vmatprep.subr.bf16.mxu0 0
      %2439 = vmatpush2.bf16.msra.mxu0 0
      %2440 = vmatprep.subr.bf16.mxu0 0
      %2441 = vmatpush2.bf16.msra.mxu0 0
      %2442 = vmatprep.subr.bf16.mxu0 0
      %2443 = vmatpush2.bf16.msra.mxu0 0
      %2444 = vmatprep.subr.bf16.mxu0 0
      %2445 = vmatpush2.bf16.msra.mxu0 0
      %2446 = vmatprep.subr.bf16.mxu0 0
      %2447 = vmatpush2.bf16.msra.mxu0 0
      %2448 = vmatprep.subr.bf16.mxu0 0
      %2449 = vmatpush2.bf16.msra.mxu0 0
      %2450 = vmatprep.subr.bf16.mxu0 0
      %2451 = vmatpush2.bf16.msra.mxu0 0
      %2452 = vmatprep.mubr.bf16.mxu0 0
      %2453 = vmatmul.mubr.bf16.gmra.mxu0 %v2414
      %v2454 = vpop.f32.mrf.mxu0
      %v2455 = vadd.f32 0.0, %v2454
      %v2456 = vpop.f32.mrf.mxu0
      %v2457 = vadd.f32 0.0, %v2456
      %v2458 = vpop.f32.mrf.mxu0
      %v2459 = vpop.f32.mrf.mxu0
      %2460 = vdwg.mxu0
      %v2461 = vadd.f32 %v2025, %v2455
      %v2462 = vadd.f32 %v2026, %v2457
      %v2463 = vld [vmem:[#allocation2] sm:$0xf]
      %v2464 = vld [vmem:[#allocation2 + $0x4] sm:$0xf]
      %v2465 = vld [vmem:[#allocation2 + $0x8] sm:$0x1]
      %v2466 = vld [vmem:[#allocation2 + $0xc] sm:$0xf]
      %v2467 = vld [vmem:[#allocation2 + $0x10] sm:$0xf]
      %v2468 = vld [vmem:[#allocation2 + $0x14] sm:$0x1]
      %v2469 = vld [vmem:[#allocation2 + $0x18] sm:$0xf]
      %v2470 = vld [vmem:[#allocation2 + $0x1c] sm:$0xf]
      %v2471 = vld [vmem:[#allocation2 + $0x20] sm:$0x1]
      %v2472 = vld [vmem:[#allocation2 + $0x24] sm:$0xf]
      %v2473 = vld [vmem:[#allocation2 + $0x28] sm:$0xf]
      %v2474 = vld [vmem:[#allocation2 + $0x2c] sm:$0x1]
      %v2476 = vshrl.u32 %v2463, 16
      %v2478 = vrot.slane %v2476, 4
      %v2479 = vshll.u32 %v2463, 16
      %v2481 = vrot.slane %v2479, 5
      %v2482 = vor.u32 %v2478, %v2481
      %v2483 = vrot.slane %v2482, 4
      %v2485 = vshll.u32 %v2464, 16
      %v2487 = vrot.slane %v2485, 5
      %v2488 = vsel %vm1618, %v2483, %v2487
      %v2489 = vshrl.u32 %v2464, 16
      %v2491 = vrot.slane %v2489, 4
      %v2492 = vor.u32 %v2491, %v2487
      %v2493 = vrot.slane %v2492, 4
      %v2495 = vshll.u32 %v2465, 16
      %v2497 = vrot.slane %v2495, 5
      %v2498 = vsel %vm1618, %v2493, %v2497
      %v2500 = vshrl.u32 %v2466, 16
      %v2502 = vrot.slane %v2500, 4
      %v2503 = vshll.u32 %v2466, 16
      %v2505 = vrot.slane %v2503, 5
      %v2506 = vor.u32 %v2502, %v2505
      %v2507 = vrot.slane %v2506, 4
      %v2509 = vshll.u32 %v2467, 16
      %v2511 = vrot.slane %v2509, 5
      %v2512 = vsel %vm1618, %v2507, %v2511
      %v2513 = vshrl.u32 %v2467, 16
      %v2515 = vrot.slane %v2513, 4
      %v2516 = vor.u32 %v2515, %v2511
      %v2517 = vrot.slane %v2516, 4
      %v2519 = vshll.u32 %v2468, 16
      %v2521 = vrot.slane %v2519, 5
      %v2522 = vsel %vm1618, %v2517, %v2521
      %v2524 = vshrl.u32 %v2469, 16
      %v2526 = vrot.slane %v2524, 4
      %v2527 = vshll.u32 %v2469, 16
      %v2529 = vrot.slane %v2527, 5
      %v2530 = vor.u32 %v2526, %v2529
      %v2531 = vrot.slane %v2530, 4
      %v2533 = vshll.u32 %v2470, 16
      %v2535 = vrot.slane %v2533, 5
      %v2536 = vsel %vm1618, %v2531, %v2535
      %v2537 = vshrl.u32 %v2470, 16
      %v2539 = vrot.slane %v2537, 4
      %v2540 = vor.u32 %v2539, %v2535
      %v2541 = vrot.slane %v2540, 4
      %v2543 = vshll.u32 %v2471, 16
      %v2545 = vrot.slane %v2543, 5
      %v2546 = vsel %vm1618, %v2541, %v2545
      %v2548 = vshrl.u32 %v2472, 16
      %v2550 = vrot.slane %v2548, 4
      %v2551 = vshll.u32 %v2472, 16
      %v2553 = vrot.slane %v2551, 5
      %v2554 = vor.u32 %v2550, %v2553
      %v2555 = vrot.slane %v2554, 4
      %v2557 = vshll.u32 %v2473, 16
      %v2559 = vrot.slane %v2557, 5
      %v2560 = vsel %vm1618, %v2555, %v2559
      %v2561 = vshrl.u32 %v2473, 16
      %v2563 = vrot.slane %v2561, 4
      %v2564 = vor.u32 %v2563, %v2559
      %v2565 = vrot.slane %v2564, 4
      %v2567 = vshll.u32 %v2474, 16
      %v2569 = vrot.slane %v2567, 5
      %v2570 = vsel %vm1618, %v2565, %v2569
      %2571 = vrot.lane.b32.xlu0 %v2488, 126
      %v2572 = vpop.permute.xlu0 %2571
      %2573 = vrot.lane.b32.xlu0 %v2498, 126
      %v2574 = vpop.permute.xlu0 %2573
      %2575 = vrot.lane.b32.xlu0 %v2512, 126
      %v2576 = vpop.permute.xlu0 %2575
      %2577 = vrot.lane.b32.xlu0 %v2522, 126
      %v2578 = vpop.permute.xlu0 %2577
      %2579 = vrot.lane.b32.xlu0 %v2536, 126
      %v2580 = vpop.permute.xlu0 %2579
      %2581 = vrot.lane.b32.xlu0 %v2546, 126
      %v2582 = vpop.permute.xlu0 %2581
      %2583 = vrot.lane.b32.xlu0 %v2560, 126
      %v2584 = vpop.permute.xlu0 %2583
      %2585 = vrot.lane.b32.xlu0 %v2570, 126
      %v2586 = vpop.permute.xlu0 %2585
      %v2589 = vpack.i.b16 %v2576, %v2572
      %v2590 = vshrl.u32 %v2572, 16
      %v2591 = vshrl.u32 %v2576, 16
      %v2592 = vpack.i.b16 %v2591, %v2590
      %v2595 = vpack.i.b16 %v2584, %v2580
      %v2596 = vshrl.u32 %v2580, 16
      %v2597 = vshrl.u32 %v2584, 16
      %v2598 = vpack.i.b16 %v2597, %v2596
      %v2601 = vpack.i.b16 %v2578, %v2574
      %v2602 = vshrl.u32 %v2574, 16
      %v2603 = vshrl.u32 %v2578, 16
      %v2604 = vpack.i.b16 %v2603, %v2602
      %v2607 = vpack.i.b16 %v2586, %v2582
      %v2608 = vshrl.u32 %v2582, 16
      %v2609 = vshrl.u32 %v2586, 16
      %v2610 = vpack.i.b16 %v2609, %v2608
      %v2613 = vunpack.c.l.s4 1983009808
      %v2614 = vunpack.c.0.s8 %v2613
      %v2615 = vlaneseq
      %v2616 = vshrl.u32 %v2615, 7
      %v2617 = vsub.s32 %v2614, %v2616
      %v2618 = vrot.slane %v2589, %v2617
      %v2621 = vunpack.c.l.s4 1983009808
      %v2622 = vunpack.c.0.s8 %v2621
      %v2623 = vlaneseq
      %v2624 = vshrl.u32 %v2623, 7
      %v2625 = vsub.s32 %v2622, %v2624
      %v2626 = vrot.slane %v2595, %v2625
      %v2627 = vcombine.low %v2618, %v2626
      %v2628 = vcombine.high %v2618, %v2626
      %v2630 = vunpack.c.l.s4 1934713408
      %v2631 = vunpack.c.0.s8 %v2630
      %v2632 = vlaneseq
      %v2633 = vshrl.u32 %v2632, 7
      %v2634 = vsub.s32 %v2631, %v2633
      %v2635 = vrot.slane %v2627, %v2634
      %v2637 = vunpack.c.l.s4 1934713408
      %v2638 = vunpack.c.0.s8 %v2637
      %v2639 = vlaneseq
      %v2640 = vshrl.u32 %v2639, 7
      %v2641 = vsub.s32 %v2638, %v2640
      %v2642 = vrot.slane %v2628, %v2641
      %v2643 = vcombine.high %v2635, 0
      %v2644 = vcombine.high %v2642, 0
      %v2647 = vunpack.c.l.s4 1983009808
      %v2648 = vunpack.c.0.s8 %v2647
      %v2649 = vlaneseq
      %v2650 = vshrl.u32 %v2649, 7
      %v2651 = vsub.s32 %v2648, %v2650
      %v2652 = vrot.slane %v2592, %v2651
      %v2655 = vunpack.c.l.s4 1983009808
      %v2656 = vunpack.c.0.s8 %v2655
      %v2657 = vlaneseq
      %v2658 = vshrl.u32 %v2657, 7
      %v2659 = vsub.s32 %v2656, %v2658
      %v2660 = vrot.slane %v2598, %v2659
      %v2661 = vcombine.low %v2652, %v2660
      %v2662 = vcombine.high %v2652, %v2660
      %v2664 = vunpack.c.l.s4 1934713408
      %v2665 = vunpack.c.0.s8 %v2664
      %v2666 = vlaneseq
      %v2667 = vshrl.u32 %v2666, 7
      %v2668 = vsub.s32 %v2665, %v2667
      %v2669 = vrot.slane %v2661, %v2668
      %v2671 = vunpack.c.l.s4 1934713408
      %v2672 = vunpack.c.0.s8 %v2671
      %v2673 = vlaneseq
      %v2674 = vshrl.u32 %v2673, 7
      %v2675 = vsub.s32 %v2672, %v2674
      %v2676 = vrot.slane %v2662, %v2675
      %v2677 = vcombine.high %v2669, 0
      %v2678 = vcombine.high %v2676, 0
      %v2681 = vunpack.c.l.s4 1983009808
      %v2682 = vunpack.c.0.s8 %v2681
      %v2683 = vlaneseq
      %v2684 = vshrl.u32 %v2683, 7
      %v2685 = vsub.s32 %v2682, %v2684
      %v2686 = vrot.slane %v2601, %v2685
      %v2689 = vunpack.c.l.s4 1983009808
      %v2690 = vunpack.c.0.s8 %v2689
      %v2691 = vlaneseq
      %v2692 = vshrl.u32 %v2691, 7
      %v2693 = vsub.s32 %v2690, %v2692
      %v2694 = vrot.slane %v2607, %v2693
      %v2695 = vcombine.low %v2686, %v2694
      %v2696 = vcombine.high %v2686, %v2694
      %v2698 = vunpack.c.l.s4 1934713408
      %v2699 = vunpack.c.0.s8 %v2698
      %v2700 = vlaneseq
      %v2701 = vshrl.u32 %v2700, 7
      %v2702 = vsub.s32 %v2699, %v2701
      %v2703 = vrot.slane %v2695, %v2702
      %v2705 = vunpack.c.l.s4 1934713408
      %v2706 = vunpack.c.0.s8 %v2705
      %v2707 = vlaneseq
      %v2708 = vshrl.u32 %v2707, 7
      %v2709 = vsub.s32 %v2706, %v2708
      %v2710 = vrot.slane %v2696, %v2709
      %v2711 = vcombine.high %v2703, 0
      %v2712 = vcombine.high %v2710, 0
      %v2715 = vunpack.c.l.s4 1983009808
      %v2716 = vunpack.c.0.s8 %v2715
      %v2717 = vlaneseq
      %v2718 = vshrl.u32 %v2717, 7
      %v2719 = vsub.s32 %v2716, %v2718
      %v2720 = vrot.slane %v2604, %v2719
      %v2723 = vunpack.c.l.s4 1983009808
      %v2724 = vunpack.c.0.s8 %v2723
      %v2725 = vlaneseq
      %v2726 = vshrl.u32 %v2725, 7
      %v2727 = vsub.s32 %v2724, %v2726
      %v2728 = vrot.slane %v2610, %v2727
      %v2729 = vcombine.low %v2720, %v2728
      %v2730 = vcombine.high %v2720, %v2728
      %v2732 = vunpack.c.l.s4 1934713408
      %v2733 = vunpack.c.0.s8 %v2732
      %v2734 = vlaneseq
      %v2735 = vshrl.u32 %v2734, 7
      %v2736 = vsub.s32 %v2733, %v2735
      %v2737 = vrot.slane %v2729, %v2736
      %v2739 = vunpack.c.l.s4 1934713408
      %v2740 = vunpack.c.0.s8 %v2739
      %v2741 = vlaneseq
      %v2742 = vshrl.u32 %v2741, 7
      %v2743 = vsub.s32 %v2740, %v2742
      %v2744 = vrot.slane %v2730, %v2743
      %v2745 = vcombine.high %v2737, 0
      %v2746 = vcombine.high %v2744, 0
      %v2748 = vunpack.c.l.b16 %v2669
      %v2749 = vpack.c.b16 %v2748, %v2748
      %2750 = vrot.lane.b32.xlu0 %v2749, 16
      %v2751 = vpop.permute.xlu0 %2750
      %v2753 = vunpack.c.l.b16 %v2643
      %v2754 = vpack.c.b16 %v2753, %v2753
      %2755 = vrot.lane.b32.xlu0 %v2754, 32
      %v2756 = vpop.permute.xlu0 %2755
      %v2758 = vunpack.c.l.b16 %v2677
      %v2759 = vpack.c.b16 %v2758, %v2758
      %2760 = vrot.lane.b32.xlu0 %v2759, 48
      %v2761 = vpop.permute.xlu0 %2760
      %v2763 = vunpack.c.l.b16 %v2642
      %v2764 = vpack.c.b16 %v2763, %v2763
      %2765 = vrot.lane.b32.xlu0 %v2764, 64
      %v2766 = vpop.permute.xlu0 %2765
      %v2768 = vunpack.c.l.b16 %v2676
      %v2769 = vpack.c.b16 %v2768, %v2768
      %2770 = vrot.lane.b32.xlu0 %v2769, 80
      %v2771 = vpop.permute.xlu0 %2770
      %v2773 = vunpack.c.l.b16 %v2644
      %v2774 = vpack.c.b16 %v2773, %v2773
      %2775 = vrot.lane.b32.xlu0 %v2774, 96
      %v2776 = vpop.permute.xlu0 %2775
      %v2778 = vunpack.c.l.b16 %v2678
      %v2779 = vpack.c.b16 %v2778, %v2778
      %2780 = vrot.lane.b32.xlu0 %v2779, 112
      %v2781 = vpop.permute.xlu0 %2780
      %v2783 = vunpack.c.l.b16 %v2737
      %v2784 = vpack.c.b16 %v2783, %v2783
      %2785 = vrot.lane.b32.xlu0 %v2784, 16
      %v2786 = vpop.permute.xlu0 %2785
      %v2788 = vunpack.c.l.b16 %v2711
      %v2789 = vpack.c.b16 %v2788, %v2788
      %2790 = vrot.lane.b32.xlu0 %v2789, 32
      %v2791 = vpop.permute.xlu0 %2790
      %v2793 = vunpack.c.l.b16 %v2745
      %v2794 = vpack.c.b16 %v2793, %v2793
      %2795 = vrot.lane.b32.xlu0 %v2794, 48
      %v2796 = vpop.permute.xlu0 %2795
      %v2798 = vunpack.c.l.b16 %v2710
      %v2799 = vpack.c.b16 %v2798, %v2798
      %2800 = vrot.lane.b32.xlu0 %v2799, 64
      %v2801 = vpop.permute.xlu0 %2800
      %v2803 = vunpack.c.l.b16 %v2744
      %v2804 = vpack.c.b16 %v2803, %v2803
      %2805 = vrot.lane.b32.xlu0 %v2804, 80
      %v2806 = vpop.permute.xlu0 %2805
      %v2808 = vunpack.c.l.b16 %v2712
      %v2809 = vpack.c.b16 %v2808, %v2808
      %2810 = vrot.lane.b32.xlu0 %v2809, 96
      %v2811 = vpop.permute.xlu0 %2810
      %v2813 = vunpack.c.l.b16 %v2746
      %v2814 = vpack.c.b16 %v2813, %v2813
      %2815 = vrot.lane.b32.xlu0 %v2814, 112
      %v2816 = vpop.permute.xlu0 %2815
      %v2819 = vsel %vm838, %v2635, %v2751
      %v2821 = vsel %vm842, %v2819, %v2756
      %v2823 = vsel %vm845, %v2821, %v2761
      %v2825 = vsel %vm848, %v2823, %v2766
      %v2827 = vsel %vm851, %v2825, %v2771
      %v2829 = vsel %vm854, %v2827, %v2776
      %v2831 = vsel %vm857, %v2829, %v2781
      %v2834 = vsel %vm838, %v2703, %v2786
      %v2836 = vsel %vm842, %v2834, %v2791
      %v2838 = vsel %vm845, %v2836, %v2796
      %v2840 = vsel %vm848, %v2838, %v2801
      %v2842 = vsel %vm851, %v2840, %v2806
      %v2844 = vsel %vm854, %v2842, %v2811
      %v2846 = vsel %vm857, %v2844, %v2816
      %s2847 = scalar_lea.vmem %s1, 10
      %v2848 = vld [vmem:[%s2847] sm:$0x3]
      %v2850 = vsel %vm1162, %v2848, 0
      %v2852 = vsel %vm1166, %v2831, 0
      %v2854 = vsel %vm1166, %v2846, 0
      %2856 = vmatprep.subr.bf16.mxu0 0
      %2857 = vmatpush1.bf16.msra.mxu0 0
      %2858 = vmatprep.subr.bf16.mxu0 0
      %2859 = vmatpush1.bf16.msra.mxu0 0
      %2860 = vmatprep.subr.bf16.mxu0 0
      %2861 = vmatpush1.bf16.msra.mxu0 0
      %2862 = vmatprep.subr.bf16.mxu0 0
      %2863 = vmatpush1.bf16.msra.mxu0 0
      %2864 = vmatprep.subr.bf16.mxu0 0
      %2865 = vmatpush1.bf16.msra.mxu0 0
      %2866 = vmatprep.subr.bf16.mxu0 0
      %2867 = vmatpush1.bf16.msra.mxu0 0
      %2868 = vmatprep.subr.bf16.mxu0 0
      %2869 = vmatpush1.bf16.msra.mxu0 0
      %2870 = vmatprep.subr.bf16.mxu0 %v2854
      %2871 = vmatpush1.bf16.msra.mxu0 %v2852
      %2872 = vmatprep.subr.bf16.mxu0 0
      %2873 = vmatpush2.bf16.msra.mxu0 0
      %2874 = vmatprep.subr.bf16.mxu0 0
      %2875 = vmatpush2.bf16.msra.mxu0 0
      %2876 = vmatprep.subr.bf16.mxu0 0
      %2877 = vmatpush2.bf16.msra.mxu0 0
      %2878 = vmatprep.subr.bf16.mxu0 0
      %2879 = vmatpush2.bf16.msra.mxu0 0
      %2880 = vmatprep.subr.bf16.mxu0 0
      %2881 = vmatpush2.bf16.msra.mxu0 0
      %2882 = vmatprep.subr.bf16.mxu0 0
      %2883 = vmatpush2.bf16.msra.mxu0 0
      %2884 = vmatprep.subr.bf16.mxu0 0
      %2885 = vmatpush2.bf16.msra.mxu0 0
      %2886 = vmatprep.subr.bf16.mxu0 0
      %2887 = vmatpush2.bf16.msra.mxu0 0
      %2888 = vmatprep.mubr.bf16.mxu0 0
      %2889 = vmatmul.mubr.bf16.gmra.mxu0 %v2850
      %v2890 = vpop.f32.mrf.mxu0
      %v2891 = vadd.f32 0.0, %v2890
      %v2892 = vpop.f32.mrf.mxu0
      %v2893 = vadd.f32 0.0, %v2892
      %v2894 = vpop.f32.mrf.mxu0
      %v2895 = vpop.f32.mrf.mxu0
      %2896 = vdwg.mxu0
      %v2897 = vadd.f32 %v2461, %v2891
      %v2898 = vadd.f32 %v2462, %v2893
      %v2899 = vld [vmem:[#allocation2] sm:$0xe]
      %v2900 = vld [vmem:[#allocation2 + $0x4] sm:$0xf]
      %v2901 = vld [vmem:[#allocation2 + $0x8] sm:$0x1]
      %v2902 = vld [vmem:[#allocation2 + $0xc] sm:$0xe]
      %v2903 = vld [vmem:[#allocation2 + $0x10] sm:$0xf]
      %v2904 = vld [vmem:[#allocation2 + $0x14] sm:$0x1]
      %v2905 = vld [vmem:[#allocation2 + $0x18] sm:$0xe]
      %v2906 = vld [vmem:[#allocation2 + $0x1c] sm:$0xf]
      %v2907 = vld [vmem:[#allocation2 + $0x20] sm:$0x1]
      %v2908 = vld [vmem:[#allocation2 + $0x24] sm:$0xe]
      %v2909 = vld [vmem:[#allocation2 + $0x28] sm:$0xf]
      %v2910 = vld [vmem:[#allocation2 + $0x2c] sm:$0x1]
      %vm2923 = vcmask 1042432
      %vm2924 = vcmask 1046532
      %vm2925 = vmor %vm2923, %vm2924
      %v2926 = vrot.slane %v2899, 5
      %v2927 = vrot.slane %v2926, 4
      %v2928 = vrot.slane %v2900, 5
      %v2929 = vsel %vm2925, %v2927, %v2928
      %v2930 = vrot.slane %v2928, 4
      %v2931 = vrot.slane %v2901, 5
      %v2932 = vsel %vm2925, %v2930, %v2931
      %v2933 = vrot.slane %v2902, 5
      %v2934 = vrot.slane %v2933, 4
      %v2935 = vrot.slane %v2903, 5
      %v2936 = vsel %vm2925, %v2934, %v2935
      %v2937 = vrot.slane %v2935, 4
      %v2938 = vrot.slane %v2904, 5
      %v2939 = vsel %vm2925, %v2937, %v2938
      %v2940 = vrot.slane %v2905, 5
      %v2941 = vrot.slane %v2940, 4
      %v2942 = vrot.slane %v2906, 5
      %v2943 = vsel %vm2925, %v2941, %v2942
      %v2944 = vrot.slane %v2942, 4
      %v2945 = vrot.slane %v2907, 5
      %v2946 = vsel %vm2925, %v2944, %v2945
      %v2947 = vrot.slane %v2908, 5
      %v2948 = vrot.slane %v2947, 4
      %v2949 = vrot.slane %v2909, 5
      %v2950 = vsel %vm2925, %v2948, %v2949
      %v2951 = vrot.slane %v2949, 4
      %v2952 = vrot.slane %v2910, 5
      %v2953 = vsel %vm2925, %v2951, %v2952
      %v2956 = vpack.i.b16 %v2936, %v2929
      %v2957 = vshrl.u32 %v2929, 16
      %v2958 = vshrl.u32 %v2936, 16
      %v2959 = vpack.i.b16 %v2958, %v2957
      %v2962 = vpack.i.b16 %v2950, %v2943
      %v2963 = vshrl.u32 %v2943, 16
      %v2964 = vshrl.u32 %v2950, 16
      %v2965 = vpack.i.b16 %v2964, %v2963
      %v2968 = vpack.i.b16 %v2939, %v2932
      %v2969 = vshrl.u32 %v2932, 16
      %v2970 = vshrl.u32 %v2939, 16
      %v2971 = vpack.i.b16 %v2970, %v2969
      %v2974 = vpack.i.b16 %v2953, %v2946
      %v2975 = vshrl.u32 %v2946, 16
      %v2976 = vshrl.u32 %v2953, 16
      %v2977 = vpack.i.b16 %v2976, %v2975
      %v2980 = vunpack.c.l.s4 1983009808
      %v2981 = vunpack.c.0.s8 %v2980
      %v2982 = vlaneseq
      %v2983 = vshrl.u32 %v2982, 7
      %v2984 = vsub.s32 %v2981, %v2983
      %v2985 = vrot.slane %v2956, %v2984
      %v2988 = vunpack.c.l.s4 1983009808
      %v2989 = vunpack.c.0.s8 %v2988
      %v2990 = vlaneseq
      %v2991 = vshrl.u32 %v2990, 7
      %v2992 = vsub.s32 %v2989, %v2991
      %v2993 = vrot.slane %v2962, %v2992
      %v2994 = vcombine.low %v2985, %v2993
      %v2995 = vcombine.high %v2985, %v2993
      %v2997 = vunpack.c.l.s4 1934713408
      %v2998 = vunpack.c.0.s8 %v2997
      %v2999 = vlaneseq
      %v3000 = vshrl.u32 %v2999, 7
      %v3001 = vsub.s32 %v2998, %v3000
      %v3002 = vrot.slane %v2994, %v3001
      %v3004 = vunpack.c.l.s4 1934713408
      %v3005 = vunpack.c.0.s8 %v3004
      %v3006 = vlaneseq
      %v3007 = vshrl.u32 %v3006, 7
      %v3008 = vsub.s32 %v3005, %v3007
      %v3009 = vrot.slane %v2995, %v3008
      %v3010 = vcombine.high %v3002, 0
      %v3011 = vcombine.high %v3009, 0
      %v3014 = vunpack.c.l.s4 1983009808
      %v3015 = vunpack.c.0.s8 %v3014
      %v3016 = vlaneseq
      %v3017 = vshrl.u32 %v3016, 7
      %v3018 = vsub.s32 %v3015, %v3017
      %v3019 = vrot.slane %v2959, %v3018
      %v3022 = vunpack.c.l.s4 1983009808
      %v3023 = vunpack.c.0.s8 %v3022
      %v3024 = vlaneseq
      %v3025 = vshrl.u32 %v3024, 7
      %v3026 = vsub.s32 %v3023, %v3025
      %v3027 = vrot.slane %v2965, %v3026
      %v3028 = vcombine.low %v3019, %v3027
      %v3029 = vcombine.high %v3019, %v3027
      %v3031 = vunpack.c.l.s4 1934713408
      %v3032 = vunpack.c.0.s8 %v3031
      %v3033 = vlaneseq
      %v3034 = vshrl.u32 %v3033, 7
      %v3035 = vsub.s32 %v3032, %v3034
      %v3036 = vrot.slane %v3028, %v3035
      %v3038 = vunpack.c.l.s4 1934713408
      %v3039 = vunpack.c.0.s8 %v3038
      %v3040 = vlaneseq
      %v3041 = vshrl.u32 %v3040, 7
      %v3042 = vsub.s32 %v3039, %v3041
      %v3043 = vrot.slane %v3029, %v3042
      %v3044 = vcombine.high %v3036, 0
      %v3045 = vcombine.high %v3043, 0
      %v3048 = vunpack.c.l.s4 1983009808
      %v3049 = vunpack.c.0.s8 %v3048
      %v3050 = vlaneseq
      %v3051 = vshrl.u32 %v3050, 7
      %v3052 = vsub.s32 %v3049, %v3051
      %v3053 = vrot.slane %v2968, %v3052
      %v3056 = vunpack.c.l.s4 1983009808
      %v3057 = vunpack.c.0.s8 %v3056
      %v3058 = vlaneseq
      %v3059 = vshrl.u32 %v3058, 7
      %v3060 = vsub.s32 %v3057, %v3059
      %v3061 = vrot.slane %v2974, %v3060
      %v3062 = vcombine.low %v3053, %v3061
      %v3063 = vcombine.high %v3053, %v3061
      %v3065 = vunpack.c.l.s4 1934713408
      %v3066 = vunpack.c.0.s8 %v3065
      %v3067 = vlaneseq
      %v3068 = vshrl.u32 %v3067, 7
      %v3069 = vsub.s32 %v3066, %v3068
      %v3070 = vrot.slane %v3062, %v3069
      %v3072 = vunpack.c.l.s4 1934713408
      %v3073 = vunpack.c.0.s8 %v3072
      %v3074 = vlaneseq
      %v3075 = vshrl.u32 %v3074, 7
      %v3076 = vsub.s32 %v3073, %v3075
      %v3077 = vrot.slane %v3063, %v3076
      %v3078 = vcombine.high %v3070, 0
      %v3079 = vcombine.high %v3077, 0
      %v3082 = vunpack.c.l.s4 1983009808
      %v3083 = vunpack.c.0.s8 %v3082
      %v3084 = vlaneseq
      %v3085 = vshrl.u32 %v3084, 7
      %v3086 = vsub.s32 %v3083, %v3085
      %v3087 = vrot.slane %v2971, %v3086
      %v3090 = vunpack.c.l.s4 1983009808
      %v3091 = vunpack.c.0.s8 %v3090
      %v3092 = vlaneseq
      %v3093 = vshrl.u32 %v3092, 7
      %v3094 = vsub.s32 %v3091, %v3093
      %v3095 = vrot.slane %v2977, %v3094
      %v3096 = vcombine.low %v3087, %v3095
      %v3097 = vcombine.high %v3087, %v3095
      %v3099 = vunpack.c.l.s4 1934713408
      %v3100 = vunpack.c.0.s8 %v3099
      %v3101 = vlaneseq
      %v3102 = vshrl.u32 %v3101, 7
      %v3103 = vsub.s32 %v3100, %v3102
      %v3104 = vrot.slane %v3096, %v3103
      %v3106 = vunpack.c.l.s4 1934713408
      %v3107 = vunpack.c.0.s8 %v3106
      %v3108 = vlaneseq
      %v3109 = vshrl.u32 %v3108, 7
      %v3110 = vsub.s32 %v3107, %v3109
      %v3111 = vrot.slane %v3097, %v3110
      %v3112 = vcombine.high %v3104, 0
      %v3113 = vcombine.high %v3111, 0
      %v3115 = vunpack.c.l.b16 %v3036
      %v3116 = vpack.c.b16 %v3115, %v3115
      %3117 = vrot.lane.b32.xlu0 %v3116, 16
      %v3118 = vpop.permute.xlu0 %3117
      %v3120 = vunpack.c.l.b16 %v3010
      %v3121 = vpack.c.b16 %v3120, %v3120
      %3122 = vrot.lane.b32.xlu0 %v3121, 32
      %v3123 = vpop.permute.xlu0 %3122
      %v3125 = vunpack.c.l.b16 %v3044
      %v3126 = vpack.c.b16 %v3125, %v3125
      %3127 = vrot.lane.b32.xlu0 %v3126, 48
      %v3128 = vpop.permute.xlu0 %3127
      %v3130 = vunpack.c.l.b16 %v3009
      %v3131 = vpack.c.b16 %v3130, %v3130
      %3132 = vrot.lane.b32.xlu0 %v3131, 64
      %v3133 = vpop.permute.xlu0 %3132
      %v3135 = vunpack.c.l.b16 %v3043
      %v3136 = vpack.c.b16 %v3135, %v3135
      %3137 = vrot.lane.b32.xlu0 %v3136, 80
      %v3138 = vpop.permute.xlu0 %3137
      %v3140 = vunpack.c.l.b16 %v3011
      %v3141 = vpack.c.b16 %v3140, %v3140
      %3142 = vrot.lane.b32.xlu0 %v3141, 96
      %v3143 = vpop.permute.xlu0 %3142
      %v3145 = vunpack.c.l.b16 %v3045
      %v3146 = vpack.c.b16 %v3145, %v3145
      %3147 = vrot.lane.b32.xlu0 %v3146, 112
      %v3148 = vpop.permute.xlu0 %3147
      %v3150 = vunpack.c.l.b16 %v3104
      %v3151 = vpack.c.b16 %v3150, %v3150
      %3152 = vrot.lane.b32.xlu0 %v3151, 16
      %v3153 = vpop.permute.xlu0 %3152
      %v3155 = vunpack.c.l.b16 %v3078
      %v3156 = vpack.c.b16 %v3155, %v3155
      %3157 = vrot.lane.b32.xlu0 %v3156, 32
      %v3158 = vpop.permute.xlu0 %3157
      %v3160 = vunpack.c.l.b16 %v3112
      %v3161 = vpack.c.b16 %v3160, %v3160
      %3162 = vrot.lane.b32.xlu0 %v3161, 48
      %v3163 = vpop.permute.xlu0 %3162
      %v3165 = vunpack.c.l.b16 %v3077
      %v3166 = vpack.c.b16 %v3165, %v3165
      %3167 = vrot.lane.b32.xlu0 %v3166, 64
      %v3168 = vpop.permute.xlu0 %3167
      %v3170 = vunpack.c.l.b16 %v3111
      %v3171 = vpack.c.b16 %v3170, %v3170
      %3172 = vrot.lane.b32.xlu0 %v3171, 80
      %v3173 = vpop.permute.xlu0 %3172
      %v3175 = vunpack.c.l.b16 %v3079
      %v3176 = vpack.c.b16 %v3175, %v3175
      %3177 = vrot.lane.b32.xlu0 %v3176, 96
      %v3178 = vpop.permute.xlu0 %3177
      %v3180 = vunpack.c.l.b16 %v3113
      %v3181 = vpack.c.b16 %v3180, %v3180
      %3182 = vrot.lane.b32.xlu0 %v3181, 112
      %v3183 = vpop.permute.xlu0 %3182
      %v3186 = vsel %vm838, %v3002, %v3118
      %v3188 = vsel %vm842, %v3186, %v3123
      %v3190 = vsel %vm845, %v3188, %v3128
      %v3192 = vsel %vm848, %v3190, %v3133
      %v3194 = vsel %vm851, %v3192, %v3138
      %v3196 = vsel %vm854, %v3194, %v3143
      %v3198 = vsel %vm857, %v3196, %v3148
      %v3201 = vsel %vm838, %v3070, %v3153
      %v3203 = vsel %vm842, %v3201, %v3158
      %v3205 = vsel %vm845, %v3203, %v3163
      %v3207 = vsel %vm848, %v3205, %v3168
      %v3209 = vsel %vm851, %v3207, %v3173
      %v3211 = vsel %vm854, %v3209, %v3178
      %v3213 = vsel %vm857, %v3211, %v3183
      %s3214 = scalar_lea.vmem %s1, 12
      %v3215 = vld [vmem:[%s3214] sm:$0x3]
      %v3217 = vsel %vm1162, %v3215, 0
      %v3219 = vsel %vm1166, %v3198, 0
      %v3221 = vsel %vm1166, %v3213, 0
      %3223 = vmatprep.subr.bf16.mxu0 0
      %3224 = vmatpush1.bf16.msra.mxu0 0
      %3225 = vmatprep.subr.bf16.mxu0 0
      %3226 = vmatpush1.bf16.msra.mxu0 0
      %3227 = vmatprep.subr.bf16.mxu0 0
      %3228 = vmatpush1.bf16.msra.mxu0 0
      %3229 = vmatprep.subr.bf16.mxu0 0
      %3230 = vmatpush1.bf16.msra.mxu0 0
      %3231 = vmatprep.subr.bf16.mxu0 0
      %3232 = vmatpush1.bf16.msra.mxu0 0
      %3233 = vmatprep.subr.bf16.mxu0 0
      %3234 = vmatpush1.bf16.msra.mxu0 0
      %3235 = vmatprep.subr.bf16.mxu0 0
      %3236 = vmatpush1.bf16.msra.mxu0 0
      %3237 = vmatprep.subr.bf16.mxu0 %v3221
      %3238 = vmatpush1.bf16.msra.mxu0 %v3219
      %3239 = vmatprep.subr.bf16.mxu0 0
      %3240 = vmatpush2.bf16.msra.mxu0 0
      %3241 = vmatprep.subr.bf16.mxu0 0
      %3242 = vmatpush2.bf16.msra.mxu0 0
      %3243 = vmatprep.subr.bf16.mxu0 0
      %3244 = vmatpush2.bf16.msra.mxu0 0
      %3245 = vmatprep.subr.bf16.mxu0 0
      %3246 = vmatpush2.bf16.msra.mxu0 0
      %3247 = vmatprep.subr.bf16.mxu0 0
      %3248 = vmatpush2.bf16.msra.mxu0 0
      %3249 = vmatprep.subr.bf16.mxu0 0
      %3250 = vmatpush2.bf16.msra.mxu0 0
      %3251 = vmatprep.subr.bf16.mxu0 0
      %3252 = vmatpush2.bf16.msra.mxu0 0
      %3253 = vmatprep.subr.bf16.mxu0 0
      %3254 = vmatpush2.bf16.msra.mxu0 0
      %3255 = vmatprep.mubr.bf16.mxu0 0
      %3256 = vmatmul.mubr.bf16.gmra.mxu0 %v3217
      %v3257 = vpop.f32.mrf.mxu0
      %v3258 = vadd.f32 0.0, %v3257
      %v3259 = vpop.f32.mrf.mxu0
      %v3260 = vadd.f32 0.0, %v3259
      %v3261 = vpop.f32.mrf.mxu0
      %v3262 = vpop.f32.mrf.mxu0
      %3263 = vdwg.mxu0
      %v3264 = vadd.f32 %v2897, %v3258
      %v3265 = vadd.f32 %v2898, %v3260
      %v3266 = vld [vmem:[#allocation2] sm:$0xe]
      %v3267 = vld [vmem:[#allocation2 + $0x4] sm:$0xf]
      %v3268 = vld [vmem:[#allocation2 + $0x8] sm:$0x1]
      %v3269 = vld [vmem:[#allocation2 + $0xc] sm:$0xe]
      %v3270 = vld [vmem:[#allocation2 + $0x10] sm:$0xf]
      %v3271 = vld [vmem:[#allocation2 + $0x14] sm:$0x1]
      %v3272 = vld [vmem:[#allocation2 + $0x18] sm:$0xe]
      %v3273 = vld [vmem:[#allocation2 + $0x1c] sm:$0xf]
      %v3274 = vld [vmem:[#allocation2 + $0x20] sm:$0x1]
      %v3275 = vld [vmem:[#allocation2 + $0x24] sm:$0xe]
      %v3276 = vld [vmem:[#allocation2 + $0x28] sm:$0xf]
      %v3277 = vld [vmem:[#allocation2 + $0x2c] sm:$0x1]
      %v3290 = vrot.slane %v3266, 5
      %v3291 = vrot.slane %v3290, 4
      %v3292 = vrot.slane %v3267, 5
      %v3293 = vsel %vm2925, %v3291, %v3292
      %v3294 = vrot.slane %v3292, 4
      %v3295 = vrot.slane %v3268, 5
      %v3296 = vsel %vm2925, %v3294, %v3295
      %v3297 = vrot.slane %v3269, 5
      %v3298 = vrot.slane %v3297, 4
      %v3299 = vrot.slane %v3270, 5
      %v3300 = vsel %vm2925, %v3298, %v3299
      %v3301 = vrot.slane %v3299, 4
      %v3302 = vrot.slane %v3271, 5
      %v3303 = vsel %vm2925, %v3301, %v3302
      %v3304 = vrot.slane %v3272, 5
      %v3305 = vrot.slane %v3304, 4
      %v3306 = vrot.slane %v3273, 5
      %v3307 = vsel %vm2925, %v3305, %v3306
      %v3308 = vrot.slane %v3306, 4
      %v3309 = vrot.slane %v3274, 5
      %v3310 = vsel %vm2925, %v3308, %v3309
      %v3311 = vrot.slane %v3275, 5
      %v3312 = vrot.slane %v3311, 4
      %v3313 = vrot.slane %v3276, 5
      %v3314 = vsel %vm2925, %v3312, %v3313
      %v3315 = vrot.slane %v3313, 4
      %v3316 = vrot.slane %v3277, 5
      %v3317 = vsel %vm2925, %v3315, %v3316
      %3318 = vrot.lane.b32.xlu0 %v3293, 127
      %v3319 = vpop.permute.xlu0 %3318
      %3320 = vrot.lane.b32.xlu0 %v3296, 127
      %v3321 = vpop.permute.xlu0 %3320
      %3322 = vrot.lane.b32.xlu0 %v3300, 127
      %v3323 = vpop.permute.xlu0 %3322
      %3324 = vrot.lane.b32.xlu0 %v3303, 127
      %v3325 = vpop.permute.xlu0 %3324
      %3326 = vrot.lane.b32.xlu0 %v3307, 127
      %v3327 = vpop.permute.xlu0 %3326
      %3328 = vrot.lane.b32.xlu0 %v3310, 127
      %v3329 = vpop.permute.xlu0 %3328
      %3330 = vrot.lane.b32.xlu0 %v3314, 127
      %v3331 = vpop.permute.xlu0 %3330
      %3332 = vrot.lane.b32.xlu0 %v3317, 127
      %v3333 = vpop.permute.xlu0 %3332
      %v3336 = vpack.i.b16 %v3323, %v3319
      %v3337 = vshrl.u32 %v3319, 16
      %v3338 = vshrl.u32 %v3323, 16
      %v3339 = vpack.i.b16 %v3338, %v3337
      %v3342 = vpack.i.b16 %v3331, %v3327
      %v3343 = vshrl.u32 %v3327, 16
      %v3344 = vshrl.u32 %v3331, 16
      %v3345 = vpack.i.b16 %v3344, %v3343
      %v3348 = vpack.i.b16 %v3325, %v3321
      %v3349 = vshrl.u32 %v3321, 16
      %v3350 = vshrl.u32 %v3325, 16
      %v3351 = vpack.i.b16 %v3350, %v3349
      %v3354 = vpack.i.b16 %v3333, %v3329
      %v3355 = vshrl.u32 %v3329, 16
      %v3356 = vshrl.u32 %v3333, 16
      %v3357 = vpack.i.b16 %v3356, %v3355
      %v3360 = vunpack.c.l.s4 1983009808
      %v3361 = vunpack.c.0.s8 %v3360
      %v3362 = vlaneseq
      %v3363 = vshrl.u32 %v3362, 7
      %v3364 = vsub.s32 %v3361, %v3363
      %v3365 = vrot.slane %v3336, %v3364
      %v3368 = vunpack.c.l.s4 1983009808
      %v3369 = vunpack.c.0.s8 %v3368
      %v3370 = vlaneseq
      %v3371 = vshrl.u32 %v3370, 7
      %v3372 = vsub.s32 %v3369, %v3371
      %v3373 = vrot.slane %v3342, %v3372
      %v3374 = vcombine.low %v3365, %v3373
      %v3375 = vcombine.high %v3365, %v3373
      %v3377 = vunpack.c.l.s4 1934713408
      %v3378 = vunpack.c.0.s8 %v3377
      %v3379 = vlaneseq
      %v3380 = vshrl.u32 %v3379, 7
      %v3381 = vsub.s32 %v3378, %v3380
      %v3382 = vrot.slane %v3374, %v3381
      %v3384 = vunpack.c.l.s4 1934713408
      %v3385 = vunpack.c.0.s8 %v3384
      %v3386 = vlaneseq
      %v3387 = vshrl.u32 %v3386, 7
      %v3388 = vsub.s32 %v3385, %v3387
      %v3389 = vrot.slane %v3375, %v3388
      %v3390 = vcombine.high %v3382, 0
      %v3391 = vcombine.high %v3389, 0
      %v3394 = vunpack.c.l.s4 1983009808
      %v3395 = vunpack.c.0.s8 %v3394
      %v3396 = vlaneseq
      %v3397 = vshrl.u32 %v3396, 7
      %v3398 = vsub.s32 %v3395, %v3397
      %v3399 = vrot.slane %v3339, %v3398
      %v3402 = vunpack.c.l.s4 1983009808
      %v3403 = vunpack.c.0.s8 %v3402
      %v3404 = vlaneseq
      %v3405 = vshrl.u32 %v3404, 7
      %v3406 = vsub.s32 %v3403, %v3405
      %v3407 = vrot.slane %v3345, %v3406
      %v3408 = vcombine.low %v3399, %v3407
      %v3409 = vcombine.high %v3399, %v3407
      %v3411 = vunpack.c.l.s4 1934713408
      %v3412 = vunpack.c.0.s8 %v3411
      %v3413 = vlaneseq
      %v3414 = vshrl.u32 %v3413, 7
      %v3415 = vsub.s32 %v3412, %v3414
      %v3416 = vrot.slane %v3408, %v3415
      %v3418 = vunpack.c.l.s4 1934713408
      %v3419 = vunpack.c.0.s8 %v3418
      %v3420 = vlaneseq
      %v3421 = vshrl.u32 %v3420, 7
      %v3422 = vsub.s32 %v3419, %v3421
      %v3423 = vrot.slane %v3409, %v3422
      %v3424 = vcombine.high %v3416, 0
      %v3425 = vcombine.high %v3423, 0
      %v3428 = vunpack.c.l.s4 1983009808
      %v3429 = vunpack.c.0.s8 %v3428
      %v3430 = vlaneseq
      %v3431 = vshrl.u32 %v3430, 7
      %v3432 = vsub.s32 %v3429, %v3431
      %v3433 = vrot.slane %v3348, %v3432
      %v3436 = vunpack.c.l.s4 1983009808
      %v3437 = vunpack.c.0.s8 %v3436
      %v3438 = vlaneseq
      %v3439 = vshrl.u32 %v3438, 7
      %v3440 = vsub.s32 %v3437, %v3439
      %v3441 = vrot.slane %v3354, %v3440
      %v3442 = vcombine.low %v3433, %v3441
      %v3443 = vcombine.high %v3433, %v3441
      %v3445 = vunpack.c.l.s4 1934713408
      %v3446 = vunpack.c.0.s8 %v3445
      %v3447 = vlaneseq
      %v3448 = vshrl.u32 %v3447, 7
      %v3449 = vsub.s32 %v3446, %v3448
      %v3450 = vrot.slane %v3442, %v3449
      %v3452 = vunpack.c.l.s4 1934713408
      %v3453 = vunpack.c.0.s8 %v3452
      %v3454 = vlaneseq
      %v3455 = vshrl.u32 %v3454, 7
      %v3456 = vsub.s32 %v3453, %v3455
      %v3457 = vrot.slane %v3443, %v3456
      %v3458 = vcombine.high %v3450, 0
      %v3459 = vcombine.high %v3457, 0
      %v3462 = vunpack.c.l.s4 1983009808
      %v3463 = vunpack.c.0.s8 %v3462
      %v3464 = vlaneseq
      %v3465 = vshrl.u32 %v3464, 7
      %v3466 = vsub.s32 %v3463, %v3465
      %v3467 = vrot.slane %v3351, %v3466
      %v3470 = vunpack.c.l.s4 1983009808
      %v3471 = vunpack.c.0.s8 %v3470
      %v3472 = vlaneseq
      %v3473 = vshrl.u32 %v3472, 7
      %v3474 = vsub.s32 %v3471, %v3473
      %v3475 = vrot.slane %v3357, %v3474
      %v3476 = vcombine.low %v3467, %v3475
      %v3477 = vcombine.high %v3467, %v3475
      %v3479 = vunpack.c.l.s4 1934713408
      %v3480 = vunpack.c.0.s8 %v3479
      %v3481 = vlaneseq
      %v3482 = vshrl.u32 %v3481, 7
      %v3483 = vsub.s32 %v3480, %v3482
      %v3484 = vrot.slane %v3476, %v3483
      %v3486 = vunpack.c.l.s4 1934713408
      %v3487 = vunpack.c.0.s8 %v3486
      %v3488 = vlaneseq
      %v3489 = vshrl.u32 %v3488, 7
      %v3490 = vsub.s32 %v3487, %v3489
      %v3491 = vrot.slane %v3477, %v3490
      %v3492 = vcombine.high %v3484, 0
      %v3493 = vcombine.high %v3491, 0
      %v3495 = vunpack.c.l.b16 %v3416
      %v3496 = vpack.c.b16 %v3495, %v3495
      %3497 = vrot.lane.b32.xlu0 %v3496, 16
      %v3498 = vpop.permute.xlu0 %3497
      %v3500 = vunpack.c.l.b16 %v3390
      %v3501 = vpack.c.b16 %v3500, %v3500
      %3502 = vrot.lane.b32.xlu0 %v3501, 32
      %v3503 = vpop.permute.xlu0 %3502
      %v3505 = vunpack.c.l.b16 %v3424
      %v3506 = vpack.c.b16 %v3505, %v3505
      %3507 = vrot.lane.b32.xlu0 %v3506, 48
      %v3508 = vpop.permute.xlu0 %3507
      %v3510 = vunpack.c.l.b16 %v3389
      %v3511 = vpack.c.b16 %v3510, %v3510
      %3512 = vrot.lane.b32.xlu0 %v3511, 64
      %v3513 = vpop.permute.xlu0 %3512
      %v3515 = vunpack.c.l.b16 %v3423
      %v3516 = vpack.c.b16 %v3515, %v3515
      %3517 = vrot.lane.b32.xlu0 %v3516, 80
      %v3518 = vpop.permute.xlu0 %3517
      %v3520 = vunpack.c.l.b16 %v3391
      %v3521 = vpack.c.b16 %v3520, %v3520
      %3522 = vrot.lane.b32.xlu0 %v3521, 96
      %v3523 = vpop.permute.xlu0 %3522
      %v3525 = vunpack.c.l.b16 %v3425
      %v3526 = vpack.c.b16 %v3525, %v3525
      %3527 = vrot.lane.b32.xlu0 %v3526, 112
      %v3528 = vpop.permute.xlu0 %3527
      %v3530 = vunpack.c.l.b16 %v3484
      %v3531 = vpack.c.b16 %v3530, %v3530
      %3532 = vrot.lane.b32.xlu0 %v3531, 16
      %v3533 = vpop.permute.xlu0 %3532
      %v3535 = vunpack.c.l.b16 %v3458
      %v3536 = vpack.c.b16 %v3535, %v3535
      %3537 = vrot.lane.b32.xlu0 %v3536, 32
      %v3538 = vpop.permute.xlu0 %3537
      %v3540 = vunpack.c.l.b16 %v3492
      %v3541 = vpack.c.b16 %v3540, %v3540
      %3542 = vrot.lane.b32.xlu0 %v3541, 48
      %v3543 = vpop.permute.xlu0 %3542
      %v3545 = vunpack.c.l.b16 %v3457
      %v3546 = vpack.c.b16 %v3545, %v3545
      %3547 = vrot.lane.b32.xlu0 %v3546, 64
      %v3548 = vpop.permute.xlu0 %3547
      %v3550 = vunpack.c.l.b16 %v3491
      %v3551 = vpack.c.b16 %v3550, %v3550
      %3552 = vrot.lane.b32.xlu0 %v3551, 80
      %v3553 = vpop.permute.xlu0 %3552
      %v3555 = vunpack.c.l.b16 %v3459
      %v3556 = vpack.c.b16 %v3555, %v3555
      %3557 = vrot.lane.b32.xlu0 %v3556, 96
      %v3558 = vpop.permute.xlu0 %3557
      %v3560 = vunpack.c.l.b16 %v3493
      %v3561 = vpack.c.b16 %v3560, %v3560
      %3562 = vrot.lane.b32.xlu0 %v3561, 112
      %v3563 = vpop.permute.xlu0 %3562
      %v3566 = vsel %vm838, %v3382, %v3498
      %v3568 = vsel %vm842, %v3566, %v3503
      %v3570 = vsel %vm845, %v3568, %v3508
      %v3572 = vsel %vm848, %v3570, %v3513
      %v3574 = vsel %vm851, %v3572, %v3518
      %v3576 = vsel %vm854, %v3574, %v3523
      %v3578 = vsel %vm857, %v3576, %v3528
      %v3581 = vsel %vm838, %v3450, %v3533
      %v3583 = vsel %vm842, %v3581, %v3538
      %v3585 = vsel %vm845, %v3583, %v3543
      %v3587 = vsel %vm848, %v3585, %v3548
      %v3589 = vsel %vm851, %v3587, %v3553
      %v3591 = vsel %vm854, %v3589, %v3558
      %v3593 = vsel %vm857, %v3591, %v3563
      %s3594 = scalar_lea.vmem %s1, 14
      %v3595 = vld [vmem:[%s3594] sm:$0x3]
      %v3597 = vsel %vm1162, %v3595, 0
      %v3599 = vsel %vm1166, %v3578, 0
      %v3601 = vsel %vm1166, %v3593, 0
      %3603 = vmatprep.subr.bf16.mxu0 0
      %3604 = vmatpush1.bf16.msra.mxu0 0
      %3605 = vmatprep.subr.bf16.mxu0 0
      %3606 = vmatpush1.bf16.msra.mxu0 0
      %3607 = vmatprep.subr.bf16.mxu0 0
      %3608 = vmatpush1.bf16.msra.mxu0 0
      %3609 = vmatprep.subr.bf16.mxu0 0
      %3610 = vmatpush1.bf16.msra.mxu0 0
      %3611 = vmatprep.subr.bf16.mxu0 0
      %3612 = vmatpush1.bf16.msra.mxu0 0
      %3613 = vmatprep.subr.bf16.mxu0 0
      %3614 = vmatpush1.bf16.msra.mxu0 0
      %3615 = vmatprep.subr.bf16.mxu0 0
      %3616 = vmatpush1.bf16.msra.mxu0 0
      %3617 = vmatprep.subr.bf16.mxu0 %v3601
      %3618 = vmatpush1.bf16.msra.mxu0 %v3599
      %3619 = vmatprep.subr.bf16.mxu0 0
      %3620 = vmatpush2.bf16.msra.mxu0 0
      %3621 = vmatprep.subr.bf16.mxu0 0
      %3622 = vmatpush2.bf16.msra.mxu0 0
      %3623 = vmatprep.subr.bf16.mxu0 0
      %3624 = vmatpush2.bf16.msra.mxu0 0
      %3625 = vmatprep.subr.bf16.mxu0 0
      %3626 = vmatpush2.bf16.msra.mxu0 0
      %3627 = vmatprep.subr.bf16.mxu0 0
      %3628 = vmatpush2.bf16.msra.mxu0 0
      %3629 = vmatprep.subr.bf16.mxu0 0
      %3630 = vmatpush2.bf16.msra.mxu0 0
      %3631 = vmatprep.subr.bf16.mxu0 0
      %3632 = vmatpush2.bf16.msra.mxu0 0
      %3633 = vmatprep.subr.bf16.mxu0 0
      %3634 = vmatpush2.bf16.msra.mxu0 0
      %3635 = vmatprep.mubr.bf16.mxu0 0
      %3636 = vmatmul.mubr.bf16.gmra.mxu0 %v3597
      %v3637 = vpop.f32.mrf.mxu0
      %v3638 = vadd.f32 0.0, %v3637
      %v3639 = vpop.f32.mrf.mxu0
      %v3640 = vadd.f32 0.0, %v3639
      %v3641 = vpop.f32.mrf.mxu0
      %v3642 = vpop.f32.mrf.mxu0
      %3643 = vdwg.mxu0
      %v3644 = vadd.f32 %v3264, %v3638
      %v3645 = vadd.f32 %v3265, %v3640
      %v3646 = vld [vmem:[#allocation2] sm:$0xe]
      %v3647 = vld [vmem:[#allocation2 + $0x4] sm:$0xf]
      %v3648 = vld [vmem:[#allocation2 + $0x8] sm:$0x1]
      %v3649 = vld [vmem:[#allocation2 + $0xc] sm:$0xe]
      %v3650 = vld [vmem:[#allocation2 + $0x10] sm:$0xf]
      %v3651 = vld [vmem:[#allocation2 + $0x14] sm:$0x1]
      %v3652 = vld [vmem:[#allocation2 + $0x18] sm:$0xe]
      %v3653 = vld [vmem:[#allocation2 + $0x1c] sm:$0xf]
      %v3654 = vld [vmem:[#allocation2 + $0x20] sm:$0x1]
      %v3655 = vld [vmem:[#allocation2 + $0x24] sm:$0xe]
      %v3656 = vld [vmem:[#allocation2 + $0x28] sm:$0xf]
      %v3657 = vld [vmem:[#allocation2 + $0x2c] sm:$0x1]
      %v3670 = vrot.slane %v3646, 5
      %v3671 = vrot.slane %v3670, 4
      %v3672 = vrot.slane %v3647, 5
      %v3673 = vsel %vm2925, %v3671, %v3672
      %v3674 = vrot.slane %v3672, 4
      %v3675 = vrot.slane %v3648, 5
      %v3676 = vsel %vm2925, %v3674, %v3675
      %v3677 = vrot.slane %v3649, 5
      %v3678 = vrot.slane %v3677, 4
      %v3679 = vrot.slane %v3650, 5
      %v3680 = vsel %vm2925, %v3678, %v3679
      %v3681 = vrot.slane %v3679, 4
      %v3682 = vrot.slane %v3651, 5
      %v3683 = vsel %vm2925, %v3681, %v3682
      %v3684 = vrot.slane %v3652, 5
      %v3685 = vrot.slane %v3684, 4
      %v3686 = vrot.slane %v3653, 5
      %v3687 = vsel %vm2925, %v3685, %v3686
      %v3688 = vrot.slane %v3686, 4
      %v3689 = vrot.slane %v3654, 5
      %v3690 = vsel %vm2925, %v3688, %v3689
      %v3691 = vrot.slane %v3655, 5
      %v3692 = vrot.slane %v3691, 4
      %v3693 = vrot.slane %v3656, 5
      %v3694 = vsel %vm2925, %v3692, %v3693
      %v3695 = vrot.slane %v3693, 4
      %v3696 = vrot.slane %v3657, 5
      %v3697 = vsel %vm2925, %v3695, %v3696
      %3698 = vrot.lane.b32.xlu0 %v3673, 126
      %v3699 = vpop.permute.xlu0 %3698
      %3700 = vrot.lane.b32.xlu0 %v3676, 126
      %v3701 = vpop.permute.xlu0 %3700
      %3702 = vrot.lane.b32.xlu0 %v3680, 126
      %v3703 = vpop.permute.xlu0 %3702
      %3704 = vrot.lane.b32.xlu0 %v3683, 126
      %v3705 = vpop.permute.xlu0 %3704
      %3706 = vrot.lane.b32.xlu0 %v3687, 126
      %v3707 = vpop.permute.xlu0 %3706
      %3708 = vrot.lane.b32.xlu0 %v3690, 126
      %v3709 = vpop.permute.xlu0 %3708
      %3710 = vrot.lane.b32.xlu0 %v3694, 126
      %v3711 = vpop.permute.xlu0 %3710
      %3712 = vrot.lane.b32.xlu0 %v3697, 126
      %v3713 = vpop.permute.xlu0 %3712
      %v3716 = vpack.i.b16 %v3703, %v3699
      %v3717 = vshrl.u32 %v3699, 16
      %v3718 = vshrl.u32 %v3703, 16
      %v3719 = vpack.i.b16 %v3718, %v3717
      %v3722 = vpack.i.b16 %v3711, %v3707
      %v3723 = vshrl.u32 %v3707, 16
      %v3724 = vshrl.u32 %v3711, 16
      %v3725 = vpack.i.b16 %v3724, %v3723
      %v3728 = vpack.i.b16 %v3705, %v3701
      %v3729 = vshrl.u32 %v3701, 16
      %v3730 = vshrl.u32 %v3705, 16
      %v3731 = vpack.i.b16 %v3730, %v3729
      %v3734 = vpack.i.b16 %v3713, %v3709
      %v3735 = vshrl.u32 %v3709, 16
      %v3736 = vshrl.u32 %v3713, 16
      %v3737 = vpack.i.b16 %v3736, %v3735
      %v3740 = vunpack.c.l.s4 1983009808
      %v3741 = vunpack.c.0.s8 %v3740
      %v3742 = vlaneseq
      %v3743 = vshrl.u32 %v3742, 7
      %v3744 = vsub.s32 %v3741, %v3743
      %v3745 = vrot.slane %v3716, %v3744
      %v3748 = vunpack.c.l.s4 1983009808
      %v3749 = vunpack.c.0.s8 %v3748
      %v3750 = vlaneseq
      %v3751 = vshrl.u32 %v3750, 7
      %v3752 = vsub.s32 %v3749, %v3751
      %v3753 = vrot.slane %v3722, %v3752
      %v3754 = vcombine.low %v3745, %v3753
      %v3755 = vcombine.high %v3745, %v3753
      %v3757 = vunpack.c.l.s4 1934713408
      %v3758 = vunpack.c.0.s8 %v3757
      %v3759 = vlaneseq
      %v3760 = vshrl.u32 %v3759, 7
      %v3761 = vsub.s32 %v3758, %v3760
      %v3762 = vrot.slane %v3754, %v3761
      %v3764 = vunpack.c.l.s4 1934713408
      %v3765 = vunpack.c.0.s8 %v3764
      %v3766 = vlaneseq
      %v3767 = vshrl.u32 %v3766, 7
      %v3768 = vsub.s32 %v3765, %v3767
      %v3769 = vrot.slane %v3755, %v3768
      %v3770 = vcombine.high %v3762, 0
      %v3771 = vcombine.high %v3769, 0
      %v3774 = vunpack.c.l.s4 1983009808
      %v3775 = vunpack.c.0.s8 %v3774
      %v3776 = vlaneseq
      %v3777 = vshrl.u32 %v3776, 7
      %v3778 = vsub.s32 %v3775, %v3777
      %v3779 = vrot.slane %v3719, %v3778
      %v3782 = vunpack.c.l.s4 1983009808
      %v3783 = vunpack.c.0.s8 %v3782
      %v3784 = vlaneseq
      %v3785 = vshrl.u32 %v3784, 7
      %v3786 = vsub.s32 %v3783, %v3785
      %v3787 = vrot.slane %v3725, %v3786
      %v3788 = vcombine.low %v3779, %v3787
      %v3789 = vcombine.high %v3779, %v3787
      %v3791 = vunpack.c.l.s4 1934713408
      %v3792 = vunpack.c.0.s8 %v3791
      %v3793 = vlaneseq
      %v3794 = vshrl.u32 %v3793, 7
      %v3795 = vsub.s32 %v3792, %v3794
      %v3796 = vrot.slane %v3788, %v3795
      %v3798 = vunpack.c.l.s4 1934713408
      %v3799 = vunpack.c.0.s8 %v3798
      %v3800 = vlaneseq
      %v3801 = vshrl.u32 %v3800, 7
      %v3802 = vsub.s32 %v3799, %v3801
      %v3803 = vrot.slane %v3789, %v3802
      %v3804 = vcombine.high %v3796, 0
      %v3805 = vcombine.high %v3803, 0
      %v3808 = vunpack.c.l.s4 1983009808
      %v3809 = vunpack.c.0.s8 %v3808
      %v3810 = vlaneseq
      %v3811 = vshrl.u32 %v3810, 7
      %v3812 = vsub.s32 %v3809, %v3811
      %v3813 = vrot.slane %v3728, %v3812
      %v3816 = vunpack.c.l.s4 1983009808
      %v3817 = vunpack.c.0.s8 %v3816
      %v3818 = vlaneseq
      %v3819 = vshrl.u32 %v3818, 7
      %v3820 = vsub.s32 %v3817, %v3819
      %v3821 = vrot.slane %v3734, %v3820
      %v3822 = vcombine.low %v3813, %v3821
      %v3823 = vcombine.high %v3813, %v3821
      %v3825 = vunpack.c.l.s4 1934713408
      %v3826 = vunpack.c.0.s8 %v3825
      %v3827 = vlaneseq
      %v3828 = vshrl.u32 %v3827, 7
      %v3829 = vsub.s32 %v3826, %v3828
      %v3830 = vrot.slane %v3822, %v3829
      %v3832 = vunpack.c.l.s4 1934713408
      %v3833 = vunpack.c.0.s8 %v3832
      %v3834 = vlaneseq
      %v3835 = vshrl.u32 %v3834, 7
      %v3836 = vsub.s32 %v3833, %v3835
      %v3837 = vrot.slane %v3823, %v3836
      %v3838 = vcombine.high %v3830, 0
      %v3839 = vcombine.high %v3837, 0
      %v3842 = vunpack.c.l.s4 1983009808
      %v3843 = vunpack.c.0.s8 %v3842
      %v3844 = vlaneseq
      %v3845 = vshrl.u32 %v3844, 7
      %v3846 = vsub.s32 %v3843, %v3845
      %v3847 = vrot.slane %v3731, %v3846
      %v3850 = vunpack.c.l.s4 1983009808
      %v3851 = vunpack.c.0.s8 %v3850
      %v3852 = vlaneseq
      %v3853 = vshrl.u32 %v3852, 7
      %v3854 = vsub.s32 %v3851, %v3853
      %v3855 = vrot.slane %v3737, %v3854
      %v3856 = vcombine.low %v3847, %v3855
      %v3857 = vcombine.high %v3847, %v3855
      %v3859 = vunpack.c.l.s4 1934713408
      %v3860 = vunpack.c.0.s8 %v3859
      %v3861 = vlaneseq
      %v3862 = vshrl.u32 %v3861, 7
      %v3863 = vsub.s32 %v3860, %v3862
      %v3864 = vrot.slane %v3856, %v3863
      %v3866 = vunpack.c.l.s4 1934713408
      %v3867 = vunpack.c.0.s8 %v3866
      %v3868 = vlaneseq
      %v3869 = vshrl.u32 %v3868, 7
      %v3870 = vsub.s32 %v3867, %v3869
      %v3871 = vrot.slane %v3857, %v3870
      %v3872 = vcombine.high %v3864, 0
      %v3873 = vcombine.high %v3871, 0
      %v3875 = vunpack.c.l.b16 %v3796
      %v3876 = vpack.c.b16 %v3875, %v3875
      %3877 = vrot.lane.b32.xlu0 %v3876, 16
      %v3878 = vpop.permute.xlu0 %3877
      %v3880 = vunpack.c.l.b16 %v3770
      %v3881 = vpack.c.b16 %v3880, %v3880
      %3882 = vrot.lane.b32.xlu0 %v3881, 32
      %v3883 = vpop.permute.xlu0 %3882
      %v3885 = vunpack.c.l.b16 %v3804
      %v3886 = vpack.c.b16 %v3885, %v3885
      %3887 = vrot.lane.b32.xlu0 %v3886, 48
      %v3888 = vpop.permute.xlu0 %3887
      %v3890 = vunpack.c.l.b16 %v3769
      %v3891 = vpack.c.b16 %v3890, %v3890
      %3892 = vrot.lane.b32.xlu0 %v3891, 64
      %v3893 = vpop.permute.xlu0 %3892
      %v3895 = vunpack.c.l.b16 %v3803
      %v3896 = vpack.c.b16 %v3895, %v3895
      %3897 = vrot.lane.b32.xlu0 %v3896, 80
      %v3898 = vpop.permute.xlu0 %3897
      %v3900 = vunpack.c.l.b16 %v3771
      %v3901 = vpack.c.b16 %v3900, %v3900
      %3902 = vrot.lane.b32.xlu0 %v3901, 96
      %v3903 = vpop.permute.xlu0 %3902
      %v3905 = vunpack.c.l.b16 %v3805
      %v3906 = vpack.c.b16 %v3905, %v3905
      %3907 = vrot.lane.b32.xlu0 %v3906, 112
      %v3908 = vpop.permute.xlu0 %3907
      %v3910 = vunpack.c.l.b16 %v3864
      %v3911 = vpack.c.b16 %v3910, %v3910
      %3912 = vrot.lane.b32.xlu0 %v3911, 16
      %v3913 = vpop.permute.xlu0 %3912
      %v3915 = vunpack.c.l.b16 %v3838
      %v3916 = vpack.c.b16 %v3915, %v3915
      %3917 = vrot.lane.b32.xlu0 %v3916, 32
      %v3918 = vpop.permute.xlu0 %3917
      %v3920 = vunpack.c.l.b16 %v3872
      %v3921 = vpack.c.b16 %v3920, %v3920
      %3922 = vrot.lane.b32.xlu0 %v3921, 48
      %v3923 = vpop.permute.xlu0 %3922
      %v3925 = vunpack.c.l.b16 %v3837
      %v3926 = vpack.c.b16 %v3925, %v3925
      %3927 = vrot.lane.b32.xlu0 %v3926, 64
      %v3928 = vpop.permute.xlu0 %3927
      %v3930 = vunpack.c.l.b16 %v3871
      %v3931 = vpack.c.b16 %v3930, %v3930
      %3932 = vrot.lane.b32.xlu0 %v3931, 80
      %v3933 = vpop.permute.xlu0 %3932
      %v3935 = vunpack.c.l.b16 %v3839
      %v3936 = vpack.c.b16 %v3935, %v3935
      %3937 = vrot.lane.b32.xlu0 %v3936, 96
      %v3938 = vpop.permute.xlu0 %3937
      %v3940 = vunpack.c.l.b16 %v3873
      %v3941 = vpack.c.b16 %v3940, %v3940
      %3942 = vrot.lane.b32.xlu0 %v3941, 112
      %v3943 = vpop.permute.xlu0 %3942
      %v3946 = vsel %vm838, %v3762, %v3878
      %v3948 = vsel %vm842, %v3946, %v3883
      %v3950 = vsel %vm845, %v3948, %v3888
      %v3952 = vsel %vm848, %v3950, %v3893
      %v3954 = vsel %vm851, %v3952, %v3898
      %v3956 = vsel %vm854, %v3954, %v3903
      %v3958 = vsel %vm857, %v3956, %v3908
      %v3961 = vsel %vm838, %v3830, %v3913
      %v3963 = vsel %vm842, %v3961, %v3918
      %v3965 = vsel %vm845, %v3963, %v3923
      %v3967 = vsel %vm848, %v3965, %v3928
      %v3969 = vsel %vm851, %v3967, %v3933
      %v3971 = vsel %vm854, %v3969, %v3938
      %v3973 = vsel %vm857, %v3971, %v3943
      %s3974 = scalar_lea.vmem %s1, 16
      %v3975 = vld [vmem:[%s3974] sm:$0x3]
      %v3977 = vsel %vm1162, %v3975, 0
      %v3979 = vsel %vm1166, %v3958, 0
      %v3981 = vsel %vm1166, %v3973, 0
      %3983 = vmatprep.subr.bf16.mxu0 0
      %3984 = vmatpush1.bf16.msra.mxu0 0
      %3985 = vmatprep.subr.bf16.mxu0 0
      %3986 = vmatpush1.bf16.msra.mxu0 0
      %3987 = vmatprep.subr.bf16.mxu0 0
      %3988 = vmatpush1.bf16.msra.mxu0 0
      %3989 = vmatprep.subr.bf16.mxu0 0
      %3990 = vmatpush1.bf16.msra.mxu0 0
      %3991 = vmatprep.subr.bf16.mxu0 0
      %3992 = vmatpush1.bf16.msra.mxu0 0
      %3993 = vmatprep.subr.bf16.mxu0 0
      %3994 = vmatpush1.bf16.msra.mxu0 0
      %3995 = vmatprep.subr.bf16.mxu0 0
      %3996 = vmatpush1.bf16.msra.mxu0 0
      %3997 = vmatprep.subr.bf16.mxu0 %v3981
      %3998 = vmatpush1.bf16.msra.mxu0 %v3979
      %3999 = vmatprep.subr.bf16.mxu0 0
      %4000 = vmatpush2.bf16.msra.mxu0 0
      %4001 = vmatprep.subr.bf16.mxu0 0
      %4002 = vmatpush2.bf16.msra.mxu0 0
      %4003 = vmatprep.subr.bf16.mxu0 0
      %4004 = vmatpush2.bf16.msra.mxu0 0
      %4005 = vmatprep.subr.bf16.mxu0 0
      %4006 = vmatpush2.bf16.msra.mxu0 0
      %4007 = vmatprep.subr.bf16.mxu0 0
      %4008 = vmatpush2.bf16.msra.mxu0 0
      %4009 = vmatprep.subr.bf16.mxu0 0
      %4010 = vmatpush2.bf16.msra.mxu0 0
      %4011 = vmatprep.subr.bf16.mxu0 0
      %4012 = vmatpush2.bf16.msra.mxu0 0
      %4013 = vmatprep.subr.bf16.mxu0 0
      %4014 = vmatpush2.bf16.msra.mxu0 0
      %4015 = vmatprep.mubr.bf16.mxu0 0
      %4016 = vmatmul.mubr.bf16.gmra.mxu0 %v3977
      %v4017 = vpop.f32.mrf.mxu0
      %v4018 = vadd.f32 0.0, %v4017
      %v4019 = vpop.f32.mrf.mxu0
      %v4020 = vadd.f32 0.0, %v4019
      %v4021 = vpop.f32.mrf.mxu0
      %v4022 = vpop.f32.mrf.mxu0
      %4023 = vdwg.mxu0
      %v4024 = vadd.f32 %v3644, %v4018
      %v4025 = vadd.f32 %v3645, %v4020
      %v4026 = vld [vmem:[%s2] sm:$0xf]
      %4028 = vset.pattern.permute.xlu0 0
      %4029 = vperm.xlu0 %4028, %v4026
      %v4030 = vpop.permute.xlu0 %4029
      %v4032 = vadd.f32 %v4024, %v4030
      %v4033 = vadd.f32 %v4025, %v4030
      %v4034 = vmax.f32 %v4032, 0.0
      %v4035 = vmax.f32 %v4033, 0.0
      %v4036 = vpack.c.bf16 %v4034, %v4034
      %v4037 = vpack.c.bf16 %v4035, %v4035
      %4039 = vrot.lane.b32.xlu0 %v4036, 112
      %v4040 = vpop.permute.xlu0 %4039
      %4042 = vrot.lane.b32.xlu0 %v4036, 96
      %v4043 = vpop.permute.xlu0 %4042
      %4045 = vrot.lane.b32.xlu0 %v4036, 80
      %v4046 = vpop.permute.xlu0 %4045
      %4048 = vrot.lane.b32.xlu0 %v4036, 64
      %v4049 = vpop.permute.xlu0 %4048
      %4051 = vrot.lane.b32.xlu0 %v4036, 48
      %v4052 = vpop.permute.xlu0 %4051
      %4054 = vrot.lane.b32.xlu0 %v4036, 32
      %v4055 = vpop.permute.xlu0 %4054
      %4057 = vrot.lane.b32.xlu0 %v4036, 16
      %v4058 = vpop.permute.xlu0 %4057
      %4061 = vrot.lane.b32.xlu0 %v4037, 112
      %v4062 = vpop.permute.xlu0 %4061
      %4064 = vrot.lane.b32.xlu0 %v4037, 96
      %v4065 = vpop.permute.xlu0 %4064
      %4067 = vrot.lane.b32.xlu0 %v4037, 80
      %v4068 = vpop.permute.xlu0 %4067
      %4070 = vrot.lane.b32.xlu0 %v4037, 64
      %v4071 = vpop.permute.xlu0 %4070
      %4073 = vrot.lane.b32.xlu0 %v4037, 48
      %v4074 = vpop.permute.xlu0 %4073
      %4076 = vrot.lane.b32.xlu0 %v4037, 32
      %v4077 = vpop.permute.xlu0 %4076
      %4079 = vrot.lane.b32.xlu0 %v4037, 16
      %v4080 = vpop.permute.xlu0 %4079
      %v4082 = vcombine.low %v4036, %v4049
      %v4084 = vunpack.c.l.s4 1983009808
      %v4085 = vunpack.c.0.s8 %v4084
      %v4086 = vlaneseq
      %v4087 = vshrl.u32 %v4086, 7
      %v4088 = vsub.s32 %v4085, %v4087
      %v4089 = vrot.slane %v4082, %v4088
      %v4090 = vcombine.low %v4043, %v4055
      %v4092 = vunpack.c.l.s4 1983009808
      %v4093 = vunpack.c.0.s8 %v4092
      %v4094 = vlaneseq
      %v4095 = vshrl.u32 %v4094, 7
      %v4096 = vsub.s32 %v4093, %v4095
      %v4097 = vrot.slane %v4090, %v4096
      %v4098 = vcombine.low %v4037, %v4071
      %v4100 = vunpack.c.l.s4 1983009808
      %v4101 = vunpack.c.0.s8 %v4100
      %v4102 = vlaneseq
      %v4103 = vshrl.u32 %v4102, 7
      %v4104 = vsub.s32 %v4101, %v4103
      %v4105 = vrot.slane %v4098, %v4104
      %v4106 = vcombine.low %v4065, %v4077
      %v4108 = vunpack.c.l.s4 1983009808
      %v4109 = vunpack.c.0.s8 %v4108
      %v4110 = vlaneseq
      %v4111 = vshrl.u32 %v4110, 7
      %v4112 = vsub.s32 %v4109, %v4111
      %v4113 = vrot.slane %v4106, %v4112
      %v4114 = vcombine.low %v4089, %v4097
      %v4116 = vunpack.c.l.s4 1934713408
      %v4117 = vunpack.c.0.s8 %v4116
      %v4118 = vlaneseq
      %v4119 = vshrl.u32 %v4118, 7
      %v4120 = vsub.s32 %v4117, %v4119
      %v4121 = vrot.slane %v4114, %v4120
      %v4122 = vcombine.low %v4105, %v4113
      %v4124 = vunpack.c.l.s4 1934713408
      %v4125 = vunpack.c.0.s8 %v4124
      %v4126 = vlaneseq
      %v4127 = vshrl.u32 %v4126, 7
      %v4128 = vsub.s32 %v4125, %v4127
      %v4129 = vrot.slane %v4122, %v4128
      %v4130 = vcombine.low %v4121, %v4129
      %v4131 = vcombine.high %v4121, %v4129
      %v4132 = vcombine.low %v4040, %v4052
      %v4134 = vunpack.c.l.s4 1983009808
      %v4135 = vunpack.c.0.s8 %v4134
      %v4136 = vlaneseq
      %v4137 = vshrl.u32 %v4136, 7
      %v4138 = vsub.s32 %v4135, %v4137
      %v4139 = vrot.slane %v4132, %v4138
      %v4140 = vcombine.low %v4046, %v4058
      %v4142 = vunpack.c.l.s4 1983009808
      %v4143 = vunpack.c.0.s8 %v4142
      %v4144 = vlaneseq
      %v4145 = vshrl.u32 %v4144, 7
      %v4146 = vsub.s32 %v4143, %v4145
      %v4147 = vrot.slane %v4140, %v4146
      %v4148 = vcombine.low %v4062, %v4074
      %v4150 = vunpack.c.l.s4 1983009808
      %v4151 = vunpack.c.0.s8 %v4150
      %v4152 = vlaneseq
      %v4153 = vshrl.u32 %v4152, 7
      %v4154 = vsub.s32 %v4151, %v4153
      %v4155 = vrot.slane %v4148, %v4154
      %v4156 = vcombine.low %v4068, %v4080
      %v4158 = vunpack.c.l.s4 1983009808
      %v4159 = vunpack.c.0.s8 %v4158
      %v4160 = vlaneseq
      %v4161 = vshrl.u32 %v4160, 7
      %v4162 = vsub.s32 %v4159, %v4161
      %v4163 = vrot.slane %v4156, %v4162
      %v4164 = vcombine.low %v4139, %v4147
      %v4166 = vunpack.c.l.s4 1934713408
      %v4167 = vunpack.c.0.s8 %v4166
      %v4168 = vlaneseq
      %v4169 = vshrl.u32 %v4168, 7
      %v4170 = vsub.s32 %v4167, %v4169
      %v4171 = vrot.slane %v4164, %v4170
      %v4172 = vcombine.low %v4155, %v4163
      %v4174 = vunpack.c.l.s4 1934713408
      %v4175 = vunpack.c.0.s8 %v4174
      %v4176 = vlaneseq
      %v4177 = vshrl.u32 %v4176, 7
      %v4178 = vsub.s32 %v4175, %v4177
      %v4179 = vrot.slane %v4172, %v4178
      %v4180 = vcombine.low %v4171, %v4179
      %v4181 = vcombine.high %v4171, %v4179
      %v4184 = vpack.i.b16 %v4180, %v4130
      %v4185 = vshrl.u32 %v4130, 16
      %v4186 = vshrl.u32 %v4180, 16
      %v4187 = vpack.i.b16 %v4186, %v4185
      %v4190 = vpack.i.b16 %v4181, %v4131
      %v4191 = vshrl.u32 %v4131, 16
      %v4192 = vshrl.u32 %v4181, 16
      %v4193 = vpack.i.b16 %v4192, %v4191
      %v4194 = vunpack.c.l.b16 %v4184
      %v4195 = vunpack.c.h.b16 %v4184
      %v4196 = vunpack.c.l.b16 %v4187
      %v4197 = vunpack.c.h.b16 %v4187
      %v4198 = vunpack.c.l.b16 %v4190
      %v4199 = vunpack.c.h.b16 %v4190
      %v4200 = vunpack.c.l.b16 %v4193
      %v4201 = vunpack.c.h.b16 %v4193
      %v4202 = vpack.c.b16 %v4194, %v4194
      %v4203 = vpack.c.b16 %v4195, %v4195
      %v4204 = vpack.c.b16 %v4196, %v4196
      %v4205 = vpack.c.b16 %v4197, %v4197
      %v4206 = vpack.c.b16 %v4198, %v4198
      %v4207 = vpack.c.b16 %v4199, %v4199
      %v4208 = vpack.c.b16 %v4200, %v4200
      %v4209 = vpack.c.b16 %v4201, %v4201
      %v4211 = vshrl.u32 %v4202, 16
      %v4213 = vrot.slane %v4211, 7
      %v4214 = vshll.u32 %v4202, 16
      %v4216 = vor.u32 %v4213, %v4214
      %v4217 = vrot.slane %v4213, 4
      %v4219 = vshrl.u32 %v4203, 16
      %v4221 = vrot.slane %v4219, 7
      %v4222 = vshll.u32 %v4203, 16
      %v4224 = vor.u32 %v4221, %v4222
      %v4225 = vsel %vm462, %v4217, %v4224
      %v4226 = vrot.slane %v4221, 4
      %v4228 = vshrl.u32 %v4204, 16
      %v4230 = vrot.slane %v4228, 7
      %v4231 = vshll.u32 %v4204, 16
      %v4233 = vor.u32 %v4230, %v4231
      %v4234 = vrot.slane %v4230, 4
      %v4236 = vshrl.u32 %v4205, 16
      %v4238 = vrot.slane %v4236, 7
      %v4239 = vshll.u32 %v4205, 16
      %v4241 = vor.u32 %v4238, %v4239
      %v4242 = vsel %vm462, %v4234, %v4241
      %v4243 = vrot.slane %v4238, 4
      %v4245 = vshrl.u32 %v4206, 16
      %v4247 = vrot.slane %v4245, 7
      %v4248 = vshll.u32 %v4206, 16
      %v4250 = vor.u32 %v4247, %v4248
      %v4251 = vrot.slane %v4247, 4
      %v4253 = vshrl.u32 %v4207, 16
      %v4255 = vrot.slane %v4253, 7
      %v4256 = vshll.u32 %v4207, 16
      %v4258 = vor.u32 %v4255, %v4256
      %v4259 = vsel %vm462, %v4251, %v4258
      %v4260 = vrot.slane %v4255, 4
      %v4262 = vshrl.u32 %v4208, 16
      %v4264 = vrot.slane %v4262, 7
      %v4265 = vshll.u32 %v4208, 16
      %v4267 = vor.u32 %v4264, %v4265
      %v4268 = vrot.slane %v4264, 4
      %v4270 = vshrl.u32 %v4209, 16
      %v4272 = vrot.slane %v4270, 7
      %v4273 = vshll.u32 %v4209, 16
      %v4275 = vor.u32 %v4272, %v4273
      %v4276 = vsel %vm462, %v4268, %v4275
      %v4277 = vrot.slane %v4272, 4
      %4278 = vrot.lane.b32.xlu0 %v4216, 1
      %v4279 = vpop.permute.xlu0 %4278
      %4280 = vrot.lane.b32.xlu0 %v4225, 1
      %v4281 = vpop.permute.xlu0 %4280
      %4282 = vrot.lane.b32.xlu0 %v4226, 1
      %v4283 = vpop.permute.xlu0 %4282
      %4284 = vrot.lane.b32.xlu0 %v4233, 1
      %v4285 = vpop.permute.xlu0 %4284
      %4286 = vrot.lane.b32.xlu0 %v4242, 1
      %v4287 = vpop.permute.xlu0 %4286
      %4288 = vrot.lane.b32.xlu0 %v4243, 1
      %v4289 = vpop.permute.xlu0 %4288
      %4290 = vrot.lane.b32.xlu0 %v4250, 1
      %v4291 = vpop.permute.xlu0 %4290
      %4292 = vrot.lane.b32.xlu0 %v4259, 1
      %v4293 = vpop.permute.xlu0 %4292
      %4294 = vrot.lane.b32.xlu0 %v4260, 1
      %v4295 = vpop.permute.xlu0 %4294
      %4296 = vrot.lane.b32.xlu0 %v4267, 1
      %v4297 = vpop.permute.xlu0 %4296
      %4298 = vrot.lane.b32.xlu0 %v4276, 1
      %v4299 = vpop.permute.xlu0 %4298
      %4300 = vrot.lane.b32.xlu0 %v4277, 1
      %v4301 = vpop.permute.xlu0 %4300
      %v4314 = vld [vmem:[#allocation2] sm:$0xf]
      %v4315 = vsel %vm568, %v4279, %v4314
      %4316 = vst [vmem:[#allocation2] sm:$0xf] %v4315
      %4317 = vst.msk [vmem:[#allocation2 + $0x4] sm:$0xf] %vm572, %v4281
      %v4318 = vld [vmem:[#allocation2 + $0x8] sm:$0x1]
      %v4319 = vsel %vm575, %v4283, %v4318
      %4320 = vst [vmem:[#allocation2 + $0x8] sm:$0x1] %v4319
      %v4321 = vld [vmem:[#allocation2 + $0xc] sm:$0xf]
      %v4322 = vsel %vm568, %v4285, %v4321
      %4323 = vst [vmem:[#allocation2 + $0xc] sm:$0xf] %v4322
      %4324 = vst.msk [vmem:[#allocation2 + $0x10] sm:$0xf] %vm572, %v4287
      %v4325 = vld [vmem:[#allocation2 + $0x14] sm:$0x1]
      %v4326 = vsel %vm575, %v4289, %v4325
      %4327 = vst [vmem:[#allocation2 + $0x14] sm:$0x1] %v4326
      %v4328 = vld [vmem:[#allocation2 + $0x18] sm:$0xf]
      %v4329 = vsel %vm568, %v4291, %v4328
      %4330 = vst [vmem:[#allocation2 + $0x18] sm:$0xf] %v4329
      %4331 = vst.msk [vmem:[#allocation2 + $0x1c] sm:$0xf] %vm572, %v4293
      %v4332 = vld [vmem:[#allocation2 + $0x20] sm:$0x1]
      %v4333 = vsel %vm575, %v4295, %v4332
      %4334 = vst [vmem:[#allocation2 + $0x20] sm:$0x1] %v4333
      %v4335 = vld [vmem:[#allocation2 + $0x24] sm:$0xf]
      %v4336 = vsel %vm568, %v4297, %v4335
      %4337 = vst [vmem:[#allocation2 + $0x24] sm:$0xf] %v4336
      %4338 = vst.msk [vmem:[#allocation2 + $0x28] sm:$0xf] %vm572, %v4299
      %v4339 = vld [vmem:[#allocation2 + $0x2c] sm:$0x1]
      %v4340 = vsel %vm575, %v4301, %v4339
      %4341 = vst [vmem:[#allocation2 + $0x2c] sm:$0x1] %v4340
      %v4342 = vld [vmem:[#allocation2] sm:$0xf]
      %v4343 = vld [vmem:[#allocation2 + $0x4] sm:$0xf]
      %v4344 = vld [vmem:[#allocation2 + $0xc] sm:$0xf]
      %v4345 = vld [vmem:[#allocation2 + $0x10] sm:$0xf]
      %v4346 = vld [vmem:[#allocation2 + $0x18] sm:$0xf]
      %v4347 = vld [vmem:[#allocation2 + $0x1c] sm:$0xf]
      %v4348 = vld [vmem:[#allocation2 + $0x24] sm:$0xf]
      %v4349 = vld [vmem:[#allocation2 + $0x28] sm:$0xf]
      %v4352 = vpack.i.b16 %v4344, %v4342
      %v4353 = vshrl.u32 %v4342, 16
      %v4354 = vshrl.u32 %v4344, 16
      %v4355 = vpack.i.b16 %v4354, %v4353
      %v4358 = vpack.i.b16 %v4348, %v4346
      %v4359 = vshrl.u32 %v4346, 16
      %v4360 = vshrl.u32 %v4348, 16
      %v4361 = vpack.i.b16 %v4360, %v4359
      %v4364 = vpack.i.b16 %v4345, %v4343
      %v4365 = vshrl.u32 %v4343, 16
      %v4366 = vshrl.u32 %v4345, 16
      %v4367 = vpack.i.b16 %v4366, %v4365
      %v4370 = vpack.i.b16 %v4349, %v4347
      %v4371 = vshrl.u32 %v4347, 16
      %v4372 = vshrl.u32 %v4349, 16
      %v4373 = vpack.i.b16 %v4372, %v4371
      %v4376 = vunpack.c.l.s4 1983009808
      %v4377 = vunpack.c.0.s8 %v4376
      %v4378 = vlaneseq
      %v4379 = vshrl.u32 %v4378, 7
      %v4380 = vsub.s32 %v4377, %v4379
      %v4381 = vrot.slane %v4352, %v4380
      %v4384 = vunpack.c.l.s4 1983009808
      %v4385 = vunpack.c.0.s8 %v4384
      %v4386 = vlaneseq
      %v4387 = vshrl.u32 %v4386, 7
      %v4388 = vsub.s32 %v4385, %v4387
      %v4389 = vrot.slane %v4358, %v4388
      %v4390 = vcombine.low %v4381, %v4389
      %v4391 = vcombine.high %v4381, %v4389
      %v4393 = vunpack.c.l.s4 1934713408
      %v4394 = vunpack.c.0.s8 %v4393
      %v4395 = vlaneseq
      %v4396 = vshrl.u32 %v4395, 7
      %v4397 = vsub.s32 %v4394, %v4396
      %v4398 = vrot.slane %v4390, %v4397
      %v4400 = vunpack.c.l.s4 1934713408
      %v4401 = vunpack.c.0.s8 %v4400
      %v4402 = vlaneseq
      %v4403 = vshrl.u32 %v4402, 7
      %v4404 = vsub.s32 %v4401, %v4403
      %v4405 = vrot.slane %v4391, %v4404
      %v4406 = vcombine.high %v4398, 0
      %v4407 = vcombine.high %v4405, 0
      %v4410 = vunpack.c.l.s4 1983009808
      %v4411 = vunpack.c.0.s8 %v4410
      %v4412 = vlaneseq
      %v4413 = vshrl.u32 %v4412, 7
      %v4414 = vsub.s32 %v4411, %v4413
      %v4415 = vrot.slane %v4355, %v4414
      %v4418 = vunpack.c.l.s4 1983009808
      %v4419 = vunpack.c.0.s8 %v4418
      %v4420 = vlaneseq
      %v4421 = vshrl.u32 %v4420, 7
      %v4422 = vsub.s32 %v4419, %v4421
      %v4423 = vrot.slane %v4361, %v4422
      %v4424 = vcombine.low %v4415, %v4423
      %v4425 = vcombine.high %v4415, %v4423
      %v4427 = vunpack.c.l.s4 1934713408
      %v4428 = vunpack.c.0.s8 %v4427
      %v4429 = vlaneseq
      %v4430 = vshrl.u32 %v4429, 7
      %v4431 = vsub.s32 %v4428, %v4430
      %v4432 = vrot.slane %v4424, %v4431
      %v4434 = vunpack.c.l.s4 1934713408
      %v4435 = vunpack.c.0.s8 %v4434
      %v4436 = vlaneseq
      %v4437 = vshrl.u32 %v4436, 7
      %v4438 = vsub.s32 %v4435, %v4437
      %v4439 = vrot.slane %v4425, %v4438
      %v4440 = vcombine.high %v4432, 0
      %v4441 = vcombine.high %v4439, 0
      %v4444 = vunpack.c.l.s4 1983009808
      %v4445 = vunpack.c.0.s8 %v4444
      %v4446 = vlaneseq
      %v4447 = vshrl.u32 %v4446, 7
      %v4448 = vsub.s32 %v4445, %v4447
      %v4449 = vrot.slane %v4364, %v4448
      %v4452 = vunpack.c.l.s4 1983009808
      %v4453 = vunpack.c.0.s8 %v4452
      %v4454 = vlaneseq
      %v4455 = vshrl.u32 %v4454, 7
      %v4456 = vsub.s32 %v4453, %v4455
      %v4457 = vrot.slane %v4370, %v4456
      %v4458 = vcombine.low %v4449, %v4457
      %v4459 = vcombine.high %v4449, %v4457
      %v4461 = vunpack.c.l.s4 1934713408
      %v4462 = vunpack.c.0.s8 %v4461
      %v4463 = vlaneseq
      %v4464 = vshrl.u32 %v4463, 7
      %v4465 = vsub.s32 %v4462, %v4464
      %v4466 = vrot.slane %v4458, %v4465
      %v4468 = vunpack.c.l.s4 1934713408
      %v4469 = vunpack.c.0.s8 %v4468
      %v4470 = vlaneseq
      %v4471 = vshrl.u32 %v4470, 7
      %v4472 = vsub.s32 %v4469, %v4471
      %v4473 = vrot.slane %v4459, %v4472
      %v4474 = vcombine.high %v4466, 0
      %v4475 = vcombine.high %v4473, 0
      %v4478 = vunpack.c.l.s4 1983009808
      %v4479 = vunpack.c.0.s8 %v4478
      %v4480 = vlaneseq
      %v4481 = vshrl.u32 %v4480, 7
      %v4482 = vsub.s32 %v4479, %v4481
      %v4483 = vrot.slane %v4367, %v4482
      %v4486 = vunpack.c.l.s4 1983009808
      %v4487 = vunpack.c.0.s8 %v4486
      %v4488 = vlaneseq
      %v4489 = vshrl.u32 %v4488, 7
      %v4490 = vsub.s32 %v4487, %v4489
      %v4491 = vrot.slane %v4373, %v4490
      %v4492 = vcombine.low %v4483, %v4491
      %v4493 = vcombine.high %v4483, %v4491
      %v4495 = vunpack.c.l.s4 1934713408
      %v4496 = vunpack.c.0.s8 %v4495
      %v4497 = vlaneseq
      %v4498 = vshrl.u32 %v4497, 7
      %v4499 = vsub.s32 %v4496, %v4498
      %v4500 = vrot.slane %v4492, %v4499
      %v4502 = vunpack.c.l.s4 1934713408
      %v4503 = vunpack.c.0.s8 %v4502
      %v4504 = vlaneseq
      %v4505 = vshrl.u32 %v4504, 7
      %v4506 = vsub.s32 %v4503, %v4505
      %v4507 = vrot.slane %v4493, %v4506
      %v4508 = vcombine.high %v4500, 0
      %v4509 = vcombine.high %v4507, 0
      %v4511 = vunpack.c.l.b16 %v4432
      %v4512 = vpack.c.b16 %v4511, %v4511
      %4513 = vrot.lane.b32.xlu0 %v4512, 16
      %v4514 = vpop.permute.xlu0 %4513
      %v4516 = vunpack.c.l.b16 %v4406
      %v4517 = vpack.c.b16 %v4516, %v4516
      %4518 = vrot.lane.b32.xlu0 %v4517, 32
      %v4519 = vpop.permute.xlu0 %4518
      %v4521 = vunpack.c.l.b16 %v4440
      %v4522 = vpack.c.b16 %v4521, %v4521
      %4523 = vrot.lane.b32.xlu0 %v4522, 48
      %v4524 = vpop.permute.xlu0 %4523
      %v4526 = vunpack.c.l.b16 %v4405
      %v4527 = vpack.c.b16 %v4526, %v4526
      %4528 = vrot.lane.b32.xlu0 %v4527, 64
      %v4529 = vpop.permute.xlu0 %4528
      %v4531 = vunpack.c.l.b16 %v4439
      %v4532 = vpack.c.b16 %v4531, %v4531
      %4533 = vrot.lane.b32.xlu0 %v4532, 80
      %v4534 = vpop.permute.xlu0 %4533
      %v4536 = vunpack.c.l.b16 %v4407
      %v4537 = vpack.c.b16 %v4536, %v4536
      %4538 = vrot.lane.b32.xlu0 %v4537, 96
      %v4539 = vpop.permute.xlu0 %4538
      %v4541 = vunpack.c.l.b16 %v4441
      %v4542 = vpack.c.b16 %v4541, %v4541
      %4543 = vrot.lane.b32.xlu0 %v4542, 112
      %v4544 = vpop.permute.xlu0 %4543
      %v4546 = vunpack.c.l.b16 %v4500
      %v4547 = vpack.c.b16 %v4546, %v4546
      %4548 = vrot.lane.b32.xlu0 %v4547, 16
      %v4549 = vpop.permute.xlu0 %4548
      %v4551 = vunpack.c.l.b16 %v4474
      %v4552 = vpack.c.b16 %v4551, %v4551
      %4553 = vrot.lane.b32.xlu0 %v4552, 32
      %v4554 = vpop.permute.xlu0 %4553
      %v4556 = vunpack.c.l.b16 %v4508
      %v4557 = vpack.c.b16 %v4556, %v4556
      %4558 = vrot.lane.b32.xlu0 %v4557, 48
      %v4559 = vpop.permute.xlu0 %4558
      %v4561 = vunpack.c.l.b16 %v4473
      %v4562 = vpack.c.b16 %v4561, %v4561
      %4563 = vrot.lane.b32.xlu0 %v4562, 64
      %v4564 = vpop.permute.xlu0 %4563
      %v4566 = vunpack.c.l.b16 %v4507
      %v4567 = vpack.c.b16 %v4566, %v4566
      %4568 = vrot.lane.b32.xlu0 %v4567, 80
      %v4569 = vpop.permute.xlu0 %4568
      %v4571 = vunpack.c.l.b16 %v4475
      %v4572 = vpack.c.b16 %v4571, %v4571
      %4573 = vrot.lane.b32.xlu0 %v4572, 96
      %v4574 = vpop.permute.xlu0 %4573
      %v4576 = vunpack.c.l.b16 %v4509
      %v4577 = vpack.c.b16 %v4576, %v4576
      %4578 = vrot.lane.b32.xlu0 %v4577, 112
      %v4579 = vpop.permute.xlu0 %4578
      %v4582 = vsel %vm838, %v4398, %v4514
      %v4584 = vsel %vm842, %v4582, %v4519
      %v4586 = vsel %vm845, %v4584, %v4524
      %v4588 = vsel %vm848, %v4586, %v4529
      %v4590 = vsel %vm851, %v4588, %v4534
      %v4592 = vsel %vm854, %v4590, %v4539
      %v4594 = vsel %vm857, %v4592, %v4544
      %v4597 = vsel %vm838, %v4466, %v4549
      %v4599 = vsel %vm842, %v4597, %v4554
      %v4601 = vsel %vm845, %v4599, %v4559
      %v4603 = vsel %vm848, %v4601, %v4564
      %v4605 = vsel %vm851, %v4603, %v4569
      %v4607 = vsel %vm854, %v4605, %v4574
      %v4609 = vsel %vm857, %v4607, %v4579
      %v4610 = vld [vmem:[%s3] sm:$0x3]
      %4619 = vrot.lane.b32.xlu0 %v4342, 127
      %v4620 = vpop.permute.xlu0 %4619
      %4621 = vrot.lane.b32.xlu0 %v4343, 127
      %v4622 = vpop.permute.xlu0 %4621
      %4623 = vrot.lane.b32.xlu0 %v4344, 127
      %v4624 = vpop.permute.xlu0 %4623
      %4625 = vrot.lane.b32.xlu0 %v4345, 127
      %v4626 = vpop.permute.xlu0 %4625
      %4627 = vrot.lane.b32.xlu0 %v4346, 127
      %v4628 = vpop.permute.xlu0 %4627
      %4629 = vrot.lane.b32.xlu0 %v4347, 127
      %v4630 = vpop.permute.xlu0 %4629
      %4631 = vrot.lane.b32.xlu0 %v4348, 127
      %v4632 = vpop.permute.xlu0 %4631
      %4633 = vrot.lane.b32.xlu0 %v4349, 127
      %v4634 = vpop.permute.xlu0 %4633
      %v4637 = vpack.i.b16 %v4624, %v4620
      %v4638 = vshrl.u32 %v4620, 16
      %v4639 = vshrl.u32 %v4624, 16
      %v4640 = vpack.i.b16 %v4639, %v4638
      %v4643 = vpack.i.b16 %v4632, %v4628
      %v4644 = vshrl.u32 %v4628, 16
      %v4645 = vshrl.u32 %v4632, 16
      %v4646 = vpack.i.b16 %v4645, %v4644
      %v4649 = vpack.i.b16 %v4626, %v4622
      %v4650 = vshrl.u32 %v4622, 16
      %v4651 = vshrl.u32 %v4626, 16
      %v4652 = vpack.i.b16 %v4651, %v4650
      %v4655 = vpack.i.b16 %v4634, %v4630
      %v4656 = vshrl.u32 %v4630, 16
      %v4657 = vshrl.u32 %v4634, 16
      %v4658 = vpack.i.b16 %v4657, %v4656
      %v4661 = vunpack.c.l.s4 1983009808
      %v4662 = vunpack.c.0.s8 %v4661
      %v4663 = vlaneseq
      %v4664 = vshrl.u32 %v4663, 7
      %v4665 = vsub.s32 %v4662, %v4664
      %v4666 = vrot.slane %v4637, %v4665
      %v4669 = vunpack.c.l.s4 1983009808
      %v4670 = vunpack.c.0.s8 %v4669
      %v4671 = vlaneseq
      %v4672 = vshrl.u32 %v4671, 7
      %v4673 = vsub.s32 %v4670, %v4672
      %v4674 = vrot.slane %v4643, %v4673
      %v4675 = vcombine.low %v4666, %v4674
      %v4676 = vcombine.high %v4666, %v4674
      %v4678 = vunpack.c.l.s4 1934713408
      %v4679 = vunpack.c.0.s8 %v4678
      %v4680 = vlaneseq
      %v4681 = vshrl.u32 %v4680, 7
      %v4682 = vsub.s32 %v4679, %v4681
      %v4683 = vrot.slane %v4675, %v4682
      %v4685 = vunpack.c.l.s4 1934713408
      %v4686 = vunpack.c.0.s8 %v4685
      %v4687 = vlaneseq
      %v4688 = vshrl.u32 %v4687, 7
      %v4689 = vsub.s32 %v4686, %v4688
      %v4690 = vrot.slane %v4676, %v4689
      %v4691 = vcombine.high %v4683, 0
      %v4692 = vcombine.high %v4690, 0
      %v4695 = vunpack.c.l.s4 1983009808
      %v4696 = vunpack.c.0.s8 %v4695
      %v4697 = vlaneseq
      %v4698 = vshrl.u32 %v4697, 7
      %v4699 = vsub.s32 %v4696, %v4698
      %v4700 = vrot.slane %v4640, %v4699
      %v4703 = vunpack.c.l.s4 1983009808
      %v4704 = vunpack.c.0.s8 %v4703
      %v4705 = vlaneseq
      %v4706 = vshrl.u32 %v4705, 7
      %v4707 = vsub.s32 %v4704, %v4706
      %v4708 = vrot.slane %v4646, %v4707
      %v4709 = vcombine.low %v4700, %v4708
      %v4710 = vcombine.high %v4700, %v4708
      %v4712 = vunpack.c.l.s4 1934713408
      %v4713 = vunpack.c.0.s8 %v4712
      %v4714 = vlaneseq
      %v4715 = vshrl.u32 %v4714, 7
      %v4716 = vsub.s32 %v4713, %v4715
      %v4717 = vrot.slane %v4709, %v4716
      %v4719 = vunpack.c.l.s4 1934713408
      %v4720 = vunpack.c.0.s8 %v4719
      %v4721 = vlaneseq
      %v4722 = vshrl.u32 %v4721, 7
      %v4723 = vsub.s32 %v4720, %v4722
      %v4724 = vrot.slane %v4710, %v4723
      %v4725 = vcombine.high %v4717, 0
      %v4726 = vcombine.high %v4724, 0
      %v4729 = vunpack.c.l.s4 1983009808
      %v4730 = vunpack.c.0.s8 %v4729
      %v4731 = vlaneseq
      %v4732 = vshrl.u32 %v4731, 7
      %v4733 = vsub.s32 %v4730, %v4732
      %v4734 = vrot.slane %v4649, %v4733
      %v4737 = vunpack.c.l.s4 1983009808
      %v4738 = vunpack.c.0.s8 %v4737
      %v4739 = vlaneseq
      %v4740 = vshrl.u32 %v4739, 7
      %v4741 = vsub.s32 %v4738, %v4740
      %v4742 = vrot.slane %v4655, %v4741
      %v4743 = vcombine.low %v4734, %v4742
      %v4744 = vcombine.high %v4734, %v4742
      %v4746 = vunpack.c.l.s4 1934713408
      %v4747 = vunpack.c.0.s8 %v4746
      %v4748 = vlaneseq
      %v4749 = vshrl.u32 %v4748, 7
      %v4750 = vsub.s32 %v4747, %v4749
      %v4751 = vrot.slane %v4743, %v4750
      %v4753 = vunpack.c.l.s4 1934713408
      %v4754 = vunpack.c.0.s8 %v4753
      %v4755 = vlaneseq
      %v4756 = vshrl.u32 %v4755, 7
      %v4757 = vsub.s32 %v4754, %v4756
      %v4758 = vrot.slane %v4744, %v4757
      %v4759 = vcombine.high %v4751, 0
      %v4760 = vcombine.high %v4758, 0
      %v4763 = vunpack.c.l.s4 1983009808
      %v4764 = vunpack.c.0.s8 %v4763
      %v4765 = vlaneseq
      %v4766 = vshrl.u32 %v4765, 7
      %v4767 = vsub.s32 %v4764, %v4766
      %v4768 = vrot.slane %v4652, %v4767
      %v4771 = vunpack.c.l.s4 1983009808
      %v4772 = vunpack.c.0.s8 %v4771
      %v4773 = vlaneseq
      %v4774 = vshrl.u32 %v4773, 7
      %v4775 = vsub.s32 %v4772, %v4774
      %v4776 = vrot.slane %v4658, %v4775
      %v4777 = vcombine.low %v4768, %v4776
      %v4778 = vcombine.high %v4768, %v4776
      %v4780 = vunpack.c.l.s4 1934713408
      %v4781 = vunpack.c.0.s8 %v4780
      %v4782 = vlaneseq
      %v4783 = vshrl.u32 %v4782, 7
      %v4784 = vsub.s32 %v4781, %v4783
      %v4785 = vrot.slane %v4777, %v4784
      %v4787 = vunpack.c.l.s4 1934713408
      %v4788 = vunpack.c.0.s8 %v4787
      %v4789 = vlaneseq
      %v4790 = vshrl.u32 %v4789, 7
      %v4791 = vsub.s32 %v4788, %v4790
      %v4792 = vrot.slane %v4778, %v4791
      %v4793 = vcombine.high %v4785, 0
      %v4794 = vcombine.high %v4792, 0
      %v4796 = vunpack.c.l.b16 %v4717
      %v4797 = vpack.c.b16 %v4796, %v4796
      %4798 = vrot.lane.b32.xlu0 %v4797, 16
      %v4799 = vpop.permute.xlu0 %4798
      %v4801 = vunpack.c.l.b16 %v4691
      %v4802 = vpack.c.b16 %v4801, %v4801
      %4803 = vrot.lane.b32.xlu0 %v4802, 32
      %v4804 = vpop.permute.xlu0 %4803
      %v4806 = vunpack.c.l.b16 %v4725
      %v4807 = vpack.c.b16 %v4806, %v4806
      %4808 = vrot.lane.b32.xlu0 %v4807, 48
      %v4809 = vpop.permute.xlu0 %4808
      %v4811 = vunpack.c.l.b16 %v4690
      %v4812 = vpack.c.b16 %v4811, %v4811
      %4813 = vrot.lane.b32.xlu0 %v4812, 64
      %v4814 = vpop.permute.xlu0 %4813
      %v4816 = vunpack.c.l.b16 %v4724
      %v4817 = vpack.c.b16 %v4816, %v4816
      %4818 = vrot.lane.b32.xlu0 %v4817, 80
      %v4819 = vpop.permute.xlu0 %4818
      %v4821 = vunpack.c.l.b16 %v4692
      %v4822 = vpack.c.b16 %v4821, %v4821
      %4823 = vrot.lane.b32.xlu0 %v4822, 96
      %v4824 = vpop.permute.xlu0 %4823
      %v4826 = vunpack.c.l.b16 %v4726
      %v4827 = vpack.c.b16 %v4826, %v4826
      %4828 = vrot.lane.b32.xlu0 %v4827, 112
      %v4829 = vpop.permute.xlu0 %4828
      %v4831 = vunpack.c.l.b16 %v4785
      %v4832 = vpack.c.b16 %v4831, %v4831
      %4833 = vrot.lane.b32.xlu0 %v4832, 16
      %v4834 = vpop.permute.xlu0 %4833
      %v4836 = vunpack.c.l.b16 %v4759
      %v4837 = vpack.c.b16 %v4836, %v4836
      %4838 = vrot.lane.b32.xlu0 %v4837, 32
      %v4839 = vpop.permute.xlu0 %4838
      %v4841 = vunpack.c.l.b16 %v4793
      %v4842 = vpack.c.b16 %v4841, %v4841
      %4843 = vrot.lane.b32.xlu0 %v4842, 48
      %v4844 = vpop.permute.xlu0 %4843
      %v4846 = vunpack.c.l.b16 %v4758
      %v4847 = vpack.c.b16 %v4846, %v4846
      %4848 = vrot.lane.b32.xlu0 %v4847, 64
      %v4849 = vpop.permute.xlu0 %4848
      %v4851 = vunpack.c.l.b16 %v4792
      %v4852 = vpack.c.b16 %v4851, %v4851
      %4853 = vrot.lane.b32.xlu0 %v4852, 80
      %v4854 = vpop.permute.xlu0 %4853
      %v4856 = vunpack.c.l.b16 %v4760
      %v4857 = vpack.c.b16 %v4856, %v4856
      %4858 = vrot.lane.b32.xlu0 %v4857, 96
      %v4859 = vpop.permute.xlu0 %4858
      %v4861 = vunpack.c.l.b16 %v4794
      %v4862 = vpack.c.b16 %v4861, %v4861
      %4863 = vrot.lane.b32.xlu0 %v4862, 112
      %v4864 = vpop.permute.xlu0 %4863
      %v4867 = vsel %vm838, %v4683, %v4799
      %v4869 = vsel %vm842, %v4867, %v4804
      %v4871 = vsel %vm845, %v4869, %v4809
      %v4873 = vsel %vm848, %v4871, %v4814
      %v4875 = vsel %vm851, %v4873, %v4819
      %v4877 = vsel %vm854, %v4875, %v4824
      %v4879 = vsel %vm857, %v4877, %v4829
      %v4882 = vsel %vm838, %v4751, %v4834
      %v4884 = vsel %vm842, %v4882, %v4839
      %v4886 = vsel %vm845, %v4884, %v4844
      %v4888 = vsel %vm848, %v4886, %v4849
      %v4890 = vsel %vm851, %v4888, %v4854
      %v4892 = vsel %vm854, %v4890, %v4859
      %v4894 = vsel %vm857, %v4892, %v4864
      %s4895 = scalar_lea.vmem %s3, 2
      %v4896 = vld [vmem:[%s4895] sm:$0x3]
      %v4898 = vsel %vm1162, %v4896, 0
      %v4900 = vsel %vm1166, %v4879, 0
      %v4902 = vsel %vm1166, %v4894, 0
      %4904 = vmatprep.subr.bf16.mxu0 0
      %4905 = vmatpush1.bf16.msra.mxu0 0
      %4906 = vmatprep.subr.bf16.mxu0 0
      %4907 = vmatpush1.bf16.msra.mxu0 0
      %4908 = vmatprep.subr.bf16.mxu0 0
      %4909 = vmatpush1.bf16.msra.mxu0 0
      %4910 = vmatprep.subr.bf16.mxu0 0
      %4911 = vmatpush1.bf16.msra.mxu0 0
      %4912 = vmatprep.subr.bf16.mxu0 0
      %4913 = vmatpush1.bf16.msra.mxu0 0
      %4914 = vmatprep.subr.bf16.mxu0 0
      %4915 = vmatpush1.bf16.msra.mxu0 0
      %4916 = vmatprep.subr.bf16.mxu0 0
      %4917 = vmatpush1.bf16.msra.mxu0 0
      %4918 = vmatprep.subr.bf16.mxu0 %v4902
      %4919 = vmatpush1.bf16.msra.mxu0 %v4900
      %4920 = vmatprep.subr.bf16.mxu0 0
      %4921 = vmatpush2.bf16.msra.mxu0 0
      %4922 = vmatprep.subr.bf16.mxu0 0
      %4923 = vmatpush2.bf16.msra.mxu0 0
      %4924 = vmatprep.subr.bf16.mxu0 0
      %4925 = vmatpush2.bf16.msra.mxu0 0
      %4926 = vmatprep.subr.bf16.mxu0 0
      %4927 = vmatpush2.bf16.msra.mxu0 0
      %4928 = vmatprep.subr.bf16.mxu0 0
      %4929 = vmatpush2.bf16.msra.mxu0 0
      %4930 = vmatprep.subr.bf16.mxu0 0
      %4931 = vmatpush2.bf16.msra.mxu0 0
      %4932 = vmatprep.subr.bf16.mxu0 0
      %4933 = vmatpush2.bf16.msra.mxu0 0
      %4934 = vmatprep.subr.bf16.mxu0 0
      %4935 = vmatpush2.bf16.msra.mxu0 0
      %4936 = vmatprep.mubr.bf16.mxu0 0
      %4937 = vmatmul.mubr.bf16.gmra.mxu0 %v4898
      %v4938 = vpop.f32.mrf.mxu0
      %v4939 = vadd.f32 0.0, %v4938
      %v4940 = vpop.f32.mrf.mxu0
      %v4941 = vadd.f32 0.0, %v4940
      %v4942 = vpop.f32.mrf.mxu0
      %v4943 = vpop.f32.mrf.mxu0
      %4944 = vdwg.mxu0
      %v4946 = vsel %vm1162, %v4610, 0
      %v4948 = vsel %vm1166, %v4594, 0
      %v4950 = vsel %vm1166, %v4609, 0
      %4952 = vmatprep.subr.bf16.mxu0 0
      %4953 = vmatpush1.bf16.msra.mxu0 0
      %4954 = vmatprep.subr.bf16.mxu0 0
      %4955 = vmatpush1.bf16.msra.mxu0 0
      %4956 = vmatprep.subr.bf16.mxu0 0
      %4957 = vmatpush1.bf16.msra.mxu0 0
      %4958 = vmatprep.subr.bf16.mxu0 0
      %4959 = vmatpush1.bf16.msra.mxu0 0
      %4960 = vmatprep.subr.bf16.mxu0 0
      %4961 = vmatpush1.bf16.msra.mxu0 0
      %4962 = vmatprep.subr.bf16.mxu0 0
      %4963 = vmatpush1.bf16.msra.mxu0 0
      %4964 = vmatprep.subr.bf16.mxu0 0
      %4965 = vmatpush1.bf16.msra.mxu0 0
      %4966 = vmatprep.subr.bf16.mxu0 %v4950
      %4967 = vmatpush1.bf16.msra.mxu0 %v4948
      %4968 = vmatprep.subr.bf16.mxu0 0
      %4969 = vmatpush2.bf16.msra.mxu0 0
      %4970 = vmatprep.subr.bf16.mxu0 0
      %4971 = vmatpush2.bf16.msra.mxu0 0
      %4972 = vmatprep.subr.bf16.mxu0 0
      %4973 = vmatpush2.bf16.msra.mxu0 0
      %4974 = vmatprep.subr.bf16.mxu0 0
      %4975 = vmatpush2.bf16.msra.mxu0 0
      %4976 = vmatprep.subr.bf16.mxu0 0
      %4977 = vmatpush2.bf16.msra.mxu0 0
      %4978 = vmatprep.subr.bf16.mxu0 0
      %4979 = vmatpush2.bf16.msra.mxu0 0
      %4980 = vmatprep.subr.bf16.mxu0 0
      %4981 = vmatpush2.bf16.msra.mxu0 0
      %4982 = vmatprep.subr.bf16.mxu0 0
      %4983 = vmatpush2.bf16.msra.mxu0 0
      %4984 = vmatprep.mubr.bf16.mxu0 0
      %4985 = vmatmul.mubr.bf16.gmra.mxu0 %v4946
      %v4986 = vpop.f32.mrf.mxu0
      %v4987 = vadd.f32 %v4939, %v4986
      %v4988 = vpop.f32.mrf.mxu0
      %v4989 = vadd.f32 %v4941, %v4988
      %v4990 = vpop.f32.mrf.mxu0
      %v4991 = vpop.f32.mrf.mxu0
      %4992 = vdwg.mxu0
      %v4993 = vld [vmem:[#allocation2] sm:$0xf]
      %v4994 = vld [vmem:[#allocation2 + $0x4] sm:$0xf]
      %v4995 = vld [vmem:[#allocation2 + $0xc] sm:$0xf]
      %v4996 = vld [vmem:[#allocation2 + $0x10] sm:$0xf]
      %v4997 = vld [vmem:[#allocation2 + $0x18] sm:$0xf]
      %v4998 = vld [vmem:[#allocation2 + $0x1c] sm:$0xf]
      %v4999 = vld [vmem:[#allocation2 + $0x24] sm:$0xf]
      %v5000 = vld [vmem:[#allocation2 + $0x28] sm:$0xf]
      %5009 = vrot.lane.b32.xlu0 %v4993, 126
      %v5010 = vpop.permute.xlu0 %5009
      %5011 = vrot.lane.b32.xlu0 %v4994, 126
      %v5012 = vpop.permute.xlu0 %5011
      %5013 = vrot.lane.b32.xlu0 %v4995, 126
      %v5014 = vpop.permute.xlu0 %5013
      %5015 = vrot.lane.b32.xlu0 %v4996, 126
      %v5016 = vpop.permute.xlu0 %5015
      %5017 = vrot.lane.b32.xlu0 %v4997, 126
      %v5018 = vpop.permute.xlu0 %5017
      %5019 = vrot.lane.b32.xlu0 %v4998, 126
      %v5020 = vpop.permute.xlu0 %5019
      %5021 = vrot.lane.b32.xlu0 %v4999, 126
      %v5022 = vpop.permute.xlu0 %5021
      %5023 = vrot.lane.b32.xlu0 %v5000, 126
      %v5024 = vpop.permute.xlu0 %5023
      %v5027 = vpack.i.b16 %v5014, %v5010
      %v5028 = vshrl.u32 %v5010, 16
      %v5029 = vshrl.u32 %v5014, 16
      %v5030 = vpack.i.b16 %v5029, %v5028
      %v5033 = vpack.i.b16 %v5022, %v5018
      %v5034 = vshrl.u32 %v5018, 16
      %v5035 = vshrl.u32 %v5022, 16
      %v5036 = vpack.i.b16 %v5035, %v5034
      %v5039 = vpack.i.b16 %v5016, %v5012
      %v5040 = vshrl.u32 %v5012, 16
      %v5041 = vshrl.u32 %v5016, 16
      %v5042 = vpack.i.b16 %v5041, %v5040
      %v5045 = vpack.i.b16 %v5024, %v5020
      %v5046 = vshrl.u32 %v5020, 16
      %v5047 = vshrl.u32 %v5024, 16
      %v5048 = vpack.i.b16 %v5047, %v5046
      %v5051 = vunpack.c.l.s4 1983009808
      %v5052 = vunpack.c.0.s8 %v5051
      %v5053 = vlaneseq
      %v5054 = vshrl.u32 %v5053, 7
      %v5055 = vsub.s32 %v5052, %v5054
      %v5056 = vrot.slane %v5027, %v5055
      %v5059 = vunpack.c.l.s4 1983009808
      %v5060 = vunpack.c.0.s8 %v5059
      %v5061 = vlaneseq
      %v5062 = vshrl.u32 %v5061, 7
      %v5063 = vsub.s32 %v5060, %v5062
      %v5064 = vrot.slane %v5033, %v5063
      %v5065 = vcombine.low %v5056, %v5064
      %v5066 = vcombine.high %v5056, %v5064
      %v5068 = vunpack.c.l.s4 1934713408
      %v5069 = vunpack.c.0.s8 %v5068
      %v5070 = vlaneseq
      %v5071 = vshrl.u32 %v5070, 7
      %v5072 = vsub.s32 %v5069, %v5071
      %v5073 = vrot.slane %v5065, %v5072
      %v5075 = vunpack.c.l.s4 1934713408
      %v5076 = vunpack.c.0.s8 %v5075
      %v5077 = vlaneseq
      %v5078 = vshrl.u32 %v5077, 7
      %v5079 = vsub.s32 %v5076, %v5078
      %v5080 = vrot.slane %v5066, %v5079
      %v5081 = vcombine.high %v5073, 0
      %v5082 = vcombine.high %v5080, 0
      %v5085 = vunpack.c.l.s4 1983009808
      %v5086 = vunpack.c.0.s8 %v5085
      %v5087 = vlaneseq
      %v5088 = vshrl.u32 %v5087, 7
      %v5089 = vsub.s32 %v5086, %v5088
      %v5090 = vrot.slane %v5030, %v5089
      %v5093 = vunpack.c.l.s4 1983009808
      %v5094 = vunpack.c.0.s8 %v5093
      %v5095 = vlaneseq
      %v5096 = vshrl.u32 %v5095, 7
      %v5097 = vsub.s32 %v5094, %v5096
      %v5098 = vrot.slane %v5036, %v5097
      %v5099 = vcombine.low %v5090, %v5098
      %v5100 = vcombine.high %v5090, %v5098
      %v5102 = vunpack.c.l.s4 1934713408
      %v5103 = vunpack.c.0.s8 %v5102
      %v5104 = vlaneseq
      %v5105 = vshrl.u32 %v5104, 7
      %v5106 = vsub.s32 %v5103, %v5105
      %v5107 = vrot.slane %v5099, %v5106
      %v5109 = vunpack.c.l.s4 1934713408
      %v5110 = vunpack.c.0.s8 %v5109
      %v5111 = vlaneseq
      %v5112 = vshrl.u32 %v5111, 7
      %v5113 = vsub.s32 %v5110, %v5112
      %v5114 = vrot.slane %v5100, %v5113
      %v5115 = vcombine.high %v5107, 0
      %v5116 = vcombine.high %v5114, 0
      %v5119 = vunpack.c.l.s4 1983009808
      %v5120 = vunpack.c.0.s8 %v5119
      %v5121 = vlaneseq
      %v5122 = vshrl.u32 %v5121, 7
      %v5123 = vsub.s32 %v5120, %v5122
      %v5124 = vrot.slane %v5039, %v5123
      %v5127 = vunpack.c.l.s4 1983009808
      %v5128 = vunpack.c.0.s8 %v5127
      %v5129 = vlaneseq
      %v5130 = vshrl.u32 %v5129, 7
      %v5131 = vsub.s32 %v5128, %v5130
      %v5132 = vrot.slane %v5045, %v5131
      %v5133 = vcombine.low %v5124, %v5132
      %v5134 = vcombine.high %v5124, %v5132
      %v5136 = vunpack.c.l.s4 1934713408
      %v5137 = vunpack.c.0.s8 %v5136
      %v5138 = vlaneseq
      %v5139 = vshrl.u32 %v5138, 7
      %v5140 = vsub.s32 %v5137, %v5139
      %v5141 = vrot.slane %v5133, %v5140
      %v5143 = vunpack.c.l.s4 1934713408
      %v5144 = vunpack.c.0.s8 %v5143
      %v5145 = vlaneseq
      %v5146 = vshrl.u32 %v5145, 7
      %v5147 = vsub.s32 %v5144, %v5146
      %v5148 = vrot.slane %v5134, %v5147
      %v5149 = vcombine.high %v5141, 0
      %v5150 = vcombine.high %v5148, 0
      %v5153 = vunpack.c.l.s4 1983009808
      %v5154 = vunpack.c.0.s8 %v5153
      %v5155 = vlaneseq
      %v5156 = vshrl.u32 %v5155, 7
      %v5157 = vsub.s32 %v5154, %v5156
      %v5158 = vrot.slane %v5042, %v5157
      %v5161 = vunpack.c.l.s4 1983009808
      %v5162 = vunpack.c.0.s8 %v5161
      %v5163 = vlaneseq
      %v5164 = vshrl.u32 %v5163, 7
      %v5165 = vsub.s32 %v5162, %v5164
      %v5166 = vrot.slane %v5048, %v5165
      %v5167 = vcombine.low %v5158, %v5166
      %v5168 = vcombine.high %v5158, %v5166
      %v5170 = vunpack.c.l.s4 1934713408
      %v5171 = vunpack.c.0.s8 %v5170
      %v5172 = vlaneseq
      %v5173 = vshrl.u32 %v5172, 7
      %v5174 = vsub.s32 %v5171, %v5173
      %v5175 = vrot.slane %v5167, %v5174
      %v5177 = vunpack.c.l.s4 1934713408
      %v5178 = vunpack.c.0.s8 %v5177
      %v5179 = vlaneseq
      %v5180 = vshrl.u32 %v5179, 7
      %v5181 = vsub.s32 %v5178, %v5180
      %v5182 = vrot.slane %v5168, %v5181
      %v5183 = vcombine.high %v5175, 0
      %v5184 = vcombine.high %v5182, 0
      %v5186 = vunpack.c.l.b16 %v5107
      %v5187 = vpack.c.b16 %v5186, %v5186
      %5188 = vrot.lane.b32.xlu0 %v5187, 16
      %v5189 = vpop.permute.xlu0 %5188
      %v5191 = vunpack.c.l.b16 %v5081
      %v5192 = vpack.c.b16 %v5191, %v5191
      %5193 = vrot.lane.b32.xlu0 %v5192, 32
      %v5194 = vpop.permute.xlu0 %5193
      %v5196 = vunpack.c.l.b16 %v5115
      %v5197 = vpack.c.b16 %v5196, %v5196
      %5198 = vrot.lane.b32.xlu0 %v5197, 48
      %v5199 = vpop.permute.xlu0 %5198
      %v5201 = vunpack.c.l.b16 %v5080
      %v5202 = vpack.c.b16 %v5201, %v5201
      %5203 = vrot.lane.b32.xlu0 %v5202, 64
      %v5204 = vpop.permute.xlu0 %5203
      %v5206 = vunpack.c.l.b16 %v5114
      %v5207 = vpack.c.b16 %v5206, %v5206
      %5208 = vrot.lane.b32.xlu0 %v5207, 80
      %v5209 = vpop.permute.xlu0 %5208
      %v5211 = vunpack.c.l.b16 %v5082
      %v5212 = vpack.c.b16 %v5211, %v5211
      %5213 = vrot.lane.b32.xlu0 %v5212, 96
      %v5214 = vpop.permute.xlu0 %5213
      %v5216 = vunpack.c.l.b16 %v5116
      %v5217 = vpack.c.b16 %v5216, %v5216
      %5218 = vrot.lane.b32.xlu0 %v5217, 112
      %v5219 = vpop.permute.xlu0 %5218
      %v5221 = vunpack.c.l.b16 %v5175
      %v5222 = vpack.c.b16 %v5221, %v5221
      %5223 = vrot.lane.b32.xlu0 %v5222, 16
      %v5224 = vpop.permute.xlu0 %5223
      %v5226 = vunpack.c.l.b16 %v5149
      %v5227 = vpack.c.b16 %v5226, %v5226
      %5228 = vrot.lane.b32.xlu0 %v5227, 32
      %v5229 = vpop.permute.xlu0 %5228
      %v5231 = vunpack.c.l.b16 %v5183
      %v5232 = vpack.c.b16 %v5231, %v5231
      %5233 = vrot.lane.b32.xlu0 %v5232, 48
      %v5234 = vpop.permute.xlu0 %5233
      %v5236 = vunpack.c.l.b16 %v5148
      %v5237 = vpack.c.b16 %v5236, %v5236
      %5238 = vrot.lane.b32.xlu0 %v5237, 64
      %v5239 = vpop.permute.xlu0 %5238
      %v5241 = vunpack.c.l.b16 %v5182
      %v5242 = vpack.c.b16 %v5241, %v5241
      %5243 = vrot.lane.b32.xlu0 %v5242, 80
      %v5244 = vpop.permute.xlu0 %5243
      %v5246 = vunpack.c.l.b16 %v5150
      %v5247 = vpack.c.b16 %v5246, %v5246
      %5248 = vrot.lane.b32.xlu0 %v5247, 96
      %v5249 = vpop.permute.xlu0 %5248
      %v5251 = vunpack.c.l.b16 %v5184
      %v5252 = vpack.c.b16 %v5251, %v5251
      %5253 = vrot.lane.b32.xlu0 %v5252, 112
      %v5254 = vpop.permute.xlu0 %5253
      %v5257 = vsel %vm838, %v5073, %v5189
      %v5259 = vsel %vm842, %v5257, %v5194
      %v5261 = vsel %vm845, %v5259, %v5199
      %v5263 = vsel %vm848, %v5261, %v5204
      %v5265 = vsel %vm851, %v5263, %v5209
      %v5267 = vsel %vm854, %v5265, %v5214
      %v5269 = vsel %vm857, %v5267, %v5219
      %v5272 = vsel %vm838, %v5141, %v5224
      %v5274 = vsel %vm842, %v5272, %v5229
      %v5276 = vsel %vm845, %v5274, %v5234
      %v5278 = vsel %vm848, %v5276, %v5239
      %v5280 = vsel %vm851, %v5278, %v5244
      %v5282 = vsel %vm854, %v5280, %v5249
      %v5284 = vsel %vm857, %v5282, %v5254
      %s5285 = scalar_lea.vmem %s3, 4
      %v5286 = vld [vmem:[%s5285] sm:$0x3]
      %v5288 = vsel %vm1162, %v5286, 0
      %v5290 = vsel %vm1166, %v5269, 0
      %v5292 = vsel %vm1166, %v5284, 0
      %5294 = vmatprep.subr.bf16.mxu0 0
      %5295 = vmatpush1.bf16.msra.mxu0 0
      %5296 = vmatprep.subr.bf16.mxu0 0
      %5297 = vmatpush1.bf16.msra.mxu0 0
      %5298 = vmatprep.subr.bf16.mxu0 0
      %5299 = vmatpush1.bf16.msra.mxu0 0
      %5300 = vmatprep.subr.bf16.mxu0 0
      %5301 = vmatpush1.bf16.msra.mxu0 0
      %5302 = vmatprep.subr.bf16.mxu0 0
      %5303 = vmatpush1.bf16.msra.mxu0 0
      %5304 = vmatprep.subr.bf16.mxu0 0
      %5305 = vmatpush1.bf16.msra.mxu0 0
      %5306 = vmatprep.subr.bf16.mxu0 0
      %5307 = vmatpush1.bf16.msra.mxu0 0
      %5308 = vmatprep.subr.bf16.mxu0 %v5292
      %5309 = vmatpush1.bf16.msra.mxu0 %v5290
      %5310 = vmatprep.subr.bf16.mxu0 0
      %5311 = vmatpush2.bf16.msra.mxu0 0
      %5312 = vmatprep.subr.bf16.mxu0 0
      %5313 = vmatpush2.bf16.msra.mxu0 0
      %5314 = vmatprep.subr.bf16.mxu0 0
      %5315 = vmatpush2.bf16.msra.mxu0 0
      %5316 = vmatprep.subr.bf16.mxu0 0
      %5317 = vmatpush2.bf16.msra.mxu0 0
      %5318 = vmatprep.subr.bf16.mxu0 0
      %5319 = vmatpush2.bf16.msra.mxu0 0
      %5320 = vmatprep.subr.bf16.mxu0 0
      %5321 = vmatpush2.bf16.msra.mxu0 0
      %5322 = vmatprep.subr.bf16.mxu0 0
      %5323 = vmatpush2.bf16.msra.mxu0 0
      %5324 = vmatprep.subr.bf16.mxu0 0
      %5325 = vmatpush2.bf16.msra.mxu0 0
      %5326 = vmatprep.mubr.bf16.mxu0 0
      %5327 = vmatmul.mubr.bf16.gmra.mxu0 %v5288
      %v5328 = vpop.f32.mrf.mxu0
      %v5329 = vadd.f32 0.0, %v5328
      %v5330 = vpop.f32.mrf.mxu0
      %v5331 = vadd.f32 0.0, %v5330
      %v5332 = vpop.f32.mrf.mxu0
      %v5333 = vpop.f32.mrf.mxu0
      %5334 = vdwg.mxu0
      %v5335 = vadd.f32 %v4987, %v5329
      %v5336 = vadd.f32 %v4989, %v5331
      %v5337 = vld [vmem:[#allocation2] sm:$0xf]
      %v5338 = vld [vmem:[#allocation2 + $0x4] sm:$0xf]
      %v5339 = vld [vmem:[#allocation2 + $0x8] sm:$0x1]
      %v5340 = vld [vmem:[#allocation2 + $0xc] sm:$0xf]
      %v5341 = vld [vmem:[#allocation2 + $0x10] sm:$0xf]
      %v5342 = vld [vmem:[#allocation2 + $0x14] sm:$0x1]
      %v5343 = vld [vmem:[#allocation2 + $0x18] sm:$0xf]
      %v5344 = vld [vmem:[#allocation2 + $0x1c] sm:$0xf]
      %v5345 = vld [vmem:[#allocation2 + $0x20] sm:$0x1]
      %v5346 = vld [vmem:[#allocation2 + $0x24] sm:$0xf]
      %v5347 = vld [vmem:[#allocation2 + $0x28] sm:$0xf]
      %v5348 = vld [vmem:[#allocation2 + $0x2c] sm:$0x1]
      %v5350 = vshrl.u32 %v5337, 16
      %v5352 = vrot.slane %v5350, 4
      %v5353 = vshll.u32 %v5337, 16
      %v5355 = vrot.slane %v5353, 5
      %v5356 = vor.u32 %v5352, %v5355
      %v5357 = vrot.slane %v5356, 4
      %v5359 = vshll.u32 %v5338, 16
      %v5361 = vrot.slane %v5359, 5
      %v5362 = vsel %vm1618, %v5357, %v5361
      %v5363 = vshrl.u32 %v5338, 16
      %v5365 = vrot.slane %v5363, 4
      %v5366 = vor.u32 %v5365, %v5361
      %v5367 = vrot.slane %v5366, 4
      %v5369 = vshll.u32 %v5339, 16
      %v5371 = vrot.slane %v5369, 5
      %v5372 = vsel %vm1618, %v5367, %v5371
      %v5374 = vshrl.u32 %v5340, 16
      %v5376 = vrot.slane %v5374, 4
      %v5377 = vshll.u32 %v5340, 16
      %v5379 = vrot.slane %v5377, 5
      %v5380 = vor.u32 %v5376, %v5379
      %v5381 = vrot.slane %v5380, 4
      %v5383 = vshll.u32 %v5341, 16
      %v5385 = vrot.slane %v5383, 5
      %v5386 = vsel %vm1618, %v5381, %v5385
      %v5387 = vshrl.u32 %v5341, 16
      %v5389 = vrot.slane %v5387, 4
      %v5390 = vor.u32 %v5389, %v5385
      %v5391 = vrot.slane %v5390, 4
      %v5393 = vshll.u32 %v5342, 16
      %v5395 = vrot.slane %v5393, 5
      %v5396 = vsel %vm1618, %v5391, %v5395
      %v5398 = vshrl.u32 %v5343, 16
      %v5400 = vrot.slane %v5398, 4
      %v5401 = vshll.u32 %v5343, 16
      %v5403 = vrot.slane %v5401, 5
      %v5404 = vor.u32 %v5400, %v5403
      %v5405 = vrot.slane %v5404, 4
      %v5407 = vshll.u32 %v5344, 16
      %v5409 = vrot.slane %v5407, 5
      %v5410 = vsel %vm1618, %v5405, %v5409
      %v5411 = vshrl.u32 %v5344, 16
      %v5413 = vrot.slane %v5411, 4
      %v5414 = vor.u32 %v5413, %v5409
      %v5415 = vrot.slane %v5414, 4
      %v5417 = vshll.u32 %v5345, 16
      %v5419 = vrot.slane %v5417, 5
      %v5420 = vsel %vm1618, %v5415, %v5419
      %v5422 = vshrl.u32 %v5346, 16
      %v5424 = vrot.slane %v5422, 4
      %v5425 = vshll.u32 %v5346, 16
      %v5427 = vrot.slane %v5425, 5
      %v5428 = vor.u32 %v5424, %v5427
      %v5429 = vrot.slane %v5428, 4
      %v5431 = vshll.u32 %v5347, 16
      %v5433 = vrot.slane %v5431, 5
      %v5434 = vsel %vm1618, %v5429, %v5433
      %v5435 = vshrl.u32 %v5347, 16
      %v5437 = vrot.slane %v5435, 4
      %v5438 = vor.u32 %v5437, %v5433
      %v5439 = vrot.slane %v5438, 4
      %v5441 = vshll.u32 %v5348, 16
      %v5443 = vrot.slane %v5441, 5
      %v5444 = vsel %vm1618, %v5439, %v5443
      %v5447 = vpack.i.b16 %v5386, %v5362
      %v5448 = vshrl.u32 %v5362, 16
      %v5449 = vshrl.u32 %v5386, 16
      %v5450 = vpack.i.b16 %v5449, %v5448
      %v5453 = vpack.i.b16 %v5434, %v5410
      %v5454 = vshrl.u32 %v5410, 16
      %v5455 = vshrl.u32 %v5434, 16
      %v5456 = vpack.i.b16 %v5455, %v5454
      %v5459 = vpack.i.b16 %v5396, %v5372
      %v5460 = vshrl.u32 %v5372, 16
      %v5461 = vshrl.u32 %v5396, 16
      %v5462 = vpack.i.b16 %v5461, %v5460
      %v5465 = vpack.i.b16 %v5444, %v5420
      %v5466 = vshrl.u32 %v5420, 16
      %v5467 = vshrl.u32 %v5444, 16
      %v5468 = vpack.i.b16 %v5467, %v5466
      %v5471 = vunpack.c.l.s4 1983009808
      %v5472 = vunpack.c.0.s8 %v5471
      %v5473 = vlaneseq
      %v5474 = vshrl.u32 %v5473, 7
      %v5475 = vsub.s32 %v5472, %v5474
      %v5476 = vrot.slane %v5447, %v5475
      %v5479 = vunpack.c.l.s4 1983009808
      %v5480 = vunpack.c.0.s8 %v5479
      %v5481 = vlaneseq
      %v5482 = vshrl.u32 %v5481, 7
      %v5483 = vsub.s32 %v5480, %v5482
      %v5484 = vrot.slane %v5453, %v5483
      %v5485 = vcombine.low %v5476, %v5484
      %v5486 = vcombine.high %v5476, %v5484
      %v5488 = vunpack.c.l.s4 1934713408
      %v5489 = vunpack.c.0.s8 %v5488
      %v5490 = vlaneseq
      %v5491 = vshrl.u32 %v5490, 7
      %v5492 = vsub.s32 %v5489, %v5491
      %v5493 = vrot.slane %v5485, %v5492
      %v5495 = vunpack.c.l.s4 1934713408
      %v5496 = vunpack.c.0.s8 %v5495
      %v5497 = vlaneseq
      %v5498 = vshrl.u32 %v5497, 7
      %v5499 = vsub.s32 %v5496, %v5498
      %v5500 = vrot.slane %v5486, %v5499
      %v5501 = vcombine.high %v5493, 0
      %v5502 = vcombine.high %v5500, 0
      %v5505 = vunpack.c.l.s4 1983009808
      %v5506 = vunpack.c.0.s8 %v5505
      %v5507 = vlaneseq
      %v5508 = vshrl.u32 %v5507, 7
      %v5509 = vsub.s32 %v5506, %v5508
      %v5510 = vrot.slane %v5450, %v5509
      %v5513 = vunpack.c.l.s4 1983009808
      %v5514 = vunpack.c.0.s8 %v5513
      %v5515 = vlaneseq
      %v5516 = vshrl.u32 %v5515, 7
      %v5517 = vsub.s32 %v5514, %v5516
      %v5518 = vrot.slane %v5456, %v5517
      %v5519 = vcombine.low %v5510, %v5518
      %v5520 = vcombine.high %v5510, %v5518
      %v5522 = vunpack.c.l.s4 1934713408
      %v5523 = vunpack.c.0.s8 %v5522
      %v5524 = vlaneseq
      %v5525 = vshrl.u32 %v5524, 7
      %v5526 = vsub.s32 %v5523, %v5525
      %v5527 = vrot.slane %v5519, %v5526
      %v5529 = vunpack.c.l.s4 1934713408
      %v5530 = vunpack.c.0.s8 %v5529
      %v5531 = vlaneseq
      %v5532 = vshrl.u32 %v5531, 7
      %v5533 = vsub.s32 %v5530, %v5532
      %v5534 = vrot.slane %v5520, %v5533
      %v5535 = vcombine.high %v5527, 0
      %v5536 = vcombine.high %v5534, 0
      %v5539 = vunpack.c.l.s4 1983009808
      %v5540 = vunpack.c.0.s8 %v5539
      %v5541 = vlaneseq
      %v5542 = vshrl.u32 %v5541, 7
      %v5543 = vsub.s32 %v5540, %v5542
      %v5544 = vrot.slane %v5459, %v5543
      %v5547 = vunpack.c.l.s4 1983009808
      %v5548 = vunpack.c.0.s8 %v5547
      %v5549 = vlaneseq
      %v5550 = vshrl.u32 %v5549, 7
      %v5551 = vsub.s32 %v5548, %v5550
      %v5552 = vrot.slane %v5465, %v5551
      %v5553 = vcombine.low %v5544, %v5552
      %v5554 = vcombine.high %v5544, %v5552
      %v5556 = vunpack.c.l.s4 1934713408
      %v5557 = vunpack.c.0.s8 %v5556
      %v5558 = vlaneseq
      %v5559 = vshrl.u32 %v5558, 7
      %v5560 = vsub.s32 %v5557, %v5559
      %v5561 = vrot.slane %v5553, %v5560
      %v5563 = vunpack.c.l.s4 1934713408
      %v5564 = vunpack.c.0.s8 %v5563
      %v5565 = vlaneseq
      %v5566 = vshrl.u32 %v5565, 7
      %v5567 = vsub.s32 %v5564, %v5566
      %v5568 = vrot.slane %v5554, %v5567
      %v5569 = vcombine.high %v5561, 0
      %v5570 = vcombine.high %v5568, 0
      %v5573 = vunpack.c.l.s4 1983009808
      %v5574 = vunpack.c.0.s8 %v5573
      %v5575 = vlaneseq
      %v5576 = vshrl.u32 %v5575, 7
      %v5577 = vsub.s32 %v5574, %v5576
      %v5578 = vrot.slane %v5462, %v5577
      %v5581 = vunpack.c.l.s4 1983009808
      %v5582 = vunpack.c.0.s8 %v5581
      %v5583 = vlaneseq
      %v5584 = vshrl.u32 %v5583, 7
      %v5585 = vsub.s32 %v5582, %v5584
      %v5586 = vrot.slane %v5468, %v5585
      %v5587 = vcombine.low %v5578, %v5586
      %v5588 = vcombine.high %v5578, %v5586
      %v5590 = vunpack.c.l.s4 1934713408
      %v5591 = vunpack.c.0.s8 %v5590
      %v5592 = vlaneseq
      %v5593 = vshrl.u32 %v5592, 7
      %v5594 = vsub.s32 %v5591, %v5593
      %v5595 = vrot.slane %v5587, %v5594
      %v5597 = vunpack.c.l.s4 1934713408
      %v5598 = vunpack.c.0.s8 %v5597
      %v5599 = vlaneseq
      %v5600 = vshrl.u32 %v5599, 7
      %v5601 = vsub.s32 %v5598, %v5600
      %v5602 = vrot.slane %v5588, %v5601
      %v5603 = vcombine.high %v5595, 0
      %v5604 = vcombine.high %v5602, 0
      %v5606 = vunpack.c.l.b16 %v5527
      %v5607 = vpack.c.b16 %v5606, %v5606
      %5608 = vrot.lane.b32.xlu0 %v5607, 16
      %v5609 = vpop.permute.xlu0 %5608
      %v5611 = vunpack.c.l.b16 %v5501
      %v5612 = vpack.c.b16 %v5611, %v5611
      %5613 = vrot.lane.b32.xlu0 %v5612, 32
      %v5614 = vpop.permute.xlu0 %5613
      %v5616 = vunpack.c.l.b16 %v5535
      %v5617 = vpack.c.b16 %v5616, %v5616
      %5618 = vrot.lane.b32.xlu0 %v5617, 48
      %v5619 = vpop.permute.xlu0 %5618
      %v5621 = vunpack.c.l.b16 %v5500
      %v5622 = vpack.c.b16 %v5621, %v5621
      %5623 = vrot.lane.b32.xlu0 %v5622, 64
      %v5624 = vpop.permute.xlu0 %5623
      %v5626 = vunpack.c.l.b16 %v5534
      %v5627 = vpack.c.b16 %v5626, %v5626
      %5628 = vrot.lane.b32.xlu0 %v5627, 80
      %v5629 = vpop.permute.xlu0 %5628
      %v5631 = vunpack.c.l.b16 %v5502
      %v5632 = vpack.c.b16 %v5631, %v5631
      %5633 = vrot.lane.b32.xlu0 %v5632, 96
      %v5634 = vpop.permute.xlu0 %5633
      %v5636 = vunpack.c.l.b16 %v5536
      %v5637 = vpack.c.b16 %v5636, %v5636
      %5638 = vrot.lane.b32.xlu0 %v5637, 112
      %v5639 = vpop.permute.xlu0 %5638
      %v5641 = vunpack.c.l.b16 %v5595
      %v5642 = vpack.c.b16 %v5641, %v5641
      %5643 = vrot.lane.b32.xlu0 %v5642, 16
      %v5644 = vpop.permute.xlu0 %5643
      %v5646 = vunpack.c.l.b16 %v5569
      %v5647 = vpack.c.b16 %v5646, %v5646
      %5648 = vrot.lane.b32.xlu0 %v5647, 32
      %v5649 = vpop.permute.xlu0 %5648
      %v5651 = vunpack.c.l.b16 %v5603
      %v5652 = vpack.c.b16 %v5651, %v5651
      %5653 = vrot.lane.b32.xlu0 %v5652, 48
      %v5654 = vpop.permute.xlu0 %5653
      %v5656 = vunpack.c.l.b16 %v5568
      %v5657 = vpack.c.b16 %v5656, %v5656
      %5658 = vrot.lane.b32.xlu0 %v5657, 64
      %v5659 = vpop.permute.xlu0 %5658
      %v5661 = vunpack.c.l.b16 %v5602
      %v5662 = vpack.c.b16 %v5661, %v5661
      %5663 = vrot.lane.b32.xlu0 %v5662, 80
      %v5664 = vpop.permute.xlu0 %5663
      %v5666 = vunpack.c.l.b16 %v5570
      %v5667 = vpack.c.b16 %v5666, %v5666
      %5668 = vrot.lane.b32.xlu0 %v5667, 96
      %v5669 = vpop.permute.xlu0 %5668
      %v5671 = vunpack.c.l.b16 %v5604
      %v5672 = vpack.c.b16 %v5671, %v5671
      %5673 = vrot.lane.b32.xlu0 %v5672, 112
      %v5674 = vpop.permute.xlu0 %5673
      %v5677 = vsel %vm838, %v5493, %v5609
      %v5679 = vsel %vm842, %v5677, %v5614
      %v5681 = vsel %vm845, %v5679, %v5619
      %v5683 = vsel %vm848, %v5681, %v5624
      %v5685 = vsel %vm851, %v5683, %v5629
      %v5687 = vsel %vm854, %v5685, %v5634
      %v5689 = vsel %vm857, %v5687, %v5639
      %v5692 = vsel %vm838, %v5561, %v5644
      %v5694 = vsel %vm842, %v5692, %v5649
      %v5696 = vsel %vm845, %v5694, %v5654
      %v5698 = vsel %vm848, %v5696, %v5659
      %v5700 = vsel %vm851, %v5698, %v5664
      %v5702 = vsel %vm854, %v5700, %v5669
      %v5704 = vsel %vm857, %v5702, %v5674
      %s5705 = scalar_lea.vmem %s3, 6
      %v5706 = vld [vmem:[%s5705] sm:$0x3]
      %v5708 = vsel %vm1162, %v5706, 0
      %v5710 = vsel %vm1166, %v5689, 0
      %v5712 = vsel %vm1166, %v5704, 0
      %5714 = vmatprep.subr.bf16.mxu0 0
      %5715 = vmatpush1.bf16.msra.mxu0 0
      %5716 = vmatprep.subr.bf16.mxu0 0
      %5717 = vmatpush1.bf16.msra.mxu0 0
      %5718 = vmatprep.subr.bf16.mxu0 0
      %5719 = vmatpush1.bf16.msra.mxu0 0
      %5720 = vmatprep.subr.bf16.mxu0 0
      %5721 = vmatpush1.bf16.msra.mxu0 0
      %5722 = vmatprep.subr.bf16.mxu0 0
      %5723 = vmatpush1.bf16.msra.mxu0 0
      %5724 = vmatprep.subr.bf16.mxu0 0
      %5725 = vmatpush1.bf16.msra.mxu0 0
      %5726 = vmatprep.subr.bf16.mxu0 0
      %5727 = vmatpush1.bf16.msra.mxu0 0
      %5728 = vmatprep.subr.bf16.mxu0 %v5712
      %5729 = vmatpush1.bf16.msra.mxu0 %v5710
      %5730 = vmatprep.subr.bf16.mxu0 0
      %5731 = vmatpush2.bf16.msra.mxu0 0
      %5732 = vmatprep.subr.bf16.mxu0 0
      %5733 = vmatpush2.bf16.msra.mxu0 0
      %5734 = vmatprep.subr.bf16.mxu0 0
      %5735 = vmatpush2.bf16.msra.mxu0 0
      %5736 = vmatprep.subr.bf16.mxu0 0
      %5737 = vmatpush2.bf16.msra.mxu0 0
      %5738 = vmatprep.subr.bf16.mxu0 0
      %5739 = vmatpush2.bf16.msra.mxu0 0
      %5740 = vmatprep.subr.bf16.mxu0 0
      %5741 = vmatpush2.bf16.msra.mxu0 0
      %5742 = vmatprep.subr.bf16.mxu0 0
      %5743 = vmatpush2.bf16.msra.mxu0 0
      %5744 = vmatprep.subr.bf16.mxu0 0
      %5745 = vmatpush2.bf16.msra.mxu0 0
      %5746 = vmatprep.mubr.bf16.mxu0 0
      %5747 = vmatmul.mubr.bf16.gmra.mxu0 %v5708
      %v5748 = vpop.f32.mrf.mxu0
      %v5749 = vadd.f32 0.0, %v5748
      %v5750 = vpop.f32.mrf.mxu0
      %v5751 = vadd.f32 0.0, %v5750
      %v5752 = vpop.f32.mrf.mxu0
      %v5753 = vpop.f32.mrf.mxu0
      %5754 = vdwg.mxu0
      %v5755 = vadd.f32 %v5335, %v5749
      %v5756 = vadd.f32 %v5336, %v5751
      %v5757 = vld [vmem:[#allocation2] sm:$0xf]
      %v5758 = vld [vmem:[#allocation2 + $0x4] sm:$0xf]
      %v5759 = vld [vmem:[#allocation2 + $0x8] sm:$0x1]
      %v5760 = vld [vmem:[#allocation2 + $0xc] sm:$0xf]
      %v5761 = vld [vmem:[#allocation2 + $0x10] sm:$0xf]
      %v5762 = vld [vmem:[#allocation2 + $0x14] sm:$0x1]
      %v5763 = vld [vmem:[#allocation2 + $0x18] sm:$0xf]
      %v5764 = vld [vmem:[#allocation2 + $0x1c] sm:$0xf]
      %v5765 = vld [vmem:[#allocation2 + $0x20] sm:$0x1]
      %v5766 = vld [vmem:[#allocation2 + $0x24] sm:$0xf]
      %v5767 = vld [vmem:[#allocation2 + $0x28] sm:$0xf]
      %v5768 = vld [vmem:[#allocation2 + $0x2c] sm:$0x1]
      %v5770 = vshrl.u32 %v5757, 16
      %v5772 = vrot.slane %v5770, 4
      %v5773 = vshll.u32 %v5757, 16
      %v5775 = vrot.slane %v5773, 5
      %v5776 = vor.u32 %v5772, %v5775
      %v5777 = vrot.slane %v5776, 4
      %v5779 = vshll.u32 %v5758, 16
      %v5781 = vrot.slane %v5779, 5
      %v5782 = vsel %vm1618, %v5777, %v5781
      %v5783 = vshrl.u32 %v5758, 16
      %v5785 = vrot.slane %v5783, 4
      %v5786 = vor.u32 %v5785, %v5781
      %v5787 = vrot.slane %v5786, 4
      %v5789 = vshll.u32 %v5759, 16
      %v5791 = vrot.slane %v5789, 5
      %v5792 = vsel %vm1618, %v5787, %v5791
      %v5794 = vshrl.u32 %v5760, 16
      %v5796 = vrot.slane %v5794, 4
      %v5797 = vshll.u32 %v5760, 16
      %v5799 = vrot.slane %v5797, 5
      %v5800 = vor.u32 %v5796, %v5799
      %v5801 = vrot.slane %v5800, 4
      %v5803 = vshll.u32 %v5761, 16
      %v5805 = vrot.slane %v5803, 5
      %v5806 = vsel %vm1618, %v5801, %v5805
      %v5807 = vshrl.u32 %v5761, 16
      %v5809 = vrot.slane %v5807, 4
      %v5810 = vor.u32 %v5809, %v5805
      %v5811 = vrot.slane %v5810, 4
      %v5813 = vshll.u32 %v5762, 16
      %v5815 = vrot.slane %v5813, 5
      %v5816 = vsel %vm1618, %v5811, %v5815
      %v5818 = vshrl.u32 %v5763, 16
      %v5820 = vrot.slane %v5818, 4
      %v5821 = vshll.u32 %v5763, 16
      %v5823 = vrot.slane %v5821, 5
      %v5824 = vor.u32 %v5820, %v5823
      %v5825 = vrot.slane %v5824, 4
      %v5827 = vshll.u32 %v5764, 16
      %v5829 = vrot.slane %v5827, 5
      %v5830 = vsel %vm1618, %v5825, %v5829
      %v5831 = vshrl.u32 %v5764, 16
      %v5833 = vrot.slane %v5831, 4
      %v5834 = vor.u32 %v5833, %v5829
      %v5835 = vrot.slane %v5834, 4
      %v5837 = vshll.u32 %v5765, 16
      %v5839 = vrot.slane %v5837, 5
      %v5840 = vsel %vm1618, %v5835, %v5839
      %v5842 = vshrl.u32 %v5766, 16
      %v5844 = vrot.slane %v5842, 4
      %v5845 = vshll.u32 %v5766, 16
      %v5847 = vrot.slane %v5845, 5
      %v5848 = vor.u32 %v5844, %v5847
      %v5849 = vrot.slane %v5848, 4
      %v5851 = vshll.u32 %v5767, 16
      %v5853 = vrot.slane %v5851, 5
      %v5854 = vsel %vm1618, %v5849, %v5853
      %v5855 = vshrl.u32 %v5767, 16
      %v5857 = vrot.slane %v5855, 4
      %v5858 = vor.u32 %v5857, %v5853
      %v5859 = vrot.slane %v5858, 4
      %v5861 = vshll.u32 %v5768, 16
      %v5863 = vrot.slane %v5861, 5
      %v5864 = vsel %vm1618, %v5859, %v5863
      %5865 = vrot.lane.b32.xlu0 %v5782, 127
      %v5866 = vpop.permute.xlu0 %5865
      %5867 = vrot.lane.b32.xlu0 %v5792, 127
      %v5868 = vpop.permute.xlu0 %5867
      %5869 = vrot.lane.b32.xlu0 %v5806, 127
      %v5870 = vpop.permute.xlu0 %5869
      %5871 = vrot.lane.b32.xlu0 %v5816, 127
      %v5872 = vpop.permute.xlu0 %5871
      %5873 = vrot.lane.b32.xlu0 %v5830, 127
      %v5874 = vpop.permute.xlu0 %5873
      %5875 = vrot.lane.b32.xlu0 %v5840, 127
      %v5876 = vpop.permute.xlu0 %5875
      %5877 = vrot.lane.b32.xlu0 %v5854, 127
      %v5878 = vpop.permute.xlu0 %5877
      %5879 = vrot.lane.b32.xlu0 %v5864, 127
      %v5880 = vpop.permute.xlu0 %5879
      %v5883 = vpack.i.b16 %v5870, %v5866
      %v5884 = vshrl.u32 %v5866, 16
      %v5885 = vshrl.u32 %v5870, 16
      %v5886 = vpack.i.b16 %v5885, %v5884
      %v5889 = vpack.i.b16 %v5878, %v5874
      %v5890 = vshrl.u32 %v5874, 16
      %v5891 = vshrl.u32 %v5878, 16
      %v5892 = vpack.i.b16 %v5891, %v5890
      %v5895 = vpack.i.b16 %v5872, %v5868
      %v5896 = vshrl.u32 %v5868, 16
      %v5897 = vshrl.u32 %v5872, 16
      %v5898 = vpack.i.b16 %v5897, %v5896
      %v5901 = vpack.i.b16 %v5880, %v5876
      %v5902 = vshrl.u32 %v5876, 16
      %v5903 = vshrl.u32 %v5880, 16
      %v5904 = vpack.i.b16 %v5903, %v5902
      %v5907 = vunpack.c.l.s4 1983009808
      %v5908 = vunpack.c.0.s8 %v5907
      %v5909 = vlaneseq
      %v5910 = vshrl.u32 %v5909, 7
      %v5911 = vsub.s32 %v5908, %v5910
      %v5912 = vrot.slane %v5883, %v5911
      %v5915 = vunpack.c.l.s4 1983009808
      %v5916 = vunpack.c.0.s8 %v5915
      %v5917 = vlaneseq
      %v5918 = vshrl.u32 %v5917, 7
      %v5919 = vsub.s32 %v5916, %v5918
      %v5920 = vrot.slane %v5889, %v5919
      %v5921 = vcombine.low %v5912, %v5920
      %v5922 = vcombine.high %v5912, %v5920
      %v5924 = vunpack.c.l.s4 1934713408
      %v5925 = vunpack.c.0.s8 %v5924
      %v5926 = vlaneseq
      %v5927 = vshrl.u32 %v5926, 7
      %v5928 = vsub.s32 %v5925, %v5927
      %v5929 = vrot.slane %v5921, %v5928
      %v5931 = vunpack.c.l.s4 1934713408
      %v5932 = vunpack.c.0.s8 %v5931
      %v5933 = vlaneseq
      %v5934 = vshrl.u32 %v5933, 7
      %v5935 = vsub.s32 %v5932, %v5934
      %v5936 = vrot.slane %v5922, %v5935
      %v5937 = vcombine.high %v5929, 0
      %v5938 = vcombine.high %v5936, 0
      %v5941 = vunpack.c.l.s4 1983009808
      %v5942 = vunpack.c.0.s8 %v5941
      %v5943 = vlaneseq
      %v5944 = vshrl.u32 %v5943, 7
      %v5945 = vsub.s32 %v5942, %v5944
      %v5946 = vrot.slane %v5886, %v5945
      %v5949 = vunpack.c.l.s4 1983009808
      %v5950 = vunpack.c.0.s8 %v5949
      %v5951 = vlaneseq
      %v5952 = vshrl.u32 %v5951, 7
      %v5953 = vsub.s32 %v5950, %v5952
      %v5954 = vrot.slane %v5892, %v5953
      %v5955 = vcombine.low %v5946, %v5954
      %v5956 = vcombine.high %v5946, %v5954
      %v5958 = vunpack.c.l.s4 1934713408
      %v5959 = vunpack.c.0.s8 %v5958
      %v5960 = vlaneseq
      %v5961 = vshrl.u32 %v5960, 7
      %v5962 = vsub.s32 %v5959, %v5961
      %v5963 = vrot.slane %v5955, %v5962
      %v5965 = vunpack.c.l.s4 1934713408
      %v5966 = vunpack.c.0.s8 %v5965
      %v5967 = vlaneseq
      %v5968 = vshrl.u32 %v5967, 7
      %v5969 = vsub.s32 %v5966, %v5968
      %v5970 = vrot.slane %v5956, %v5969
      %v5971 = vcombine.high %v5963, 0
      %v5972 = vcombine.high %v5970, 0
      %v5975 = vunpack.c.l.s4 1983009808
      %v5976 = vunpack.c.0.s8 %v5975
      %v5977 = vlaneseq
      %v5978 = vshrl.u32 %v5977, 7
      %v5979 = vsub.s32 %v5976, %v5978
      %v5980 = vrot.slane %v5895, %v5979
      %v5983 = vunpack.c.l.s4 1983009808
      %v5984 = vunpack.c.0.s8 %v5983
      %v5985 = vlaneseq
      %v5986 = vshrl.u32 %v5985, 7
      %v5987 = vsub.s32 %v5984, %v5986
      %v5988 = vrot.slane %v5901, %v5987
      %v5989 = vcombine.low %v5980, %v5988
      %v5990 = vcombine.high %v5980, %v5988
      %v5992 = vunpack.c.l.s4 1934713408
      %v5993 = vunpack.c.0.s8 %v5992
      %v5994 = vlaneseq
      %v5995 = vshrl.u32 %v5994, 7
      %v5996 = vsub.s32 %v5993, %v5995
      %v5997 = vrot.slane %v5989, %v5996
      %v5999 = vunpack.c.l.s4 1934713408
      %v6000 = vunpack.c.0.s8 %v5999
      %v6001 = vlaneseq
      %v6002 = vshrl.u32 %v6001, 7
      %v6003 = vsub.s32 %v6000, %v6002
      %v6004 = vrot.slane %v5990, %v6003
      %v6005 = vcombine.high %v5997, 0
      %v6006 = vcombine.high %v6004, 0
      %v6009 = vunpack.c.l.s4 1983009808
      %v6010 = vunpack.c.0.s8 %v6009
      %v6011 = vlaneseq
      %v6012 = vshrl.u32 %v6011, 7
      %v6013 = vsub.s32 %v6010, %v6012
      %v6014 = vrot.slane %v5898, %v6013
      %v6017 = vunpack.c.l.s4 1983009808
      %v6018 = vunpack.c.0.s8 %v6017
      %v6019 = vlaneseq
      %v6020 = vshrl.u32 %v6019, 7
      %v6021 = vsub.s32 %v6018, %v6020
      %v6022 = vrot.slane %v5904, %v6021
      %v6023 = vcombine.low %v6014, %v6022
      %v6024 = vcombine.high %v6014, %v6022
      %v6026 = vunpack.c.l.s4 1934713408
      %v6027 = vunpack.c.0.s8 %v6026
      %v6028 = vlaneseq
      %v6029 = vshrl.u32 %v6028, 7
      %v6030 = vsub.s32 %v6027, %v6029
      %v6031 = vrot.slane %v6023, %v6030
      %v6033 = vunpack.c.l.s4 1934713408
      %v6034 = vunpack.c.0.s8 %v6033
      %v6035 = vlaneseq
      %v6036 = vshrl.u32 %v6035, 7
      %v6037 = vsub.s32 %v6034, %v6036
      %v6038 = vrot.slane %v6024, %v6037
      %v6039 = vcombine.high %v6031, 0
      %v6040 = vcombine.high %v6038, 0
      %v6042 = vunpack.c.l.b16 %v5963
      %v6043 = vpack.c.b16 %v6042, %v6042
      %6044 = vrot.lane.b32.xlu0 %v6043, 16
      %v6045 = vpop.permute.xlu0 %6044
      %v6047 = vunpack.c.l.b16 %v5937
      %v6048 = vpack.c.b16 %v6047, %v6047
      %6049 = vrot.lane.b32.xlu0 %v6048, 32
      %v6050 = vpop.permute.xlu0 %6049
      %v6052 = vunpack.c.l.b16 %v5971
      %v6053 = vpack.c.b16 %v6052, %v6052
      %6054 = vrot.lane.b32.xlu0 %v6053, 48
      %v6055 = vpop.permute.xlu0 %6054
      %v6057 = vunpack.c.l.b16 %v5936
      %v6058 = vpack.c.b16 %v6057, %v6057
      %6059 = vrot.lane.b32.xlu0 %v6058, 64
      %v6060 = vpop.permute.xlu0 %6059
      %v6062 = vunpack.c.l.b16 %v5970
      %v6063 = vpack.c.b16 %v6062, %v6062
      %6064 = vrot.lane.b32.xlu0 %v6063, 80
      %v6065 = vpop.permute.xlu0 %6064
      %v6067 = vunpack.c.l.b16 %v5938
      %v6068 = vpack.c.b16 %v6067, %v6067
      %6069 = vrot.lane.b32.xlu0 %v6068, 96
      %v6070 = vpop.permute.xlu0 %6069
      %v6072 = vunpack.c.l.b16 %v5972
      %v6073 = vpack.c.b16 %v6072, %v6072
      %6074 = vrot.lane.b32.xlu0 %v6073, 112
      %v6075 = vpop.permute.xlu0 %6074
      %v6077 = vunpack.c.l.b16 %v6031
      %v6078 = vpack.c.b16 %v6077, %v6077
      %6079 = vrot.lane.b32.xlu0 %v6078, 16
      %v6080 = vpop.permute.xlu0 %6079
      %v6082 = vunpack.c.l.b16 %v6005
      %v6083 = vpack.c.b16 %v6082, %v6082
      %6084 = vrot.lane.b32.xlu0 %v6083, 32
      %v6085 = vpop.permute.xlu0 %6084
      %v6087 = vunpack.c.l.b16 %v6039
      %v6088 = vpack.c.b16 %v6087, %v6087
      %6089 = vrot.lane.b32.xlu0 %v6088, 48
      %v6090 = vpop.permute.xlu0 %6089
      %v6092 = vunpack.c.l.b16 %v6004
      %v6093 = vpack.c.b16 %v6092, %v6092
      %6094 = vrot.lane.b32.xlu0 %v6093, 64
      %v6095 = vpop.permute.xlu0 %6094
      %v6097 = vunpack.c.l.b16 %v6038
      %v6098 = vpack.c.b16 %v6097, %v6097
      %6099 = vrot.lane.b32.xlu0 %v6098, 80
      %v6100 = vpop.permute.xlu0 %6099
      %v6102 = vunpack.c.l.b16 %v6006
      %v6103 = vpack.c.b16 %v6102, %v6102
      %6104 = vrot.lane.b32.xlu0 %v6103, 96
      %v6105 = vpop.permute.xlu0 %6104
      %v6107 = vunpack.c.l.b16 %v6040
      %v6108 = vpack.c.b16 %v6107, %v6107
      %6109 = vrot.lane.b32.xlu0 %v6108, 112
      %v6110 = vpop.permute.xlu0 %6109
      %v6113 = vsel %vm838, %v5929, %v6045
      %v6115 = vsel %vm842, %v6113, %v6050
      %v6117 = vsel %vm845, %v6115, %v6055
      %v6119 = vsel %vm848, %v6117, %v6060
      %v6121 = vsel %vm851, %v6119, %v6065
      %v6123 = vsel %vm854, %v6121, %v6070
      %v6125 = vsel %vm857, %v6123, %v6075
      %v6128 = vsel %vm838, %v5997, %v6080
      %v6130 = vsel %vm842, %v6128, %v6085
      %v6132 = vsel %vm845, %v6130, %v6090
      %v6134 = vsel %vm848, %v6132, %v6095
      %v6136 = vsel %vm851, %v6134, %v6100
      %v6138 = vsel %vm854, %v6136, %v6105
      %v6140 = vsel %vm857, %v6138, %v6110
      %s6141 = scalar_lea.vmem %s3, 8
      %v6142 = vld [vmem:[%s6141] sm:$0x3]
      %v6144 = vsel %vm1162, %v6142, 0
      %v6146 = vsel %vm1166, %v6125, 0
      %v6148 = vsel %vm1166, %v6140, 0
      %6150 = vmatprep.subr.bf16.mxu0 0
      %6151 = vmatpush1.bf16.msra.mxu0 0
      %6152 = vmatprep.subr.bf16.mxu0 0
      %6153 = vmatpush1.bf16.msra.mxu0 0
      %6154 = vmatprep.subr.bf16.mxu0 0
      %6155 = vmatpush1.bf16.msra.mxu0 0
      %6156 = vmatprep.subr.bf16.mxu0 0
      %6157 = vmatpush1.bf16.msra.mxu0 0
      %6158 = vmatprep.subr.bf16.mxu0 0
      %6159 = vmatpush1.bf16.msra.mxu0 0
      %6160 = vmatprep.subr.bf16.mxu0 0
      %6161 = vmatpush1.bf16.msra.mxu0 0
      %6162 = vmatprep.subr.bf16.mxu0 0
      %6163 = vmatpush1.bf16.msra.mxu0 0
      %6164 = vmatprep.subr.bf16.mxu0 %v6148
      %6165 = vmatpush1.bf16.msra.mxu0 %v6146
      %6166 = vmatprep.subr.bf16.mxu0 0
      %6167 = vmatpush2.bf16.msra.mxu0 0
      %6168 = vmatprep.subr.bf16.mxu0 0
      %6169 = vmatpush2.bf16.msra.mxu0 0
      %6170 = vmatprep.subr.bf16.mxu0 0
      %6171 = vmatpush2.bf16.msra.mxu0 0
      %6172 = vmatprep.subr.bf16.mxu0 0
      %6173 = vmatpush2.bf16.msra.mxu0 0
      %6174 = vmatprep.subr.bf16.mxu0 0
      %6175 = vmatpush2.bf16.msra.mxu0 0
      %6176 = vmatprep.subr.bf16.mxu0 0
      %6177 = vmatpush2.bf16.msra.mxu0 0
      %6178 = vmatprep.subr.bf16.mxu0 0
      %6179 = vmatpush2.bf16.msra.mxu0 0
      %6180 = vmatprep.subr.bf16.mxu0 0
      %6181 = vmatpush2.bf16.msra.mxu0 0
      %6182 = vmatprep.mubr.bf16.mxu0 0
      %6183 = vmatmul.mubr.bf16.gmra.mxu0 %v6144
      %v6184 = vpop.f32.mrf.mxu0
      %v6185 = vadd.f32 0.0, %v6184
      %v6186 = vpop.f32.mrf.mxu0
      %v6187 = vadd.f32 0.0, %v6186
      %v6188 = vpop.f32.mrf.mxu0
      %v6189 = vpop.f32.mrf.mxu0
      %6190 = vdwg.mxu0
      %v6191 = vadd.f32 %v5755, %v6185
      %v6192 = vadd.f32 %v5756, %v6187
      %v6193 = vld [vmem:[#allocation2] sm:$0xf]
      %v6194 = vld [vmem:[#allocation2 + $0x4] sm:$0xf]
      %v6195 = vld [vmem:[#allocation2 + $0x8] sm:$0x1]
      %v6196 = vld [vmem:[#allocation2 + $0xc] sm:$0xf]
      %v6197 = vld [vmem:[#allocation2 + $0x10] sm:$0xf]
      %v6198 = vld [vmem:[#allocation2 + $0x14] sm:$0x1]
      %v6199 = vld [vmem:[#allocation2 + $0x18] sm:$0xf]
      %v6200 = vld [vmem:[#allocation2 + $0x1c] sm:$0xf]
      %v6201 = vld [vmem:[#allocation2 + $0x20] sm:$0x1]
      %v6202 = vld [vmem:[#allocation2 + $0x24] sm:$0xf]
      %v6203 = vld [vmem:[#allocation2 + $0x28] sm:$0xf]
      %v6204 = vld [vmem:[#allocation2 + $0x2c] sm:$0x1]
      %v6206 = vshrl.u32 %v6193, 16
      %v6208 = vrot.slane %v6206, 4
      %v6209 = vshll.u32 %v6193, 16
      %v6211 = vrot.slane %v6209, 5
      %v6212 = vor.u32 %v6208, %v6211
      %v6213 = vrot.slane %v6212, 4
      %v6215 = vshll.u32 %v6194, 16
      %v6217 = vrot.slane %v6215, 5
      %v6218 = vsel %vm1618, %v6213, %v6217
      %v6219 = vshrl.u32 %v6194, 16
      %v6221 = vrot.slane %v6219, 4
      %v6222 = vor.u32 %v6221, %v6217
      %v6223 = vrot.slane %v6222, 4
      %v6225 = vshll.u32 %v6195, 16
      %v6227 = vrot.slane %v6225, 5
      %v6228 = vsel %vm1618, %v6223, %v6227
      %v6230 = vshrl.u32 %v6196, 16
      %v6232 = vrot.slane %v6230, 4
      %v6233 = vshll.u32 %v6196, 16
      %v6235 = vrot.slane %v6233, 5
      %v6236 = vor.u32 %v6232, %v6235
      %v6237 = vrot.slane %v6236, 4
      %v6239 = vshll.u32 %v6197, 16
      %v6241 = vrot.slane %v6239, 5
      %v6242 = vsel %vm1618, %v6237, %v6241
      %v6243 = vshrl.u32 %v6197, 16
      %v6245 = vrot.slane %v6243, 4
      %v6246 = vor.u32 %v6245, %v6241
      %v6247 = vrot.slane %v6246, 4
      %v6249 = vshll.u32 %v6198, 16
      %v6251 = vrot.slane %v6249, 5
      %v6252 = vsel %vm1618, %v6247, %v6251
      %v6254 = vshrl.u32 %v6199, 16
      %v6256 = vrot.slane %v6254, 4
      %v6257 = vshll.u32 %v6199, 16
      %v6259 = vrot.slane %v6257, 5
      %v6260 = vor.u32 %v6256, %v6259
      %v6261 = vrot.slane %v6260, 4
      %v6263 = vshll.u32 %v6200, 16
      %v6265 = vrot.slane %v6263, 5
      %v6266 = vsel %vm1618, %v6261, %v6265
      %v6267 = vshrl.u32 %v6200, 16
      %v6269 = vrot.slane %v6267, 4
      %v6270 = vor.u32 %v6269, %v6265
      %v6271 = vrot.slane %v6270, 4
      %v6273 = vshll.u32 %v6201, 16
      %v6275 = vrot.slane %v6273, 5
      %v6276 = vsel %vm1618, %v6271, %v6275
      %v6278 = vshrl.u32 %v6202, 16
      %v6280 = vrot.slane %v6278, 4
      %v6281 = vshll.u32 %v6202, 16
      %v6283 = vrot.slane %v6281, 5
      %v6284 = vor.u32 %v6280, %v6283
      %v6285 = vrot.slane %v6284, 4
      %v6287 = vshll.u32 %v6203, 16
      %v6289 = vrot.slane %v6287, 5
      %v6290 = vsel %vm1618, %v6285, %v6289
      %v6291 = vshrl.u32 %v6203, 16
      %v6293 = vrot.slane %v6291, 4
      %v6294 = vor.u32 %v6293, %v6289
      %v6295 = vrot.slane %v6294, 4
      %v6297 = vshll.u32 %v6204, 16
      %v6299 = vrot.slane %v6297, 5
      %v6300 = vsel %vm1618, %v6295, %v6299
      %6301 = vrot.lane.b32.xlu0 %v6218, 126
      %v6302 = vpop.permute.xlu0 %6301
      %6303 = vrot.lane.b32.xlu0 %v6228, 126
      %v6304 = vpop.permute.xlu0 %6303
      %6305 = vrot.lane.b32.xlu0 %v6242, 126
      %v6306 = vpop.permute.xlu0 %6305
      %6307 = vrot.lane.b32.xlu0 %v6252, 126
      %v6308 = vpop.permute.xlu0 %6307
      %6309 = vrot.lane.b32.xlu0 %v6266, 126
      %v6310 = vpop.permute.xlu0 %6309
      %6311 = vrot.lane.b32.xlu0 %v6276, 126
      %v6312 = vpop.permute.xlu0 %6311
      %6313 = vrot.lane.b32.xlu0 %v6290, 126
      %v6314 = vpop.permute.xlu0 %6313
      %6315 = vrot.lane.b32.xlu0 %v6300, 126
      %v6316 = vpop.permute.xlu0 %6315
      %v6319 = vpack.i.b16 %v6306, %v6302
      %v6320 = vshrl.u32 %v6302, 16
      %v6321 = vshrl.u32 %v6306, 16
      %v6322 = vpack.i.b16 %v6321, %v6320
      %v6325 = vpack.i.b16 %v6314, %v6310
      %v6326 = vshrl.u32 %v6310, 16
      %v6327 = vshrl.u32 %v6314, 16
      %v6328 = vpack.i.b16 %v6327, %v6326
      %v6331 = vpack.i.b16 %v6308, %v6304
      %v6332 = vshrl.u32 %v6304, 16
      %v6333 = vshrl.u32 %v6308, 16
      %v6334 = vpack.i.b16 %v6333, %v6332
      %v6337 = vpack.i.b16 %v6316, %v6312
      %v6338 = vshrl.u32 %v6312, 16
      %v6339 = vshrl.u32 %v6316, 16
      %v6340 = vpack.i.b16 %v6339, %v6338
      %v6343 = vunpack.c.l.s4 1983009808
      %v6344 = vunpack.c.0.s8 %v6343
      %v6345 = vlaneseq
      %v6346 = vshrl.u32 %v6345, 7
      %v6347 = vsub.s32 %v6344, %v6346
      %v6348 = vrot.slane %v6319, %v6347
      %v6351 = vunpack.c.l.s4 1983009808
      %v6352 = vunpack.c.0.s8 %v6351
      %v6353 = vlaneseq
      %v6354 = vshrl.u32 %v6353, 7
      %v6355 = vsub.s32 %v6352, %v6354
      %v6356 = vrot.slane %v6325, %v6355
      %v6357 = vcombine.low %v6348, %v6356
      %v6358 = vcombine.high %v6348, %v6356
      %v6360 = vunpack.c.l.s4 1934713408
      %v6361 = vunpack.c.0.s8 %v6360
      %v6362 = vlaneseq
      %v6363 = vshrl.u32 %v6362, 7
      %v6364 = vsub.s32 %v6361, %v6363
      %v6365 = vrot.slane %v6357, %v6364
      %v6367 = vunpack.c.l.s4 1934713408
      %v6368 = vunpack.c.0.s8 %v6367
      %v6369 = vlaneseq
      %v6370 = vshrl.u32 %v6369, 7
      %v6371 = vsub.s32 %v6368, %v6370
      %v6372 = vrot.slane %v6358, %v6371
      %v6373 = vcombine.high %v6365, 0
      %v6374 = vcombine.high %v6372, 0
      %v6377 = vunpack.c.l.s4 1983009808
      %v6378 = vunpack.c.0.s8 %v6377
      %v6379 = vlaneseq
      %v6380 = vshrl.u32 %v6379, 7
      %v6381 = vsub.s32 %v6378, %v6380
      %v6382 = vrot.slane %v6322, %v6381
      %v6385 = vunpack.c.l.s4 1983009808
      %v6386 = vunpack.c.0.s8 %v6385
      %v6387 = vlaneseq
      %v6388 = vshrl.u32 %v6387, 7
      %v6389 = vsub.s32 %v6386, %v6388
      %v6390 = vrot.slane %v6328, %v6389
      %v6391 = vcombine.low %v6382, %v6390
      %v6392 = vcombine.high %v6382, %v6390
      %v6394 = vunpack.c.l.s4 1934713408
      %v6395 = vunpack.c.0.s8 %v6394
      %v6396 = vlaneseq
      %v6397 = vshrl.u32 %v6396, 7
      %v6398 = vsub.s32 %v6395, %v6397
      %v6399 = vrot.slane %v6391, %v6398
      %v6401 = vunpack.c.l.s4 1934713408
      %v6402 = vunpack.c.0.s8 %v6401
      %v6403 = vlaneseq
      %v6404 = vshrl.u32 %v6403, 7
      %v6405 = vsub.s32 %v6402, %v6404
      %v6406 = vrot.slane %v6392, %v6405
      %v6407 = vcombine.high %v6399, 0
      %v6408 = vcombine.high %v6406, 0
      %v6411 = vunpack.c.l.s4 1983009808
      %v6412 = vunpack.c.0.s8 %v6411
      %v6413 = vlaneseq
      %v6414 = vshrl.u32 %v6413, 7
      %v6415 = vsub.s32 %v6412, %v6414
      %v6416 = vrot.slane %v6331, %v6415
      %v6419 = vunpack.c.l.s4 1983009808
      %v6420 = vunpack.c.0.s8 %v6419
      %v6421 = vlaneseq
      %v6422 = vshrl.u32 %v6421, 7
      %v6423 = vsub.s32 %v6420, %v6422
      %v6424 = vrot.slane %v6337, %v6423
      %v6425 = vcombine.low %v6416, %v6424
      %v6426 = vcombine.high %v6416, %v6424
      %v6428 = vunpack.c.l.s4 1934713408
      %v6429 = vunpack.c.0.s8 %v6428
      %v6430 = vlaneseq
      %v6431 = vshrl.u32 %v6430, 7
      %v6432 = vsub.s32 %v6429, %v6431
      %v6433 = vrot.slane %v6425, %v6432
      %v6435 = vunpack.c.l.s4 1934713408
      %v6436 = vunpack.c.0.s8 %v6435
      %v6437 = vlaneseq
      %v6438 = vshrl.u32 %v6437, 7
      %v6439 = vsub.s32 %v6436, %v6438
      %v6440 = vrot.slane %v6426, %v6439
      %v6441 = vcombine.high %v6433, 0
      %v6442 = vcombine.high %v6440, 0
      %v6445 = vunpack.c.l.s4 1983009808
      %v6446 = vunpack.c.0.s8 %v6445
      %v6447 = vlaneseq
      %v6448 = vshrl.u32 %v6447, 7
      %v6449 = vsub.s32 %v6446, %v6448
      %v6450 = vrot.slane %v6334, %v6449
      %v6453 = vunpack.c.l.s4 1983009808
      %v6454 = vunpack.c.0.s8 %v6453
      %v6455 = vlaneseq
      %v6456 = vshrl.u32 %v6455, 7
      %v6457 = vsub.s32 %v6454, %v6456
      %v6458 = vrot.slane %v6340, %v6457
      %v6459 = vcombine.low %v6450, %v6458
      %v6460 = vcombine.high %v6450, %v6458
      %v6462 = vunpack.c.l.s4 1934713408
      %v6463 = vunpack.c.0.s8 %v6462
      %v6464 = vlaneseq
      %v6465 = vshrl.u32 %v6464, 7
      %v6466 = vsub.s32 %v6463, %v6465
      %v6467 = vrot.slane %v6459, %v6466
      %v6469 = vunpack.c.l.s4 1934713408
      %v6470 = vunpack.c.0.s8 %v6469
      %v6471 = vlaneseq
      %v6472 = vshrl.u32 %v6471, 7
      %v6473 = vsub.s32 %v6470, %v6472
      %v6474 = vrot.slane %v6460, %v6473
      %v6475 = vcombine.high %v6467, 0
      %v6476 = vcombine.high %v6474, 0
      %v6478 = vunpack.c.l.b16 %v6399
      %v6479 = vpack.c.b16 %v6478, %v6478
      %6480 = vrot.lane.b32.xlu0 %v6479, 16
      %v6481 = vpop.permute.xlu0 %6480
      %v6483 = vunpack.c.l.b16 %v6373
      %v6484 = vpack.c.b16 %v6483, %v6483
      %6485 = vrot.lane.b32.xlu0 %v6484, 32
      %v6486 = vpop.permute.xlu0 %6485
      %v6488 = vunpack.c.l.b16 %v6407
      %v6489 = vpack.c.b16 %v6488, %v6488
      %6490 = vrot.lane.b32.xlu0 %v6489, 48
      %v6491 = vpop.permute.xlu0 %6490
      %v6493 = vunpack.c.l.b16 %v6372
      %v6494 = vpack.c.b16 %v6493, %v6493
      %6495 = vrot.lane.b32.xlu0 %v6494, 64
      %v6496 = vpop.permute.xlu0 %6495
      %v6498 = vunpack.c.l.b16 %v6406
      %v6499 = vpack.c.b16 %v6498, %v6498
      %6500 = vrot.lane.b32.xlu0 %v6499, 80
      %v6501 = vpop.permute.xlu0 %6500
      %v6503 = vunpack.c.l.b16 %v6374
      %v6504 = vpack.c.b16 %v6503, %v6503
      %6505 = vrot.lane.b32.xlu0 %v6504, 96
      %v6506 = vpop.permute.xlu0 %6505
      %v6508 = vunpack.c.l.b16 %v6408
      %v6509 = vpack.c.b16 %v6508, %v6508
      %6510 = vrot.lane.b32.xlu0 %v6509, 112
      %v6511 = vpop.permute.xlu0 %6510
      %v6513 = vunpack.c.l.b16 %v6467
      %v6514 = vpack.c.b16 %v6513, %v6513
      %6515 = vrot.lane.b32.xlu0 %v6514, 16
      %v6516 = vpop.permute.xlu0 %6515
      %v6518 = vunpack.c.l.b16 %v6441
      %v6519 = vpack.c.b16 %v6518, %v6518
      %6520 = vrot.lane.b32.xlu0 %v6519, 32
      %v6521 = vpop.permute.xlu0 %6520
      %v6523 = vunpack.c.l.b16 %v6475
      %v6524 = vpack.c.b16 %v6523, %v6523
      %6525 = vrot.lane.b32.xlu0 %v6524, 48
      %v6526 = vpop.permute.xlu0 %6525
      %v6528 = vunpack.c.l.b16 %v6440
      %v6529 = vpack.c.b16 %v6528, %v6528
      %6530 = vrot.lane.b32.xlu0 %v6529, 64
      %v6531 = vpop.permute.xlu0 %6530
      %v6533 = vunpack.c.l.b16 %v6474
      %v6534 = vpack.c.b16 %v6533, %v6533
      %6535 = vrot.lane.b32.xlu0 %v6534, 80
      %v6536 = vpop.permute.xlu0 %6535
      %v6538 = vunpack.c.l.b16 %v6442
      %v6539 = vpack.c.b16 %v6538, %v6538
      %6540 = vrot.lane.b32.xlu0 %v6539, 96
      %v6541 = vpop.permute.xlu0 %6540
      %v6543 = vunpack.c.l.b16 %v6476
      %v6544 = vpack.c.b16 %v6543, %v6543
      %6545 = vrot.lane.b32.xlu0 %v6544, 112
      %v6546 = vpop.permute.xlu0 %6545
      %v6549 = vsel %vm838, %v6365, %v6481
      %v6551 = vsel %vm842, %v6549, %v6486
      %v6553 = vsel %vm845, %v6551, %v6491
      %v6555 = vsel %vm848, %v6553, %v6496
      %v6557 = vsel %vm851, %v6555, %v6501
      %v6559 = vsel %vm854, %v6557, %v6506
      %v6561 = vsel %vm857, %v6559, %v6511
      %v6564 = vsel %vm838, %v6433, %v6516
      %v6566 = vsel %vm842, %v6564, %v6521
      %v6568 = vsel %vm845, %v6566, %v6526
      %v6570 = vsel %vm848, %v6568, %v6531
      %v6572 = vsel %vm851, %v6570, %v6536
      %v6574 = vsel %vm854, %v6572, %v6541
      %v6576 = vsel %vm857, %v6574, %v6546
      %s6577 = scalar_lea.vmem %s3, 10
      %v6578 = vld [vmem:[%s6577] sm:$0x3]
      %v6580 = vsel %vm1162, %v6578, 0
      %v6582 = vsel %vm1166, %v6561, 0
      %v6584 = vsel %vm1166, %v6576, 0
      %6586 = vmatprep.subr.bf16.mxu0 0
      %6587 = vmatpush1.bf16.msra.mxu0 0
      %6588 = vmatprep.subr.bf16.mxu0 0
      %6589 = vmatpush1.bf16.msra.mxu0 0
      %6590 = vmatprep.subr.bf16.mxu0 0
      %6591 = vmatpush1.bf16.msra.mxu0 0
      %6592 = vmatprep.subr.bf16.mxu0 0
      %6593 = vmatpush1.bf16.msra.mxu0 0
      %6594 = vmatprep.subr.bf16.mxu0 0
      %6595 = vmatpush1.bf16.msra.mxu0 0
      %6596 = vmatprep.subr.bf16.mxu0 0
      %6597 = vmatpush1.bf16.msra.mxu0 0
      %6598 = vmatprep.subr.bf16.mxu0 0
      %6599 = vmatpush1.bf16.msra.mxu0 0
      %6600 = vmatprep.subr.bf16.mxu0 %v6584
      %6601 = vmatpush1.bf16.msra.mxu0 %v6582
      %6602 = vmatprep.subr.bf16.mxu0 0
      %6603 = vmatpush2.bf16.msra.mxu0 0
      %6604 = vmatprep.subr.bf16.mxu0 0
      %6605 = vmatpush2.bf16.msra.mxu0 0
      %6606 = vmatprep.subr.bf16.mxu0 0
      %6607 = vmatpush2.bf16.msra.mxu0 0
      %6608 = vmatprep.subr.bf16.mxu0 0
      %6609 = vmatpush2.bf16.msra.mxu0 0
      %6610 = vmatprep.subr.bf16.mxu0 0
      %6611 = vmatpush2.bf16.msra.mxu0 0
      %6612 = vmatprep.subr.bf16.mxu0 0
      %6613 = vmatpush2.bf16.msra.mxu0 0
      %6614 = vmatprep.subr.bf16.mxu0 0
      %6615 = vmatpush2.bf16.msra.mxu0 0
      %6616 = vmatprep.subr.bf16.mxu0 0
      %6617 = vmatpush2.bf16.msra.mxu0 0
      %6618 = vmatprep.mubr.bf16.mxu0 0
      %6619 = vmatmul.mubr.bf16.gmra.mxu0 %v6580
      %v6620 = vpop.f32.mrf.mxu0
      %v6621 = vadd.f32 0.0, %v6620
      %v6622 = vpop.f32.mrf.mxu0
      %v6623 = vadd.f32 0.0, %v6622
      %v6624 = vpop.f32.mrf.mxu0
      %v6625 = vpop.f32.mrf.mxu0
      %6626 = vdwg.mxu0
      %v6627 = vadd.f32 %v6191, %v6621
      %v6628 = vadd.f32 %v6192, %v6623
      %v6629 = vld [vmem:[#allocation2] sm:$0xe]
      %v6630 = vld [vmem:[#allocation2 + $0x4] sm:$0xf]
      %v6631 = vld [vmem:[#allocation2 + $0x8] sm:$0x1]
      %v6632 = vld [vmem:[#allocation2 + $0xc] sm:$0xe]
      %v6633 = vld [vmem:[#allocation2 + $0x10] sm:$0xf]
      %v6634 = vld [vmem:[#allocation2 + $0x14] sm:$0x1]
      %v6635 = vld [vmem:[#allocation2 + $0x18] sm:$0xe]
      %v6636 = vld [vmem:[#allocation2 + $0x1c] sm:$0xf]
      %v6637 = vld [vmem:[#allocation2 + $0x20] sm:$0x1]
      %v6638 = vld [vmem:[#allocation2 + $0x24] sm:$0xe]
      %v6639 = vld [vmem:[#allocation2 + $0x28] sm:$0xf]
      %v6640 = vld [vmem:[#allocation2 + $0x2c] sm:$0x1]
      %v6653 = vrot.slane %v6629, 5
      %v6654 = vrot.slane %v6653, 4
      %v6655 = vrot.slane %v6630, 5
      %v6656 = vsel %vm2925, %v6654, %v6655
      %v6657 = vrot.slane %v6655, 4
      %v6658 = vrot.slane %v6631, 5
      %v6659 = vsel %vm2925, %v6657, %v6658
      %v6660 = vrot.slane %v6632, 5
      %v6661 = vrot.slane %v6660, 4
      %v6662 = vrot.slane %v6633, 5
      %v6663 = vsel %vm2925, %v6661, %v6662
      %v6664 = vrot.slane %v6662, 4
      %v6665 = vrot.slane %v6634, 5
      %v6666 = vsel %vm2925, %v6664, %v6665
      %v6667 = vrot.slane %v6635, 5
      %v6668 = vrot.slane %v6667, 4
      %v6669 = vrot.slane %v6636, 5
      %v6670 = vsel %vm2925, %v6668, %v6669
      %v6671 = vrot.slane %v6669, 4
      %v6672 = vrot.slane %v6637, 5
      %v6673 = vsel %vm2925, %v6671, %v6672
      %v6674 = vrot.slane %v6638, 5
      %v6675 = vrot.slane %v6674, 4
      %v6676 = vrot.slane %v6639, 5
      %v6677 = vsel %vm2925, %v6675, %v6676
      %v6678 = vrot.slane %v6676, 4
      %v6679 = vrot.slane %v6640, 5
      %v6680 = vsel %vm2925, %v6678, %v6679
      %v6683 = vpack.i.b16 %v6663, %v6656
      %v6684 = vshrl.u32 %v6656, 16
      %v6685 = vshrl.u32 %v6663, 16
      %v6686 = vpack.i.b16 %v6685, %v6684
      %v6689 = vpack.i.b16 %v6677, %v6670
      %v6690 = vshrl.u32 %v6670, 16
      %v6691 = vshrl.u32 %v6677, 16
      %v6692 = vpack.i.b16 %v6691, %v6690
      %v6695 = vpack.i.b16 %v6666, %v6659
      %v6696 = vshrl.u32 %v6659, 16
      %v6697 = vshrl.u32 %v6666, 16
      %v6698 = vpack.i.b16 %v6697, %v6696
      %v6701 = vpack.i.b16 %v6680, %v6673
      %v6702 = vshrl.u32 %v6673, 16
      %v6703 = vshrl.u32 %v6680, 16
      %v6704 = vpack.i.b16 %v6703, %v6702
      %v6707 = vunpack.c.l.s4 1983009808
      %v6708 = vunpack.c.0.s8 %v6707
      %v6709 = vlaneseq
      %v6710 = vshrl.u32 %v6709, 7
      %v6711 = vsub.s32 %v6708, %v6710
      %v6712 = vrot.slane %v6683, %v6711
      %v6715 = vunpack.c.l.s4 1983009808
      %v6716 = vunpack.c.0.s8 %v6715
      %v6717 = vlaneseq
      %v6718 = vshrl.u32 %v6717, 7
      %v6719 = vsub.s32 %v6716, %v6718
      %v6720 = vrot.slane %v6689, %v6719
      %v6721 = vcombine.low %v6712, %v6720
      %v6722 = vcombine.high %v6712, %v6720
      %v6724 = vunpack.c.l.s4 1934713408
      %v6725 = vunpack.c.0.s8 %v6724
      %v6726 = vlaneseq
      %v6727 = vshrl.u32 %v6726, 7
      %v6728 = vsub.s32 %v6725, %v6727
      %v6729 = vrot.slane %v6721, %v6728
      %v6731 = vunpack.c.l.s4 1934713408
      %v6732 = vunpack.c.0.s8 %v6731
      %v6733 = vlaneseq
      %v6734 = vshrl.u32 %v6733, 7
      %v6735 = vsub.s32 %v6732, %v6734
      %v6736 = vrot.slane %v6722, %v6735
      %v6737 = vcombine.high %v6729, 0
      %v6738 = vcombine.high %v6736, 0
      %v6741 = vunpack.c.l.s4 1983009808
      %v6742 = vunpack.c.0.s8 %v6741
      %v6743 = vlaneseq
      %v6744 = vshrl.u32 %v6743, 7
      %v6745 = vsub.s32 %v6742, %v6744
      %v6746 = vrot.slane %v6686, %v6745
      %v6749 = vunpack.c.l.s4 1983009808
      %v6750 = vunpack.c.0.s8 %v6749
      %v6751 = vlaneseq
      %v6752 = vshrl.u32 %v6751, 7
      %v6753 = vsub.s32 %v6750, %v6752
      %v6754 = vrot.slane %v6692, %v6753
      %v6755 = vcombine.low %v6746, %v6754
      %v6756 = vcombine.high %v6746, %v6754
      %v6758 = vunpack.c.l.s4 1934713408
      %v6759 = vunpack.c.0.s8 %v6758
      %v6760 = vlaneseq
      %v6761 = vshrl.u32 %v6760, 7
      %v6762 = vsub.s32 %v6759, %v6761
      %v6763 = vrot.slane %v6755, %v6762
      %v6765 = vunpack.c.l.s4 1934713408
      %v6766 = vunpack.c.0.s8 %v6765
      %v6767 = vlaneseq
      %v6768 = vshrl.u32 %v6767, 7
      %v6769 = vsub.s32 %v6766, %v6768
      %v6770 = vrot.slane %v6756, %v6769
      %v6771 = vcombine.high %v6763, 0
      %v6772 = vcombine.high %v6770, 0
      %v6775 = vunpack.c.l.s4 1983009808
      %v6776 = vunpack.c.0.s8 %v6775
      %v6777 = vlaneseq
      %v6778 = vshrl.u32 %v6777, 7
      %v6779 = vsub.s32 %v6776, %v6778
      %v6780 = vrot.slane %v6695, %v6779
      %v6783 = vunpack.c.l.s4 1983009808
      %v6784 = vunpack.c.0.s8 %v6783
      %v6785 = vlaneseq
      %v6786 = vshrl.u32 %v6785, 7
      %v6787 = vsub.s32 %v6784, %v6786
      %v6788 = vrot.slane %v6701, %v6787
      %v6789 = vcombine.low %v6780, %v6788
      %v6790 = vcombine.high %v6780, %v6788
      %v6792 = vunpack.c.l.s4 1934713408
      %v6793 = vunpack.c.0.s8 %v6792
      %v6794 = vlaneseq
      %v6795 = vshrl.u32 %v6794, 7
      %v6796 = vsub.s32 %v6793, %v6795
      %v6797 = vrot.slane %v6789, %v6796
      %v6799 = vunpack.c.l.s4 1934713408
      %v6800 = vunpack.c.0.s8 %v6799
      %v6801 = vlaneseq
      %v6802 = vshrl.u32 %v6801, 7
      %v6803 = vsub.s32 %v6800, %v6802
      %v6804 = vrot.slane %v6790, %v6803
      %v6805 = vcombine.high %v6797, 0
      %v6806 = vcombine.high %v6804, 0
      %v6809 = vunpack.c.l.s4 1983009808
      %v6810 = vunpack.c.0.s8 %v6809
      %v6811 = vlaneseq
      %v6812 = vshrl.u32 %v6811, 7
      %v6813 = vsub.s32 %v6810, %v6812
      %v6814 = vrot.slane %v6698, %v6813
      %v6817 = vunpack.c.l.s4 1983009808
      %v6818 = vunpack.c.0.s8 %v6817
      %v6819 = vlaneseq
      %v6820 = vshrl.u32 %v6819, 7
      %v6821 = vsub.s32 %v6818, %v6820
      %v6822 = vrot.slane %v6704, %v6821
      %v6823 = vcombine.low %v6814, %v6822
      %v6824 = vcombine.high %v6814, %v6822
      %v6826 = vunpack.c.l.s4 1934713408
      %v6827 = vunpack.c.0.s8 %v6826
      %v6828 = vlaneseq
      %v6829 = vshrl.u32 %v6828, 7
      %v6830 = vsub.s32 %v6827, %v6829
      %v6831 = vrot.slane %v6823, %v6830
      %v6833 = vunpack.c.l.s4 1934713408
      %v6834 = vunpack.c.0.s8 %v6833
      %v6835 = vlaneseq
      %v6836 = vshrl.u32 %v6835, 7
      %v6837 = vsub.s32 %v6834, %v6836
      %v6838 = vrot.slane %v6824, %v6837
      %v6839 = vcombine.high %v6831, 0
      %v6840 = vcombine.high %v6838, 0
      %v6842 = vunpack.c.l.b16 %v6763
      %v6843 = vpack.c.b16 %v6842, %v6842
      %6844 = vrot.lane.b32.xlu0 %v6843, 16
      %v6845 = vpop.permute.xlu0 %6844
      %v6847 = vunpack.c.l.b16 %v6737
      %v6848 = vpack.c.b16 %v6847, %v6847
      %6849 = vrot.lane.b32.xlu0 %v6848, 32
      %v6850 = vpop.permute.xlu0 %6849
      %v6852 = vunpack.c.l.b16 %v6771
      %v6853 = vpack.c.b16 %v6852, %v6852
      %6854 = vrot.lane.b32.xlu0 %v6853, 48
      %v6855 = vpop.permute.xlu0 %6854
      %v6857 = vunpack.c.l.b16 %v6736
      %v6858 = vpack.c.b16 %v6857, %v6857
      %6859 = vrot.lane.b32.xlu0 %v6858, 64
      %v6860 = vpop.permute.xlu0 %6859
      %v6862 = vunpack.c.l.b16 %v6770
      %v6863 = vpack.c.b16 %v6862, %v6862
      %6864 = vrot.lane.b32.xlu0 %v6863, 80
      %v6865 = vpop.permute.xlu0 %6864
      %v6867 = vunpack.c.l.b16 %v6738
      %v6868 = vpack.c.b16 %v6867, %v6867
      %6869 = vrot.lane.b32.xlu0 %v6868, 96
      %v6870 = vpop.permute.xlu0 %6869
      %v6872 = vunpack.c.l.b16 %v6772
      %v6873 = vpack.c.b16 %v6872, %v6872
      %6874 = vrot.lane.b32.xlu0 %v6873, 112
      %v6875 = vpop.permute.xlu0 %6874
      %v6877 = vunpack.c.l.b16 %v6831
      %v6878 = vpack.c.b16 %v6877, %v6877
      %6879 = vrot.lane.b32.xlu0 %v6878, 16
      %v6880 = vpop.permute.xlu0 %6879
      %v6882 = vunpack.c.l.b16 %v6805
      %v6883 = vpack.c.b16 %v6882, %v6882
      %6884 = vrot.lane.b32.xlu0 %v6883, 32
      %v6885 = vpop.permute.xlu0 %6884
      %v6887 = vunpack.c.l.b16 %v6839
      %v6888 = vpack.c.b16 %v6887, %v6887
      %6889 = vrot.lane.b32.xlu0 %v6888, 48
      %v6890 = vpop.permute.xlu0 %6889
      %v6892 = vunpack.c.l.b16 %v6804
      %v6893 = vpack.c.b16 %v6892, %v6892
      %6894 = vrot.lane.b32.xlu0 %v6893, 64
      %v6895 = vpop.permute.xlu0 %6894
      %v6897 = vunpack.c.l.b16 %v6838
      %v6898 = vpack.c.b16 %v6897, %v6897
      %6899 = vrot.lane.b32.xlu0 %v6898, 80
      %v6900 = vpop.permute.xlu0 %6899
      %v6902 = vunpack.c.l.b16 %v6806
      %v6903 = vpack.c.b16 %v6902, %v6902
      %6904 = vrot.lane.b32.xlu0 %v6903, 96
      %v6905 = vpop.permute.xlu0 %6904
      %v6907 = vunpack.c.l.b16 %v6840
      %v6908 = vpack.c.b16 %v6907, %v6907
      %6909 = vrot.lane.b32.xlu0 %v6908, 112
      %v6910 = vpop.permute.xlu0 %6909
      %v6913 = vsel %vm838, %v6729, %v6845
      %v6915 = vsel %vm842, %v6913, %v6850
      %v6917 = vsel %vm845, %v6915, %v6855
      %v6919 = vsel %vm848, %v6917, %v6860
      %v6921 = vsel %vm851, %v6919, %v6865
      %v6923 = vsel %vm854, %v6921, %v6870
      %v6925 = vsel %vm857, %v6923, %v6875
      %v6928 = vsel %vm838, %v6797, %v6880
      %v6930 = vsel %vm842, %v6928, %v6885
      %v6932 = vsel %vm845, %v6930, %v6890
      %v6934 = vsel %vm848, %v6932, %v6895
      %v6936 = vsel %vm851, %v6934, %v6900
      %v6938 = vsel %vm854, %v6936, %v6905
      %v6940 = vsel %vm857, %v6938, %v6910
      %s6941 = scalar_lea.vmem %s3, 12
      %v6942 = vld [vmem:[%s6941] sm:$0x3]
      %v6944 = vsel %vm1162, %v6942, 0
      %v6946 = vsel %vm1166, %v6925, 0
      %v6948 = vsel %vm1166, %v6940, 0
      %6950 = vmatprep.subr.bf16.mxu0 0
      %6951 = vmatpush1.bf16.msra.mxu0 0
      %6952 = vmatprep.subr.bf16.mxu0 0
      %6953 = vmatpush1.bf16.msra.mxu0 0
      %6954 = vmatprep.subr.bf16.mxu0 0
      %6955 = vmatpush1.bf16.msra.mxu0 0
      %6956 = vmatprep.subr.bf16.mxu0 0
      %6957 = vmatpush1.bf16.msra.mxu0 0
      %6958 = vmatprep.subr.bf16.mxu0 0
      %6959 = vmatpush1.bf16.msra.mxu0 0
      %6960 = vmatprep.subr.bf16.mxu0 0
      %6961 = vmatpush1.bf16.msra.mxu0 0
      %6962 = vmatprep.subr.bf16.mxu0 0
      %6963 = vmatpush1.bf16.msra.mxu0 0
      %6964 = vmatprep.subr.bf16.mxu0 %v6948
      %6965 = vmatpush1.bf16.msra.mxu0 %v6946
      %6966 = vmatprep.subr.bf16.mxu0 0
      %6967 = vmatpush2.bf16.msra.mxu0 0
      %6968 = vmatprep.subr.bf16.mxu0 0
      %6969 = vmatpush2.bf16.msra.mxu0 0
      %6970 = vmatprep.subr.bf16.mxu0 0
      %6971 = vmatpush2.bf16.msra.mxu0 0
      %6972 = vmatprep.subr.bf16.mxu0 0
      %6973 = vmatpush2.bf16.msra.mxu0 0
      %6974 = vmatprep.subr.bf16.mxu0 0
      %6975 = vmatpush2.bf16.msra.mxu0 0
      %6976 = vmatprep.subr.bf16.mxu0 0
      %6977 = vmatpush2.bf16.msra.mxu0 0
      %6978 = vmatprep.subr.bf16.mxu0 0
      %6979 = vmatpush2.bf16.msra.mxu0 0
      %6980 = vmatprep.subr.bf16.mxu0 0
      %6981 = vmatpush2.bf16.msra.mxu0 0
      %6982 = vmatprep.mubr.bf16.mxu0 0
      %6983 = vmatmul.mubr.bf16.gmra.mxu0 %v6944
      %v6984 = vpop.f32.mrf.mxu0
      %v6985 = vadd.f32 0.0, %v6984
      %v6986 = vpop.f32.mrf.mxu0
      %v6987 = vadd.f32 0.0, %v6986
      %v6988 = vpop.f32.mrf.mxu0
      %v6989 = vpop.f32.mrf.mxu0
      %6990 = vdwg.mxu0
      %v6991 = vadd.f32 %v6627, %v6985
      %v6992 = vadd.f32 %v6628, %v6987
      %v6993 = vld [vmem:[#allocation2] sm:$0xe]
      %v6994 = vld [vmem:[#allocation2 + $0x4] sm:$0xf]
      %v6995 = vld [vmem:[#allocation2 + $0x8] sm:$0x1]
      %v6996 = vld [vmem:[#allocation2 + $0xc] sm:$0xe]
      %v6997 = vld [vmem:[#allocation2 + $0x10] sm:$0xf]
      %v6998 = vld [vmem:[#allocation2 + $0x14] sm:$0x1]
      %v6999 = vld [vmem:[#allocation2 + $0x18] sm:$0xe]
      %v7000 = vld [vmem:[#allocation2 + $0x1c] sm:$0xf]
      %v7001 = vld [vmem:[#allocation2 + $0x20] sm:$0x1]
      %v7002 = vld [vmem:[#allocation2 + $0x24] sm:$0xe]
      %v7003 = vld [vmem:[#allocation2 + $0x28] sm:$0xf]
      %v7004 = vld [vmem:[#allocation2 + $0x2c] sm:$0x1]
      %v7017 = vrot.slane %v6993, 5
      %v7018 = vrot.slane %v7017, 4
      %v7019 = vrot.slane %v6994, 5
      %v7020 = vsel %vm2925, %v7018, %v7019
      %v7021 = vrot.slane %v7019, 4
      %v7022 = vrot.slane %v6995, 5
      %v7023 = vsel %vm2925, %v7021, %v7022
      %v7024 = vrot.slane %v6996, 5
      %v7025 = vrot.slane %v7024, 4
      %v7026 = vrot.slane %v6997, 5
      %v7027 = vsel %vm2925, %v7025, %v7026
      %v7028 = vrot.slane %v7026, 4
      %v7029 = vrot.slane %v6998, 5
      %v7030 = vsel %vm2925, %v7028, %v7029
      %v7031 = vrot.slane %v6999, 5
      %v7032 = vrot.slane %v7031, 4
      %v7033 = vrot.slane %v7000, 5
      %v7034 = vsel %vm2925, %v7032, %v7033
      %v7035 = vrot.slane %v7033, 4
      %v7036 = vrot.slane %v7001, 5
      %v7037 = vsel %vm2925, %v7035, %v7036
      %v7038 = vrot.slane %v7002, 5
      %v7039 = vrot.slane %v7038, 4
      %v7040 = vrot.slane %v7003, 5
      %v7041 = vsel %vm2925, %v7039, %v7040
      %v7042 = vrot.slane %v7040, 4
      %v7043 = vrot.slane %v7004, 5
      %v7044 = vsel %vm2925, %v7042, %v7043
      %7045 = vrot.lane.b32.xlu0 %v7020, 127
      %v7046 = vpop.permute.xlu0 %7045
      %7047 = vrot.lane.b32.xlu0 %v7023, 127
      %v7048 = vpop.permute.xlu0 %7047
      %7049 = vrot.lane.b32.xlu0 %v7027, 127
      %v7050 = vpop.permute.xlu0 %7049
      %7051 = vrot.lane.b32.xlu0 %v7030, 127
      %v7052 = vpop.permute.xlu0 %7051
      %7053 = vrot.lane.b32.xlu0 %v7034, 127
      %v7054 = vpop.permute.xlu0 %7053
      %7055 = vrot.lane.b32.xlu0 %v7037, 127
      %v7056 = vpop.permute.xlu0 %7055
      %7057 = vrot.lane.b32.xlu0 %v7041, 127
      %v7058 = vpop.permute.xlu0 %7057
      %7059 = vrot.lane.b32.xlu0 %v7044, 127
      %v7060 = vpop.permute.xlu0 %7059
      %v7063 = vpack.i.b16 %v7050, %v7046
      %v7064 = vshrl.u32 %v7046, 16
      %v7065 = vshrl.u32 %v7050, 16
      %v7066 = vpack.i.b16 %v7065, %v7064
      %v7069 = vpack.i.b16 %v7058, %v7054
      %v7070 = vshrl.u32 %v7054, 16
      %v7071 = vshrl.u32 %v7058, 16
      %v7072 = vpack.i.b16 %v7071, %v7070
      %v7075 = vpack.i.b16 %v7052, %v7048
      %v7076 = vshrl.u32 %v7048, 16
      %v7077 = vshrl.u32 %v7052, 16
      %v7078 = vpack.i.b16 %v7077, %v7076
      %v7081 = vpack.i.b16 %v7060, %v7056
      %v7082 = vshrl.u32 %v7056, 16
      %v7083 = vshrl.u32 %v7060, 16
      %v7084 = vpack.i.b16 %v7083, %v7082
      %v7087 = vunpack.c.l.s4 1983009808
      %v7088 = vunpack.c.0.s8 %v7087
      %v7089 = vlaneseq
      %v7090 = vshrl.u32 %v7089, 7
      %v7091 = vsub.s32 %v7088, %v7090
      %v7092 = vrot.slane %v7063, %v7091
      %v7095 = vunpack.c.l.s4 1983009808
      %v7096 = vunpack.c.0.s8 %v7095
      %v7097 = vlaneseq
      %v7098 = vshrl.u32 %v7097, 7
      %v7099 = vsub.s32 %v7096, %v7098
      %v7100 = vrot.slane %v7069, %v7099
      %v7101 = vcombine.low %v7092, %v7100
      %v7102 = vcombine.high %v7092, %v7100
      %v7104 = vunpack.c.l.s4 1934713408
      %v7105 = vunpack.c.0.s8 %v7104
      %v7106 = vlaneseq
      %v7107 = vshrl.u32 %v7106, 7
      %v7108 = vsub.s32 %v7105, %v7107
      %v7109 = vrot.slane %v7101, %v7108
      %v7111 = vunpack.c.l.s4 1934713408
      %v7112 = vunpack.c.0.s8 %v7111
      %v7113 = vlaneseq
      %v7114 = vshrl.u32 %v7113, 7
      %v7115 = vsub.s32 %v7112, %v7114
      %v7116 = vrot.slane %v7102, %v7115
      %v7117 = vcombine.high %v7109, 0
      %v7118 = vcombine.high %v7116, 0
      %v7121 = vunpack.c.l.s4 1983009808
      %v7122 = vunpack.c.0.s8 %v7121
      %v7123 = vlaneseq
      %v7124 = vshrl.u32 %v7123, 7
      %v7125 = vsub.s32 %v7122, %v7124
      %v7126 = vrot.slane %v7066, %v7125
      %v7129 = vunpack.c.l.s4 1983009808
      %v7130 = vunpack.c.0.s8 %v7129
      %v7131 = vlaneseq
      %v7132 = vshrl.u32 %v7131, 7
      %v7133 = vsub.s32 %v7130, %v7132
      %v7134 = vrot.slane %v7072, %v7133
      %v7135 = vcombine.low %v7126, %v7134
      %v7136 = vcombine.high %v7126, %v7134
      %v7138 = vunpack.c.l.s4 1934713408
      %v7139 = vunpack.c.0.s8 %v7138
      %v7140 = vlaneseq
      %v7141 = vshrl.u32 %v7140, 7
      %v7142 = vsub.s32 %v7139, %v7141
      %v7143 = vrot.slane %v7135, %v7142
      %v7145 = vunpack.c.l.s4 1934713408
      %v7146 = vunpack.c.0.s8 %v7145
      %v7147 = vlaneseq
      %v7148 = vshrl.u32 %v7147, 7
      %v7149 = vsub.s32 %v7146, %v7148
      %v7150 = vrot.slane %v7136, %v7149
      %v7151 = vcombine.high %v7143, 0
      %v7152 = vcombine.high %v7150, 0
      %v7155 = vunpack.c.l.s4 1983009808
      %v7156 = vunpack.c.0.s8 %v7155
      %v7157 = vlaneseq
      %v7158 = vshrl.u32 %v7157, 7
      %v7159 = vsub.s32 %v7156, %v7158
      %v7160 = vrot.slane %v7075, %v7159
      %v7163 = vunpack.c.l.s4 1983009808
      %v7164 = vunpack.c.0.s8 %v7163
      %v7165 = vlaneseq
      %v7166 = vshrl.u32 %v7165, 7
      %v7167 = vsub.s32 %v7164, %v7166
      %v7168 = vrot.slane %v7081, %v7167
      %v7169 = vcombine.low %v7160, %v7168
      %v7170 = vcombine.high %v7160, %v7168
      %v7172 = vunpack.c.l.s4 1934713408
      %v7173 = vunpack.c.0.s8 %v7172
      %v7174 = vlaneseq
      %v7175 = vshrl.u32 %v7174, 7
      %v7176 = vsub.s32 %v7173, %v7175
      %v7177 = vrot.slane %v7169, %v7176
      %v7179 = vunpack.c.l.s4 1934713408
      %v7180 = vunpack.c.0.s8 %v7179
      %v7181 = vlaneseq
      %v7182 = vshrl.u32 %v7181, 7
      %v7183 = vsub.s32 %v7180, %v7182
      %v7184 = vrot.slane %v7170, %v7183
      %v7185 = vcombine.high %v7177, 0
      %v7186 = vcombine.high %v7184, 0
      %v7189 = vunpack.c.l.s4 1983009808
      %v7190 = vunpack.c.0.s8 %v7189
      %v7191 = vlaneseq
      %v7192 = vshrl.u32 %v7191, 7
      %v7193 = vsub.s32 %v7190, %v7192
      %v7194 = vrot.slane %v7078, %v7193
      %v7197 = vunpack.c.l.s4 1983009808
      %v7198 = vunpack.c.0.s8 %v7197
      %v7199 = vlaneseq
      %v7200 = vshrl.u32 %v7199, 7
      %v7201 = vsub.s32 %v7198, %v7200
      %v7202 = vrot.slane %v7084, %v7201
      %v7203 = vcombine.low %v7194, %v7202
      %v7204 = vcombine.high %v7194, %v7202
      %v7206 = vunpack.c.l.s4 1934713408
      %v7207 = vunpack.c.0.s8 %v7206
      %v7208 = vlaneseq
      %v7209 = vshrl.u32 %v7208, 7
      %v7210 = vsub.s32 %v7207, %v7209
      %v7211 = vrot.slane %v7203, %v7210
      %v7213 = vunpack.c.l.s4 1934713408
      %v7214 = vunpack.c.0.s8 %v7213
      %v7215 = vlaneseq
      %v7216 = vshrl.u32 %v7215, 7
      %v7217 = vsub.s32 %v7214, %v7216
      %v7218 = vrot.slane %v7204, %v7217
      %v7219 = vcombine.high %v7211, 0
      %v7220 = vcombine.high %v7218, 0
      %v7222 = vunpack.c.l.b16 %v7143
      %v7223 = vpack.c.b16 %v7222, %v7222
      %7224 = vrot.lane.b32.xlu0 %v7223, 16
      %v7225 = vpop.permute.xlu0 %7224
      %v7227 = vunpack.c.l.b16 %v7117
      %v7228 = vpack.c.b16 %v7227, %v7227
      %7229 = vrot.lane.b32.xlu0 %v7228, 32
      %v7230 = vpop.permute.xlu0 %7229
      %v7232 = vunpack.c.l.b16 %v7151
      %v7233 = vpack.c.b16 %v7232, %v7232
      %7234 = vrot.lane.b32.xlu0 %v7233, 48
      %v7235 = vpop.permute.xlu0 %7234
      %v7237 = vunpack.c.l.b16 %v7116
      %v7238 = vpack.c.b16 %v7237, %v7237
      %7239 = vrot.lane.b32.xlu0 %v7238, 64
      %v7240 = vpop.permute.xlu0 %7239
      %v7242 = vunpack.c.l.b16 %v7150
      %v7243 = vpack.c.b16 %v7242, %v7242
      %7244 = vrot.lane.b32.xlu0 %v7243, 80
      %v7245 = vpop.permute.xlu0 %7244
      %v7247 = vunpack.c.l.b16 %v7118
      %v7248 = vpack.c.b16 %v7247, %v7247
      %7249 = vrot.lane.b32.xlu0 %v7248, 96
      %v7250 = vpop.permute.xlu0 %7249
      %v7252 = vunpack.c.l.b16 %v7152
      %v7253 = vpack.c.b16 %v7252, %v7252
      %7254 = vrot.lane.b32.xlu0 %v7253, 112
      %v7255 = vpop.permute.xlu0 %7254
      %v7257 = vunpack.c.l.b16 %v7211
      %v7258 = vpack.c.b16 %v7257, %v7257
      %7259 = vrot.lane.b32.xlu0 %v7258, 16
      %v7260 = vpop.permute.xlu0 %7259
      %v7262 = vunpack.c.l.b16 %v7185
      %v7263 = vpack.c.b16 %v7262, %v7262
      %7264 = vrot.lane.b32.xlu0 %v7263, 32
      %v7265 = vpop.permute.xlu0 %7264
      %v7267 = vunpack.c.l.b16 %v7219
      %v7268 = vpack.c.b16 %v7267, %v7267
      %7269 = vrot.lane.b32.xlu0 %v7268, 48
      %v7270 = vpop.permute.xlu0 %7269
      %v7272 = vunpack.c.l.b16 %v7184
      %v7273 = vpack.c.b16 %v7272, %v7272
      %7274 = vrot.lane.b32.xlu0 %v7273, 64
      %v7275 = vpop.permute.xlu0 %7274
      %v7277 = vunpack.c.l.b16 %v7218
      %v7278 = vpack.c.b16 %v7277, %v7277
      %7279 = vrot.lane.b32.xlu0 %v7278, 80
      %v7280 = vpop.permute.xlu0 %7279
      %v7282 = vunpack.c.l.b16 %v7186
      %v7283 = vpack.c.b16 %v7282, %v7282
      %7284 = vrot.lane.b32.xlu0 %v7283, 96
      %v7285 = vpop.permute.xlu0 %7284
      %v7287 = vunpack.c.l.b16 %v7220
      %v7288 = vpack.c.b16 %v7287, %v7287
      %7289 = vrot.lane.b32.xlu0 %v7288, 112
      %v7290 = vpop.permute.xlu0 %7289
      %v7293 = vsel %vm838, %v7109, %v7225
      %v7295 = vsel %vm842, %v7293, %v7230
      %v7297 = vsel %vm845, %v7295, %v7235
      %v7299 = vsel %vm848, %v7297, %v7240
      %v7301 = vsel %vm851, %v7299, %v7245
      %v7303 = vsel %vm854, %v7301, %v7250
      %v7305 = vsel %vm857, %v7303, %v7255
      %v7308 = vsel %vm838, %v7177, %v7260
      %v7310 = vsel %vm842, %v7308, %v7265
      %v7312 = vsel %vm845, %v7310, %v7270
      %v7314 = vsel %vm848, %v7312, %v7275
      %v7316 = vsel %vm851, %v7314, %v7280
      %v7318 = vsel %vm854, %v7316, %v7285
      %v7320 = vsel %vm857, %v7318, %v7290
      %s7321 = scalar_lea.vmem %s3, 14
      %v7322 = vld [vmem:[%s7321] sm:$0x3]
      %v7324 = vsel %vm1162, %v7322, 0
      %v7326 = vsel %vm1166, %v7305, 0
      %v7328 = vsel %vm1166, %v7320, 0
      %7330 = vmatprep.subr.bf16.mxu0 0
      %7331 = vmatpush1.bf16.msra.mxu0 0
      %7332 = vmatprep.subr.bf16.mxu0 0
      %7333 = vmatpush1.bf16.msra.mxu0 0
      %7334 = vmatprep.subr.bf16.mxu0 0
      %7335 = vmatpush1.bf16.msra.mxu0 0
      %7336 = vmatprep.subr.bf16.mxu0 0
      %7337 = vmatpush1.bf16.msra.mxu0 0
      %7338 = vmatprep.subr.bf16.mxu0 0
      %7339 = vmatpush1.bf16.msra.mxu0 0
      %7340 = vmatprep.subr.bf16.mxu0 0
      %7341 = vmatpush1.bf16.msra.mxu0 0
      %7342 = vmatprep.subr.bf16.mxu0 0
      %7343 = vmatpush1.bf16.msra.mxu0 0
      %7344 = vmatprep.subr.bf16.mxu0 %v7328
      %7345 = vmatpush1.bf16.msra.mxu0 %v7326
      %7346 = vmatprep.subr.bf16.mxu0 0
      %7347 = vmatpush2.bf16.msra.mxu0 0
      %7348 = vmatprep.subr.bf16.mxu0 0
      %7349 = vmatpush2.bf16.msra.mxu0 0
      %7350 = vmatprep.subr.bf16.mxu0 0
      %7351 = vmatpush2.bf16.msra.mxu0 0
      %7352 = vmatprep.subr.bf16.mxu0 0
      %7353 = vmatpush2.bf16.msra.mxu0 0
      %7354 = vmatprep.subr.bf16.mxu0 0
      %7355 = vmatpush2.bf16.msra.mxu0 0
      %7356 = vmatprep.subr.bf16.mxu0 0
      %7357 = vmatpush2.bf16.msra.mxu0 0
      %7358 = vmatprep.subr.bf16.mxu0 0
      %7359 = vmatpush2.bf16.msra.mxu0 0
      %7360 = vmatprep.subr.bf16.mxu0 0
      %7361 = vmatpush2.bf16.msra.mxu0 0
      %7362 = vmatprep.mubr.bf16.mxu0 0
      %7363 = vmatmul.mubr.bf16.gmra.mxu0 %v7324
      %v7364 = vpop.f32.mrf.mxu0
      %v7365 = vadd.f32 0.0, %v7364
      %v7366 = vpop.f32.mrf.mxu0
      %v7367 = vadd.f32 0.0, %v7366
      %v7368 = vpop.f32.mrf.mxu0
      %v7369 = vpop.f32.mrf.mxu0
      %7370 = vdwg.mxu0
      %v7371 = vadd.f32 %v6991, %v7365
      %v7372 = vadd.f32 %v6992, %v7367
      %v7373 = vld [vmem:[#allocation2] sm:$0xe]
      %v7374 = vld [vmem:[#allocation2 + $0x4] sm:$0xf]
      %v7375 = vld [vmem:[#allocation2 + $0x8] sm:$0x1]
      %v7376 = vld [vmem:[#allocation2 + $0xc] sm:$0xe]
      %v7377 = vld [vmem:[#allocation2 + $0x10] sm:$0xf]
      %v7378 = vld [vmem:[#allocation2 + $0x14] sm:$0x1]
      %v7379 = vld [vmem:[#allocation2 + $0x18] sm:$0xe]
      %v7380 = vld [vmem:[#allocation2 + $0x1c] sm:$0xf]
      %v7381 = vld [vmem:[#allocation2 + $0x20] sm:$0x1]
      %v7382 = vld [vmem:[#allocation2 + $0x24] sm:$0xe]
      %v7383 = vld [vmem:[#allocation2 + $0x28] sm:$0xf]
      %v7384 = vld [vmem:[#allocation2 + $0x2c] sm:$0x1]
      %v7397 = vrot.slane %v7373, 5
      %v7398 = vrot.slane %v7397, 4
      %v7399 = vrot.slane %v7374, 5
      %v7400 = vsel %vm2925, %v7398, %v7399
      %v7401 = vrot.slane %v7399, 4
      %v7402 = vrot.slane %v7375, 5
      %v7403 = vsel %vm2925, %v7401, %v7402
      %v7404 = vrot.slane %v7376, 5
      %v7405 = vrot.slane %v7404, 4
      %v7406 = vrot.slane %v7377, 5
      %v7407 = vsel %vm2925, %v7405, %v7406
      %v7408 = vrot.slane %v7406, 4
      %v7409 = vrot.slane %v7378, 5
      %v7410 = vsel %vm2925, %v7408, %v7409
      %v7411 = vrot.slane %v7379, 5
      %v7412 = vrot.slane %v7411, 4
      %v7413 = vrot.slane %v7380, 5
      %v7414 = vsel %vm2925, %v7412, %v7413
      %v7415 = vrot.slane %v7413, 4
      %v7416 = vrot.slane %v7381, 5
      %v7417 = vsel %vm2925, %v7415, %v7416
      %v7418 = vrot.slane %v7382, 5
      %v7419 = vrot.slane %v7418, 4
      %v7420 = vrot.slane %v7383, 5
      %v7421 = vsel %vm2925, %v7419, %v7420
      %v7422 = vrot.slane %v7420, 4
      %v7423 = vrot.slane %v7384, 5
      %v7424 = vsel %vm2925, %v7422, %v7423
      %7425 = vrot.lane.b32.xlu0 %v7400, 126
      %v7426 = vpop.permute.xlu0 %7425
      %7427 = vrot.lane.b32.xlu0 %v7403, 126
      %v7428 = vpop.permute.xlu0 %7427
      %7429 = vrot.lane.b32.xlu0 %v7407, 126
      %v7430 = vpop.permute.xlu0 %7429
      %7431 = vrot.lane.b32.xlu0 %v7410, 126
      %v7432 = vpop.permute.xlu0 %7431
      %7433 = vrot.lane.b32.xlu0 %v7414, 126
      %v7434 = vpop.permute.xlu0 %7433
      %7435 = vrot.lane.b32.xlu0 %v7417, 126
      %v7436 = vpop.permute.xlu0 %7435
      %7437 = vrot.lane.b32.xlu0 %v7421, 126
      %v7438 = vpop.permute.xlu0 %7437
      %7439 = vrot.lane.b32.xlu0 %v7424, 126
      %v7440 = vpop.permute.xlu0 %7439
      %v7443 = vpack.i.b16 %v7430, %v7426
      %v7444 = vshrl.u32 %v7426, 16
      %v7445 = vshrl.u32 %v7430, 16
      %v7446 = vpack.i.b16 %v7445, %v7444
      %v7449 = vpack.i.b16 %v7438, %v7434
      %v7450 = vshrl.u32 %v7434, 16
      %v7451 = vshrl.u32 %v7438, 16
      %v7452 = vpack.i.b16 %v7451, %v7450
      %v7455 = vpack.i.b16 %v7432, %v7428
      %v7456 = vshrl.u32 %v7428, 16
      %v7457 = vshrl.u32 %v7432, 16
      %v7458 = vpack.i.b16 %v7457, %v7456
      %v7461 = vpack.i.b16 %v7440, %v7436
      %v7462 = vshrl.u32 %v7436, 16
      %v7463 = vshrl.u32 %v7440, 16
      %v7464 = vpack.i.b16 %v7463, %v7462
      %v7467 = vunpack.c.l.s4 1983009808
      %v7468 = vunpack.c.0.s8 %v7467
      %v7469 = vlaneseq
      %v7470 = vshrl.u32 %v7469, 7
      %v7471 = vsub.s32 %v7468, %v7470
      %v7472 = vrot.slane %v7443, %v7471
      %v7475 = vunpack.c.l.s4 1983009808
      %v7476 = vunpack.c.0.s8 %v7475
      %v7477 = vlaneseq
      %v7478 = vshrl.u32 %v7477, 7
      %v7479 = vsub.s32 %v7476, %v7478
      %v7480 = vrot.slane %v7449, %v7479
      %v7481 = vcombine.low %v7472, %v7480
      %v7482 = vcombine.high %v7472, %v7480
      %v7484 = vunpack.c.l.s4 1934713408
      %v7485 = vunpack.c.0.s8 %v7484
      %v7486 = vlaneseq
      %v7487 = vshrl.u32 %v7486, 7
      %v7488 = vsub.s32 %v7485, %v7487
      %v7489 = vrot.slane %v7481, %v7488
      %v7491 = vunpack.c.l.s4 1934713408
      %v7492 = vunpack.c.0.s8 %v7491
      %v7493 = vlaneseq
      %v7494 = vshrl.u32 %v7493, 7
      %v7495 = vsub.s32 %v7492, %v7494
      %v7496 = vrot.slane %v7482, %v7495
      %v7497 = vcombine.high %v7489, 0
      %v7498 = vcombine.high %v7496, 0
      %v7501 = vunpack.c.l.s4 1983009808
      %v7502 = vunpack.c.0.s8 %v7501
      %v7503 = vlaneseq
      %v7504 = vshrl.u32 %v7503, 7
      %v7505 = vsub.s32 %v7502, %v7504
      %v7506 = vrot.slane %v7446, %v7505
      %v7509 = vunpack.c.l.s4 1983009808
      %v7510 = vunpack.c.0.s8 %v7509
      %v7511 = vlaneseq
      %v7512 = vshrl.u32 %v7511, 7
      %v7513 = vsub.s32 %v7510, %v7512
      %v7514 = vrot.slane %v7452, %v7513
      %v7515 = vcombine.low %v7506, %v7514
      %v7516 = vcombine.high %v7506, %v7514
      %v7518 = vunpack.c.l.s4 1934713408
      %v7519 = vunpack.c.0.s8 %v7518
      %v7520 = vlaneseq
      %v7521 = vshrl.u32 %v7520, 7
      %v7522 = vsub.s32 %v7519, %v7521
      %v7523 = vrot.slane %v7515, %v7522
      %v7525 = vunpack.c.l.s4 1934713408
      %v7526 = vunpack.c.0.s8 %v7525
      %v7527 = vlaneseq
      %v7528 = vshrl.u32 %v7527, 7
      %v7529 = vsub.s32 %v7526, %v7528
      %v7530 = vrot.slane %v7516, %v7529
      %v7531 = vcombine.high %v7523, 0
      %v7532 = vcombine.high %v7530, 0
      %v7535 = vunpack.c.l.s4 1983009808
      %v7536 = vunpack.c.0.s8 %v7535
      %v7537 = vlaneseq
      %v7538 = vshrl.u32 %v7537, 7
      %v7539 = vsub.s32 %v7536, %v7538
      %v7540 = vrot.slane %v7455, %v7539
      %v7543 = vunpack.c.l.s4 1983009808
      %v7544 = vunpack.c.0.s8 %v7543
      %v7545 = vlaneseq
      %v7546 = vshrl.u32 %v7545, 7
      %v7547 = vsub.s32 %v7544, %v7546
      %v7548 = vrot.slane %v7461, %v7547
      %v7549 = vcombine.low %v7540, %v7548
      %v7550 = vcombine.high %v7540, %v7548
      %v7552 = vunpack.c.l.s4 1934713408
      %v7553 = vunpack.c.0.s8 %v7552
      %v7554 = vlaneseq
      %v7555 = vshrl.u32 %v7554, 7
      %v7556 = vsub.s32 %v7553, %v7555
      %v7557 = vrot.slane %v7549, %v7556
      %v7559 = vunpack.c.l.s4 1934713408
      %v7560 = vunpack.c.0.s8 %v7559
      %v7561 = vlaneseq
      %v7562 = vshrl.u32 %v7561, 7
      %v7563 = vsub.s32 %v7560, %v7562
      %v7564 = vrot.slane %v7550, %v7563
      %v7565 = vcombine.high %v7557, 0
      %v7566 = vcombine.high %v7564, 0
      %v7569 = vunpack.c.l.s4 1983009808
      %v7570 = vunpack.c.0.s8 %v7569
      %v7571 = vlaneseq
      %v7572 = vshrl.u32 %v7571, 7
      %v7573 = vsub.s32 %v7570, %v7572
      %v7574 = vrot.slane %v7458, %v7573
      %v7577 = vunpack.c.l.s4 1983009808
      %v7578 = vunpack.c.0.s8 %v7577
      %v7579 = vlaneseq
      %v7580 = vshrl.u32 %v7579, 7
      %v7581 = vsub.s32 %v7578, %v7580
      %v7582 = vrot.slane %v7464, %v7581
      %v7583 = vcombine.low %v7574, %v7582
      %v7584 = vcombine.high %v7574, %v7582
      %v7586 = vunpack.c.l.s4 1934713408
      %v7587 = vunpack.c.0.s8 %v7586
      %v7588 = vlaneseq
      %v7589 = vshrl.u32 %v7588, 7
      %v7590 = vsub.s32 %v7587, %v7589
      %v7591 = vrot.slane %v7583, %v7590
      %v7593 = vunpack.c.l.s4 1934713408
      %v7594 = vunpack.c.0.s8 %v7593
      %v7595 = vlaneseq
      %v7596 = vshrl.u32 %v7595, 7
      %v7597 = vsub.s32 %v7594, %v7596
      %v7598 = vrot.slane %v7584, %v7597
      %v7599 = vcombine.high %v7591, 0
      %v7600 = vcombine.high %v7598, 0
      %v7602 = vunpack.c.l.b16 %v7523
      %v7603 = vpack.c.b16 %v7602, %v7602
      %7604 = vrot.lane.b32.xlu0 %v7603, 16
      %v7605 = vpop.permute.xlu0 %7604
      %v7607 = vunpack.c.l.b16 %v7497
      %v7608 = vpack.c.b16 %v7607, %v7607
      %7609 = vrot.lane.b32.xlu0 %v7608, 32
      %v7610 = vpop.permute.xlu0 %7609
      %v7612 = vunpack.c.l.b16 %v7531
      %v7613 = vpack.c.b16 %v7612, %v7612
      %7614 = vrot.lane.b32.xlu0 %v7613, 48
      %v7615 = vpop.permute.xlu0 %7614
      %v7617 = vunpack.c.l.b16 %v7496
      %v7618 = vpack.c.b16 %v7617, %v7617
      %7619 = vrot.lane.b32.xlu0 %v7618, 64
      %v7620 = vpop.permute.xlu0 %7619
      %v7622 = vunpack.c.l.b16 %v7530
      %v7623 = vpack.c.b16 %v7622, %v7622
      %7624 = vrot.lane.b32.xlu0 %v7623, 80
      %v7625 = vpop.permute.xlu0 %7624
      %v7627 = vunpack.c.l.b16 %v7498
      %v7628 = vpack.c.b16 %v7627, %v7627
      %7629 = vrot.lane.b32.xlu0 %v7628, 96
      %v7630 = vpop.permute.xlu0 %7629
      %v7632 = vunpack.c.l.b16 %v7532
      %v7633 = vpack.c.b16 %v7632, %v7632
      %7634 = vrot.lane.b32.xlu0 %v7633, 112
      %v7635 = vpop.permute.xlu0 %7634
      %v7637 = vunpack.c.l.b16 %v7591
      %v7638 = vpack.c.b16 %v7637, %v7637
      %7639 = vrot.lane.b32.xlu0 %v7638, 16
      %v7640 = vpop.permute.xlu0 %7639
      %v7642 = vunpack.c.l.b16 %v7565
      %v7643 = vpack.c.b16 %v7642, %v7642
      %7644 = vrot.lane.b32.xlu0 %v7643, 32
      %v7645 = vpop.permute.xlu0 %7644
      %v7647 = vunpack.c.l.b16 %v7599
      %v7648 = vpack.c.b16 %v7647, %v7647
      %7649 = vrot.lane.b32.xlu0 %v7648, 48
      %v7650 = vpop.permute.xlu0 %7649
      %v7652 = vunpack.c.l.b16 %v7564
      %v7653 = vpack.c.b16 %v7652, %v7652
      %7654 = vrot.lane.b32.xlu0 %v7653, 64
      %v7655 = vpop.permute.xlu0 %7654
      %v7657 = vunpack.c.l.b16 %v7598
      %v7658 = vpack.c.b16 %v7657, %v7657
      %7659 = vrot.lane.b32.xlu0 %v7658, 80
      %v7660 = vpop.permute.xlu0 %7659
      %v7662 = vunpack.c.l.b16 %v7566
      %v7663 = vpack.c.b16 %v7662, %v7662
      %7664 = vrot.lane.b32.xlu0 %v7663, 96
      %v7665 = vpop.permute.xlu0 %7664
      %v7667 = vunpack.c.l.b16 %v7600
      %v7668 = vpack.c.b16 %v7667, %v7667
      %7669 = vrot.lane.b32.xlu0 %v7668, 112
      %v7670 = vpop.permute.xlu0 %7669
      %v7673 = vsel %vm838, %v7489, %v7605
      %v7675 = vsel %vm842, %v7673, %v7610
      %v7677 = vsel %vm845, %v7675, %v7615
      %v7679 = vsel %vm848, %v7677, %v7620
      %v7681 = vsel %vm851, %v7679, %v7625
      %v7683 = vsel %vm854, %v7681, %v7630
      %v7685 = vsel %vm857, %v7683, %v7635
      %v7688 = vsel %vm838, %v7557, %v7640
      %v7690 = vsel %vm842, %v7688, %v7645
      %v7692 = vsel %vm845, %v7690, %v7650
      %v7694 = vsel %vm848, %v7692, %v7655
      %v7696 = vsel %vm851, %v7694, %v7660
      %v7698 = vsel %vm854, %v7696, %v7665
      %v7700 = vsel %vm857, %v7698, %v7670
      %s7701 = scalar_lea.vmem %s3, 16
      %v7702 = vld [vmem:[%s7701] sm:$0x3]
      %v7704 = vsel %vm1162, %v7702, 0
      %v7706 = vsel %vm1166, %v7685, 0
      %v7708 = vsel %vm1166, %v7700, 0
      %7710 = vmatprep.subr.bf16.mxu0 0
      %7711 = vmatpush1.bf16.msra.mxu0 0
      %7712 = vmatprep.subr.bf16.mxu0 0
      %7713 = vmatpush1.bf16.msra.mxu0 0
      %7714 = vmatprep.subr.bf16.mxu0 0
      %7715 = vmatpush1.bf16.msra.mxu0 0
      %7716 = vmatprep.subr.bf16.mxu0 0
      %7717 = vmatpush1.bf16.msra.mxu0 0
      %7718 = vmatprep.subr.bf16.mxu0 0
      %7719 = vmatpush1.bf16.msra.mxu0 0
      %7720 = vmatprep.subr.bf16.mxu0 0
      %7721 = vmatpush1.bf16.msra.mxu0 0
      %7722 = vmatprep.subr.bf16.mxu0 0
      %7723 = vmatpush1.bf16.msra.mxu0 0
      %7724 = vmatprep.subr.bf16.mxu0 %v7708
      %7725 = vmatpush1.bf16.msra.mxu0 %v7706
      %7726 = vmatprep.subr.bf16.mxu0 0
      %7727 = vmatpush2.bf16.msra.mxu0 0
      %7728 = vmatprep.subr.bf16.mxu0 0
      %7729 = vmatpush2.bf16.msra.mxu0 0
      %7730 = vmatprep.subr.bf16.mxu0 0
      %7731 = vmatpush2.bf16.msra.mxu0 0
      %7732 = vmatprep.subr.bf16.mxu0 0
      %7733 = vmatpush2.bf16.msra.mxu0 0
      %7734 = vmatprep.subr.bf16.mxu0 0
      %7735 = vmatpush2.bf16.msra.mxu0 0
      %7736 = vmatprep.subr.bf16.mxu0 0
      %7737 = vmatpush2.bf16.msra.mxu0 0
      %7738 = vmatprep.subr.bf16.mxu0 0
      %7739 = vmatpush2.bf16.msra.mxu0 0
      %7740 = vmatprep.subr.bf16.mxu0 0
      %7741 = vmatpush2.bf16.msra.mxu0 0
      %7742 = vmatprep.mubr.bf16.mxu0 0
      %7743 = vmatmul.mubr.bf16.gmra.mxu0 %v7704
      %v7744 = vpop.f32.mrf.mxu0
      %v7745 = vadd.f32 0.0, %v7744
      %v7746 = vpop.f32.mrf.mxu0
      %v7747 = vadd.f32 0.0, %v7746
      %v7748 = vpop.f32.mrf.mxu0
      %v7749 = vpop.f32.mrf.mxu0
      %7750 = vdwg.mxu0
      %v7751 = vadd.f32 %v7371, %v7745
      %v7752 = vadd.f32 %v7372, %v7747
      %v7753 = vld [vmem:[%s4] sm:$0xf]
      %7755 = vset.pattern.permute.xlu0 0
      %7756 = vperm.xlu0 %7755, %v7753
      %v7757 = vpop.permute.xlu0 %7756
      %v7759 = vadd.f32 %v7751, %v7757
      %v7760 = vadd.f32 %v7752, %v7757
      %v7761 = vld [vmem:[%s219] sm:$0xff]
      %v7763 = vcombine.high %v7761, %v7761
      %v7765 = vadd.f32 %v7759, %v7761
      %v7766 = vadd.f32 %v7760, %v7763
      %v7767 = vmax.f32 %v7765, 0.0
      %v7768 = vmax.f32 %v7766, 0.0
      %v7771 = vcombine.low %v7767, %v7768
      %7773 = vst [vmem:[%s224] sm:$0xff] %v7771
      %p7774 = scmp.lt.s32.totalorder %s16, 1
      %s7775 = scalar_select %p7774, %s16, 1
      %s7776 = smul.addr %s7775, 2
      %s7777 = smul.addr %s7776, 4
      %s7778 = scalar_lea.vmem %s5, %s7777
      // Predicated region
      $region41: #{basic_block_forward.1} parent=39 // pred_check
        %p7779 = pneg %p144
      $region42: #{basic_block_forward.1} parent=39 // pred_check_branch
        %7781 = sbr.rel (%p7779) target = $region44
      $region43: #{basic_block_forward.1} parent=39 // pred_region
        _
      $region44: #{basic_block_forward.1} parent=39 // pred_fallthru
        _
    $region40: #{basic_block_forward.1} parent=5 // pred_fallthru
      _
    %p7782 = scmp.le.s32.totalorder 2, %s11
    // Predicated region
    $region45: #{basic_block_forward.1} parent=5 // pred_check
      %p7783 = pneg %p7782
    $region46: #{basic_block_forward.1} parent=5 // pred_check_branch
      %7785 = sbr.rel (%p7783) target = $region48
    $region47: #{basic_block_forward.1} parent=5 // pred_region
      %s7786 = ssub.s32 %s11, 2
      // Predicated region
      $region49: #{basic_block_forward.1} parent=47 // pred_check
        %p7787 = pneg %p150
      $region50: #{basic_block_forward.1} parent=47 // pred_check_branch
        %7789 = sbr.rel (%p7787) target = $region52
      $region51: #{basic_block_forward.1} parent=47 // pred_region
        %p7790 = scmp.lt.s32.totalorder %s17, 1
        %s7791 = scalar_select %p7790, %s17, 1
        %s7792 = smul.addr %s7791, 2
        %s7793 = smul.addr %s7792, 4
        %s7794 = scalar_lea.vmem %s5, %s7793
      $region52: #{basic_block_forward.1} parent=47 // pred_fallthru
        _
    $region48: #{basic_block_forward.1} parent=5 // pred_fallthru
      _
  $region6: #{basic_block_forward.1} parent=0 // loop_footer
    %s15 = sadd.s32 1, %s11
  $region7: #{basic_block_forward.1} parent=0 // loop_footer_branch
    %10 = sbr.rel target = $region3
  $region8: #{basic_block_forward.1} parent=0 // loop_exit
    _

</llo_original>
